<compile_context>
chip_gen: v5e
topology: v5e:2x2
jax: 0.10.0
libtpu: 0.0.40
codegen_flags: <defaults>
</compile_context>

<pallas_src>
import functools

import jax
import jax.numpy as jnp
from jax.experimental import pallas as pl
from jax.experimental.pallas import tpu as pltpu

LANE = 128  # padded gate-block width (vreg lane tile)


def _sigmoid(x):
    # Exact identity: 1/(1+exp(-x)) == 0.5*tanh(0.5*x) + 0.5.
    # tanh runs on the EUP (otherwise idle slot); avoids the VPU divide.
    return 0.5 * jnp.tanh(0.5 * x) + 0.5


def stock_lstm_kernel(
    xflat_ref,   # (T*Bp, I)      time-major, batch-padded, flattened input
    wih0_ref,    # (I,   4*LANE)  layer-0 input->gates, gate-column padded
    whh0_ref,    # (Hp,  4*LANE)  layer-0 hidden->gates, gate/row padded
    b0_ref,      # (1,   4*LANE)  layer-0 bias (b_ih + b_hh), gate padded
    w1_ref,      # (2*Hp, 4*LANE) layer-1 fused [W_ih1; W_hh1]
    b1_ref,      # (1,   4*LANE)  layer-1 bias (b_ih + b_hh), gate padded
    wfc_ref,     # (Hp,  LANE)    fc weight (only column 0 is live)
    bfc_ref,     # (1,   LANE)    fc bias   (only column 0 is live)
    out_ref,     # (Bp,  LANE)    prediction in column 0
    *,
    seq_len,     # T  (static)
    batch,       # Bp (static, padded batch)
):
    Hp = whh0_ref.shape[0]
    G = 4 * Hp

    # ---- hoisted layer-0 input projection for ALL timesteps: one matmul ----
    xproj = (
        jnp.dot(xflat_ref[...], wih0_ref[...], preferred_element_type=jnp.float32)
        + b0_ref[...]
    )  # (T*Bp, 4*Hp)

    whh0 = whh0_ref[...]
    w1 = w1_ref[...]
    b1 = jnp.broadcast_to(b1_ref[...], (batch, G))  # hoisted broadcast

    def gates_to_hc(gates, c_prev):
        # 4 lane-aligned blocks of width Hp, torch gate order [i, f, g, o].
        i_g = _sigmoid(gates[:, 0 * Hp:1 * Hp])
        f_g = _sigmoid(gates[:, 1 * Hp:2 * Hp])
        g_g = jnp.tanh(gates[:, 2 * Hp:3 * Hp])
        o_g = _sigmoid(gates[:, 3 * Hp:4 * Hp])
        c_new = f_g * c_prev + i_g * g_g
        h_new = o_g * jnp.tanh(c_new)
        return h_new, c_new

    zeros = jnp.zeros((batch, Hp), jnp.float32)
    h0, c0, h1, c1 = zeros, zeros, zeros, zeros

    # Static unroll over time: layer-0 of step t+1 depends only on h0(t), so the
    # scheduler can overlap it with layer-1 of step t and the nonlinearities.
    for t in range(seq_len):
        # layer 0: hoisted input projection row-block + one K=Hp matmul
        g0 = xproj[t * batch:(t + 1) * batch, :] + jnp.dot(
            h0, whh0, preferred_element_type=jnp.float32)
        h0, c0 = gates_to_hc(g0, c0)

        # layer 1: single fused matmul over [h0 | h1]
        hcat = jnp.concatenate([h0, h1], axis=-1)        # (Bp, 2*Hp)
        g1 = jnp.dot(hcat, w1, preferred_element_type=jnp.float32) + b1
        h1, c1 = gates_to_hc(g1, c1)

    # fc on the final top-layer hidden state; lane-dense (Bp, 128) output slab.
    out_ref[...] = (
        jnp.dot(h1, wfc_ref[...], preferred_element_type=jnp.float32)
        + bfc_ref[...]
    )


@jax.jit
def stock_lstm_forward(x, kp):
    """x: (B, T, I) float32 (PyTorch batch_first). Returns (B, 1)."""
    B, T, I = x.shape
    Bp = ((B + 7) // 8) * 8  # sublane-pad the batch

    x_tbi = jnp.transpose(x, (1, 0, 2))                    # (T, B, I) time-major
    x_tbi = jnp.pad(x_tbi, ((0, 0), (0, Bp - B), (0, 0)))  # (T, Bp, I)
    xflat = x_tbi.reshape(T * Bp, I)

    kernel = functools.partial(stock_lstm_kernel, seq_len=T, batch=Bp)
    vmem = pl.BlockSpec(memory_space=pltpu.MemorySpace.VMEM)

    out_padded = pl.pallas_call(
        kernel,
        out_shape=jax.ShapeDtypeStruct((Bp, LANE), jnp.float32),
        in_specs=[vmem] * 8,
        out_specs=vmem,
    )(xflat, kp["wih0"], kp["whh0"], kp["b0"],
      kp["w1cat"], kp["b1"], kp["wfc"], kp["bfc"])

    return out_padded[:B, :1]


def init_torch_params(key, input_size=1, hidden_size=50):
    """Deterministic synthetic params with nn.LSTM / nn.Linear shapes (torch layout)."""
    H = hidden_size
    k = 1.0 / jnp.sqrt(jnp.float32(H))
    keys = jax.random.split(key, 10)

    def u(kk, shape):
        return jax.random.uniform(kk, shape, jnp.float32, minval=-k, maxval=k)

    return {
        "w_ih_l0": u(keys[0], (4 * H, input_size)),
        "w_hh_l0": u(keys[1], (4 * H, H)),
        "b_ih_l0": u(keys[2], (4 * H,)),
        "b_hh_l0": u(keys[3], (4 * H,)),
        "w_ih_l1": u(keys[4], (4 * H, H)),
        "w_hh_l1": u(keys[5], (4 * H, H)),
        "b_ih_l1": u(keys[6], (4 * H,)),
        "b_hh_l1": u(keys[7], (4 * H,)),
        "w_fc":    u(keys[8], (1, H)),
        "b_fc":    u(keys[9], (1,)),
    }


def pack_params(tp, hidden_size):
    """Re-layout torch weights for the kernel: transpose, pad every gate block
    from H to LANE columns (zeros), pad hidden rows to LANE, fuse layer-1."""
    H, Hp = hidden_size, LANE

    def pad_gate_cols(w_t):          # (K, 4H) -> (K, 4*Hp); padded columns are zero
        K = w_t.shape[0]
        out = jnp.zeros((K, 4 * Hp), jnp.float32)
        for g in range(4):
            out = out.at[:, g * Hp:g * Hp + H].set(w_t[:, g * H:(g + 1) * H])
        return out

    def pad_rows(w, Kp):             # (K, N) -> (Kp, N); padded rows are zero
        return jnp.zeros((Kp, w.shape[1]), jnp.float32).at[:w.shape[0]].set(w)

    wih0 = pad_gate_cols(tp["w_ih_l0"].T)                            # (I, 4Hp)
    whh0 = pad_rows(pad_gate_cols(tp["w_hh_l0"].T), Hp)              # (Hp, 4Hp)
    b0 = pad_gate_cols((tp["b_ih_l0"] + tp["b_hh_l0"])[None, :])     # (1, 4Hp)

    wih1 = pad_rows(pad_gate_cols(tp["w_ih_l1"].T), Hp)              # (Hp, 4Hp)
    whh1 = pad_rows(pad_gate_cols(tp["w_hh_l1"].T), Hp)              # (Hp, 4Hp)
    w1cat = jnp.concatenate([wih1, whh1], axis=0)                    # (2Hp, 4Hp)
    b1 = pad_gate_cols((tp["b_ih_l1"] + tp["b_hh_l1"])[None, :])     # (1, 4Hp)

    wfc = jnp.zeros((Hp, LANE), jnp.float32).at[:H, 0].set(tp["w_fc"][0, :])
    bfc = jnp.zeros((1, LANE), jnp.float32).at[0, 0].set(tp["b_fc"][0])

    return {"wih0": wih0, "whh0": whh0, "b0": b0,
            "w1cat": w1cat, "b1": b1, "wfc": wfc, "bfc": bfc}


def reference_forward(x, tp):
    """Pure-JAX reference of torch.nn.LSTM(2 layers) + Linear (unpadded weights)."""
    B, T, I = x.shape
    H = tp["w_hh_l0"].shape[1]

    wih0, whh0 = tp["w_ih_l0"].T, tp["w_hh_l0"].T
    b0 = tp["b_ih_l0"] + tp["b_hh_l0"]
    wih1, whh1 = tp["w_ih_l1"].T, tp["w_hh_l1"].T
    b1 = tp["b_ih_l1"] + tp["b_hh_l1"]

    def cell(xt, h, c, wih, whh, b):
        g = xt @ wih + h @ whh + b
        i = jax.nn.sigmoid(g[:, 0 * H:1 * H])
        f = jax.nn.sigmoid(g[:, 1 * H:2 * H])
        gg = jnp.tanh(g[:, 2 * H:3 * H])
        o = jax.nn.sigmoid(g[:, 3 * H:4 * H])
        c = f * c + i * gg
        h = o * jnp.tanh(c)
        return h, c

    h0 = c0 = h1 = c1 = jnp.zeros((B, H), jnp.float32)
    for t in range(T):
        h0, c0 = cell(x[:, t, :], h0, c0, wih0, whh0, b0)
        h1, c1 = cell(h0, h1, c1, wih1, whh1, b1)
    return h1 @ tp["w_fc"].T + tp["b_fc"]


if __name__ == "__main__":
    key = jax.random.PRNGKey(0)
    k_x, k_p = jax.random.split(key)

    B, T, I, H = 2, 8, 1, 50
    x = jax.random.normal(k_x, (B, T, I), dtype=jnp.float32)

    torch_params = init_torch_params(k_p, input_size=I, hidden_size=H)
    kernel_params = pack_params(torch_params, hidden_size=H)

    out = stock_lstm_forward(x, kernel_params)
    out = jax.block_until_ready(out)

    ref = reference_forward(x, torch_params)
    assert out.shape == (B, 1), out.shape
    assert jnp.allclose(out, ref, atol=1e-4, rtol=1e-4), (out, ref)

    print("KERNEL_OK")
</pallas_src>

<mosaic_0001>
module attributes {stable_mosaic.version = 11 : i64} {
  func.func @stock_lstm_kernel(%arg0: memref<64x1xf32, #tpu.memory_space<vmem>>, %arg1: memref<1x512xf32, #tpu.memory_space<vmem>>, %arg2: memref<128x512xf32, #tpu.memory_space<vmem>>, %arg3: memref<1x512xf32, #tpu.memory_space<vmem>>, %arg4: memref<256x512xf32, #tpu.memory_space<vmem>>, %arg5: memref<1x512xf32, #tpu.memory_space<vmem>>, %arg6: memref<128x128xf32, #tpu.memory_space<vmem>>, %arg7: memref<1x128xf32, #tpu.memory_space<vmem>>, %arg8: memref<8x128xf32, #tpu.memory_space<vmem>>) attributes {dimension_semantics = [], scalar_prefetch = 0 : i64, scratch_operands = 0 : i64, tpu.core_type = #tpu.core_type<tc>} {
    %c0 = arith.constant 0 : index
    %c0_0 = arith.constant 0 : index
    %0 = vector.load %arg0[%c0, %c0_0] : memref<64x1xf32, #tpu.memory_space<vmem>>, vector<64x1xf32>
    %c0_1 = arith.constant 0 : index
    %c0_2 = arith.constant 0 : index
    %1 = vector.load %arg1[%c0_1, %c0_2] : memref<1x512xf32, #tpu.memory_space<vmem>>, vector<1x512xf32>
    %cst = arith.constant dense<0.000000e+00> : vector<64x512xf32>
    %2 = tpu.matmul %0, %1, %cst {dimension_numbers = #tpu.dot_dimension_numbers<[1], [0], [0], [1], [0, 0, 1, 1], [], []>} : vector<64x1xf32>, vector<1x512xf32>, vector<64x512xf32> -> vector<64x512xf32>
    %c0_3 = arith.constant 0 : index
    %c0_4 = arith.constant 0 : index
    %3 = vector.load %arg3[%c0_3, %c0_4] : memref<1x512xf32, #tpu.memory_space<vmem>>, vector<1x512xf32>
    %4 = vector.broadcast %3 : vector<1x512xf32> to vector<64x512xf32>
    %5 = arith.addf %2, %4 : vector<64x512xf32>
    %c0_5 = arith.constant 0 : index
    %c0_6 = arith.constant 0 : index
    %6 = vector.load %arg2[%c0_5, %c0_6] : memref<128x512xf32, #tpu.memory_space<vmem>>, vector<128x512xf32>
    %c0_7 = arith.constant 0 : index
    %c0_8 = arith.constant 0 : index
    %7 = vector.load %arg4[%c0_7, %c0_8] : memref<256x512xf32, #tpu.memory_space<vmem>>, vector<256x512xf32>
    %c0_9 = arith.constant 0 : index
    %c0_10 = arith.constant 0 : index
    %8 = vector.load %arg5[%c0_9, %c0_10] : memref<1x512xf32, #tpu.memory_space<vmem>>, vector<1x512xf32>
    %9 = vector.shape_cast %8 : vector<1x512xf32> to vector<1x512xf32>
    %10 = vector.broadcast %9 : vector<1x512xf32> to vector<8x512xf32>
    %cst_11 = arith.constant 0.000000e+00 : f32
    %11 = vector.broadcast %cst_11 : f32 to vector<8x128xf32>
    %12 = vector.extract_strided_slice %5 {offsets = [0, 0], sizes = [8, 512], strides = [1, 1]} : vector<64x512xf32> to vector<8x512xf32>
    %cst_12 = arith.constant dense<0.000000e+00> : vector<8x512xf32>
    %13 = tpu.matmul %11, %6, %cst_12 {dimension_numbers = #tpu.dot_dimension_numbers<[1], [0], [0], [1], [0, 0, 1, 1], [], []>} : vector<8x128xf32>, vector<128x512xf32>, vector<8x512xf32> -> vector<8x512xf32>
    %14 = arith.addf %12, %13 : vector<8x512xf32>
    %15 = vector.extract_strided_slice %14 {offsets = [0, 0], sizes = [8, 128], strides = [1, 1]} : vector<8x512xf32> to vector<8x128xf32>
    %cst_13 = arith.constant 5.000000e-01 : f32
    %16 = vector.broadcast %cst_13 : f32 to vector<8x128xf32>
    %17 = arith.mulf %16, %15 : vector<8x128xf32>
    %18 = math.tanh %17 : vector<8x128xf32>
    %cst_14 = arith.constant 5.000000e-01 : f32
    %19 = vector.broadcast %cst_14 : f32 to vector<8x128xf32>
    %20 = arith.mulf %19, %18 : vector<8x128xf32>
    %cst_15 = arith.constant 5.000000e-01 : f32
    %21 = vector.broadcast %cst_15 : f32 to vector<8x128xf32>
    %22 = arith.addf %20, %21 : vector<8x128xf32>
    %23 = vector.extract_strided_slice %14 {offsets = [0, 128], sizes = [8, 128], strides = [1, 1]} : vector<8x512xf32> to vector<8x128xf32>
    %cst_16 = arith.constant 5.000000e-01 : f32
    %24 = vector.broadcast %cst_16 : f32 to vector<8x128xf32>
    %25 = arith.mulf %24, %23 : vector<8x128xf32>
    %26 = math.tanh %25 : vector<8x128xf32>
    %cst_17 = arith.constant 5.000000e-01 : f32
    %27 = vector.broadcast %cst_17 : f32 to vector<8x128xf32>
    %28 = arith.mulf %27, %26 : vector<8x128xf32>
    %cst_18 = arith.constant 5.000000e-01 : f32
    %29 = vector.broadcast %cst_18 : f32 to vector<8x128xf32>
    %30 = arith.addf %28, %29 : vector<8x128xf32>
    %31 = vector.extract_strided_slice %14 {offsets = [0, 256], sizes = [8, 128], strides = [1, 1]} : vector<8x512xf32> to vector<8x128xf32>
    %32 = math.tanh %31 : vector<8x128xf32>
    %33 = vector.extract_strided_slice %14 {offsets = [0, 384], sizes = [8, 128], strides = [1, 1]} : vector<8x512xf32> to vector<8x128xf32>
    %cst_19 = arith.constant 5.000000e-01 : f32
    %34 = vector.broadcast %cst_19 : f32 to vector<8x128xf32>
    %35 = arith.mulf %34, %33 : vector<8x128xf32>
    %36 = math.tanh %35 : vector<8x128xf32>
    %cst_20 = arith.constant 5.000000e-01 : f32
    %37 = vector.broadcast %cst_20 : f32 to vector<8x128xf32>
    %38 = arith.mulf %37, %36 : vector<8x128xf32>
    %cst_21 = arith.constant 5.000000e-01 : f32
    %39 = vector.broadcast %cst_21 : f32 to vector<8x128xf32>
    %40 = arith.addf %38, %39 : vector<8x128xf32>
    %41 = arith.mulf %30, %11 : vector<8x128xf32>
    %42 = arith.mulf %22, %32 : vector<8x128xf32>
    %43 = arith.addf %41, %42 : vector<8x128xf32>
    %44 = math.tanh %43 : vector<8x128xf32>
    %45 = arith.mulf %40, %44 : vector<8x128xf32>
    %46 = tpu.concatenate %45, %11 in 1 : vector<8x128xf32>, vector<8x128xf32> -> vector<8x256xf32>
    %cst_22 = arith.constant dense<0.000000e+00> : vector<8x512xf32>
    %47 = tpu.matmul %46, %7, %cst_22 {dimension_numbers = #tpu.dot_dimension_numbers<[1], [0], [0], [1], [0, 0, 1, 1], [], []>} : vector<8x256xf32>, vector<256x512xf32>, vector<8x512xf32> -> vector<8x512xf32>
    %48 = arith.addf %47, %10 : vector<8x512xf32>
    %49 = vector.extract_strided_slice %48 {offsets = [0, 0], sizes = [8, 128], strides = [1, 1]} : vector<8x512xf32> to vector<8x128xf32>
    %cst_23 = arith.constant 5.000000e-01 : f32
    %50 = vector.broadcast %cst_23 : f32 to vector<8x128xf32>
    %51 = arith.mulf %50, %49 : vector<8x128xf32>
    %52 = math.tanh %51 : vector<8x128xf32>
    %cst_24 = arith.constant 5.000000e-01 : f32
    %53 = vector.broadcast %cst_24 : f32 to vector<8x128xf32>
    %54 = arith.mulf %53, %52 : vector<8x128xf32>
    %cst_25 = arith.constant 5.000000e-01 : f32
    %55 = vector.broadcast %cst_25 : f32 to vector<8x128xf32>
    %56 = arith.addf %54, %55 : vector<8x128xf32>
    %57 = vector.extract_strided_slice %48 {offsets = [0, 128], sizes = [8, 128], strides = [1, 1]} : vector<8x512xf32> to vector<8x128xf32>
    %cst_26 = arith.constant 5.000000e-01 : f32
    %58 = vector.broadcast %cst_26 : f32 to vector<8x128xf32>
    %59 = arith.mulf %58, %57 : vector<8x128xf32>
    %60 = math.tanh %59 : vector<8x128xf32>
    %cst_27 = arith.constant 5.000000e-01 : f32
    %61 = vector.broadcast %cst_27 : f32 to vector<8x128xf32>
    %62 = arith.mulf %61, %60 : vector<8x128xf32>
    %cst_28 = arith.constant 5.000000e-01 : f32
    %63 = vector.broadcast %cst_28 : f32 to vector<8x128xf32>
    %64 = arith.addf %62, %63 : vector<8x128xf32>
    %65 = vector.extract_strided_slice %48 {offsets = [0, 256], sizes = [8, 128], strides = [1, 1]} : vector<8x512xf32> to vector<8x128xf32>
    %66 = math.tanh %65 : vector<8x128xf32>
    %67 = vector.extract_strided_slice %48 {offsets = [0, 384], sizes = [8, 128], strides = [1, 1]} : vector<8x512xf32> to vector<8x128xf32>
    %cst_29 = arith.constant 5.000000e-01 : f32
    %68 = vector.broadcast %cst_29 : f32 to vector<8x128xf32>
    %69 = arith.mulf %68, %67 : vector<8x128xf32>
    %70 = math.tanh %69 : vector<8x128xf32>
    %cst_30 = arith.constant 5.000000e-01 : f32
    %71 = vector.broadcast %cst_30 : f32 to vector<8x128xf32>
    %72 = arith.mulf %71, %70 : vector<8x128xf32>
    %cst_31 = arith.constant 5.000000e-01 : f32
    %73 = vector.broadcast %cst_31 : f32 to vector<8x128xf32>
    %74 = arith.addf %72, %73 : vector<8x128xf32>
    %75 = arith.mulf %64, %11 : vector<8x128xf32>
    %76 = arith.mulf %56, %66 : vector<8x128xf32>
    %77 = arith.addf %75, %76 : vector<8x128xf32>
    %78 = math.tanh %77 : vector<8x128xf32>
    %79 = arith.mulf %74, %78 : vector<8x128xf32>
    %80 = vector.extract_strided_slice %5 {offsets = [8, 0], sizes = [8, 512], strides = [1, 1]} : vector<64x512xf32> to vector<8x512xf32>
    %cst_32 = arith.constant dense<0.000000e+00> : vector<8x512xf32>
    %81 = tpu.matmul %45, %6, %cst_32 {dimension_numbers = #tpu.dot_dimension_numbers<[1], [0], [0], [1], [0, 0, 1, 1], [], []>} : vector<8x128xf32>, vector<128x512xf32>, vector<8x512xf32> -> vector<8x512xf32>
    %82 = arith.addf %80, %81 : vector<8x512xf32>
    %83 = vector.extract_strided_slice %82 {offsets = [0, 0], sizes = [8, 128], strides = [1, 1]} : vector<8x512xf32> to vector<8x128xf32>
    %cst_33 = arith.constant 5.000000e-01 : f32
    %84 = vector.broadcast %cst_33 : f32 to vector<8x128xf32>
    %85 = arith.mulf %84, %83 : vector<8x128xf32>
    %86 = math.tanh %85 : vector<8x128xf32>
    %cst_34 = arith.constant 5.000000e-01 : f32
    %87 = vector.broadcast %cst_34 : f32 to vector<8x128xf32>
    %88 = arith.mulf %87, %86 : vector<8x128xf32>
    %cst_35 = arith.constant 5.000000e-01 : f32
    %89 = vector.broadcast %cst_35 : f32 to vector<8x128xf32>
    %90 = arith.addf %88, %89 : vector<8x128xf32>
    %91 = vector.extract_strided_slice %82 {offsets = [0, 128], sizes = [8, 128], strides = [1, 1]} : vector<8x512xf32> to vector<8x128xf32>
    %cst_36 = arith.constant 5.000000e-01 : f32
    %92 = vector.broadcast %cst_36 : f32 to vector<8x128xf32>
    %93 = arith.mulf %92, %91 : vector<8x128xf32>
    %94 = math.tanh %93 : vector<8x128xf32>
    %cst_37 = arith.constant 5.000000e-01 : f32
    %95 = vector.broadcast %cst_37 : f32 to vector<8x128xf32>
    %96 = arith.mulf %95, %94 : vector<8x128xf32>
    %cst_38 = arith.constant 5.000000e-01 : f32
    %97 = vector.broadcast %cst_38 : f32 to vector<8x128xf32>
    %98 = arith.addf %96, %97 : vector<8x128xf32>
    %99 = vector.extract_strided_slice %82 {offsets = [0, 256], sizes = [8, 128], strides = [1, 1]} : vector<8x512xf32> to vector<8x128xf32>
    %100 = math.tanh %99 : vector<8x128xf32>
    %101 = vector.extract_strided_slice %82 {offsets = [0, 384], sizes = [8, 128], strides = [1, 1]} : vector<8x512xf32> to vector<8x128xf32>
    %cst_39 = arith.constant 5.000000e-01 : f32
    %102 = vector.broadcast %cst_39 : f32 to vector<8x128xf32>
    %103 = arith.mulf %102, %101 : vector<8x128xf32>
    %104 = math.tanh %103 : vector<8x128xf32>
    %cst_40 = arith.constant 5.000000e-01 : f32
    %105 = vector.broadcast %cst_40 : f32 to vector<8x128xf32>
    %106 = arith.mulf %105, %104 : vector<8x128xf32>
    %cst_41 = arith.constant 5.000000e-01 : f32
    %107 = vector.broadcast %cst_41 : f32 to vector<8x128xf32>
    %108 = arith.addf %106, %107 : vector<8x128xf32>
    %109 = arith.mulf %98, %43 : vector<8x128xf32>
    %110 = arith.mulf %90, %100 : vector<8x128xf32>
    %111 = arith.addf %109, %110 : vector<8x128xf32>
    %112 = math.tanh %111 : vector<8x128xf32>
    %113 = arith.mulf %108, %112 : vector<8x128xf32>
    %114 = tpu.concatenate %113, %79 in 1 : vector<8x128xf32>, vector<8x128xf32> -> vector<8x256xf32>
    %cst_42 = arith.constant dense<0.000000e+00> : vector<8x512xf32>
    %115 = tpu.matmul %114, %7, %cst_42 {dimension_numbers = #tpu.dot_dimension_numbers<[1], [0], [0], [1], [0, 0, 1, 1], [], []>} : vector<8x256xf32>, vector<256x512xf32>, vector<8x512xf32> -> vector<8x512xf32>
    %116 = arith.addf %115, %10 : vector<8x512xf32>
    %117 = vector.extract_strided_slice %116 {offsets = [0, 0], sizes = [8, 128], strides = [1, 1]} : vector<8x512xf32> to vector<8x128xf32>
    %cst_43 = arith.constant 5.000000e-01 : f32
    %118 = vector.broadcast %cst_43 : f32 to vector<8x128xf32>
    %119 = arith.mulf %118, %117 : vector<8x128xf32>
    %120 = math.tanh %119 : vector<8x128xf32>
    %cst_44 = arith.constant 5.000000e-01 : f32
    %121 = vector.broadcast %cst_44 : f32 to vector<8x128xf32>
    %122 = arith.mulf %121, %120 : vector<8x128xf32>
    %cst_45 = arith.constant 5.000000e-01 : f32
    %123 = vector.broadcast %cst_45 : f32 to vector<8x128xf32>
    %124 = arith.addf %122, %123 : vector<8x128xf32>
    %125 = vector.extract_strided_slice %116 {offsets = [0, 128], sizes = [8, 128], strides = [1, 1]} : vector<8x512xf32> to vector<8x128xf32>
    %cst_46 = arith.constant 5.000000e-01 : f32
    %126 = vector.broadcast %cst_46 : f32 to vector<8x128xf32>
    %127 = arith.mulf %126, %125 : vector<8x128xf32>
    %128 = math.tanh %127 : vector<8x128xf32>
    %cst_47 = arith.constant 5.000000e-01 : f32
    %129 = vector.broadcast %cst_47 : f32 to vector<8x128xf32>
    %130 = arith.mulf %129, %128 : vector<8x128xf32>
    %cst_48 = arith.constant 5.000000e-01 : f32
    %131 = vector.broadcast %cst_48 : f32 to vector<8x128xf32>
    %132 = arith.addf %130, %131 : vector<8x128xf32>
    %133 = vector.extract_strided_slice %116 {offsets = [0, 256], sizes = [8, 128], strides = [1, 1]} : vector<8x512xf32> to vector<8x128xf32>
    %134 = math.tanh %133 : vector<8x128xf32>
    %135 = vector.extract_strided_slice %116 {offsets = [0, 384], sizes = [8, 128], strides = [1, 1]} : vector<8x512xf32> to vector<8x128xf32>
    %cst_49 = arith.constant 5.000000e-01 : f32
    %136 = vector.broadcast %cst_49 : f32 to vector<8x128xf32>
    %137 = arith.mulf %136, %135 : vector<8x128xf32>
    %138 = math.tanh %137 : vector<8x128xf32>
    %cst_50 = arith.constant 5.000000e-01 : f32
    %139 = vector.broadcast %cst_50 : f32 to vector<8x128xf32>
    %140 = arith.mulf %139, %138 : vector<8x128xf32>
    %cst_51 = arith.constant 5.000000e-01 : f32
    %141 = vector.broadcast %cst_51 : f32 to vector<8x128xf32>
    %142 = arith.addf %140, %141 : vector<8x128xf32>
    %143 = arith.mulf %132, %77 : vector<8x128xf32>
    %144 = arith.mulf %124, %134 : vector<8x128xf32>
    %145 = arith.addf %143, %144 : vector<8x128xf32>
    %146 = math.tanh %145 : vector<8x128xf32>
    %147 = arith.mulf %142, %146 : vector<8x128xf32>
    %148 = vector.extract_strided_slice %5 {offsets = [16, 0], sizes = [8, 512], strides = [1, 1]} : vector<64x512xf32> to vector<8x512xf32>
    %cst_52 = arith.constant dense<0.000000e+00> : vector<8x512xf32>
    %149 = tpu.matmul %113, %6, %cst_52 {dimension_numbers = #tpu.dot_dimension_numbers<[1], [0], [0], [1], [0, 0, 1, 1], [], []>} : vector<8x128xf32>, vector<128x512xf32>, vector<8x512xf32> -> vector<8x512xf32>
    %150 = arith.addf %148, %149 : vector<8x512xf32>
    %151 = vector.extract_strided_slice %150 {offsets = [0, 0], sizes = [8, 128], strides = [1, 1]} : vector<8x512xf32> to vector<8x128xf32>
    %cst_53 = arith.constant 5.000000e-01 : f32
    %152 = vector.broadcast %cst_53 : f32 to vector<8x128xf32>
    %153 = arith.mulf %152, %151 : vector<8x128xf32>
    %154 = math.tanh %153 : vector<8x128xf32>
    %cst_54 = arith.constant 5.000000e-01 : f32
    %155 = vector.broadcast %cst_54 : f32 to vector<8x128xf32>
    %156 = arith.mulf %155, %154 : vector<8x128xf32>
    %cst_55 = arith.constant 5.000000e-01 : f32
    %157 = vector.broadcast %cst_55 : f32 to vector<8x128xf32>
    %158 = arith.addf %156, %157 : vector<8x128xf32>
    %159 = vector.extract_strided_slice %150 {offsets = [0, 128], sizes = [8, 128], strides = [1, 1]} : vector<8x512xf32> to vector<8x128xf32>
    %cst_56 = arith.constant 5.000000e-01 : f32
    %160 = vector.broadcast %cst_56 : f32 to vector<8x128xf32>
    %161 = arith.mulf %160, %159 : vector<8x128xf32>
    %162 = math.tanh %161 : vector<8x128xf32>
    %cst_57 = arith.constant 5.000000e-01 : f32
    %163 = vector.broadcast %cst_57 : f32 to vector<8x128xf32>
    %164 = arith.mulf %163, %162 : vector<8x128xf32>
    %cst_58 = arith.constant 5.000000e-01 : f32
    %165 = vector.broadcast %cst_58 : f32 to vector<8x128xf32>
    %166 = arith.addf %164, %165 : vector<8x128xf32>
    %167 = vector.extract_strided_slice %150 {offsets = [0, 256], sizes = [8, 128], strides = [1, 1]} : vector<8x512xf32> to vector<8x128xf32>
    %168 = math.tanh %167 : vector<8x128xf32>
    %169 = vector.extract_strided_slice %150 {offsets = [0, 384], sizes = [8, 128], strides = [1, 1]} : vector<8x512xf32> to vector<8x128xf32>
    %cst_59 = arith.constant 5.000000e-01 : f32
    %170 = vector.broadcast %cst_59 : f32 to vector<8x128xf32>
    %171 = arith.mulf %170, %169 : vector<8x128xf32>
    %172 = math.tanh %171 : vector<8x128xf32>
    %cst_60 = arith.constant 5.000000e-01 : f32
    %173 = vector.broadcast %cst_60 : f32 to vector<8x128xf32>
    %174 = arith.mulf %173, %172 : vector<8x128xf32>
    %cst_61 = arith.constant 5.000000e-01 : f32
    %175 = vector.broadcast %cst_61 : f32 to vector<8x128xf32>
    %176 = arith.addf %174, %175 : vector<8x128xf32>
    %177 = arith.mulf %166, %111 : vector<8x128xf32>
    %178 = arith.mulf %158, %168 : vector<8x128xf32>
    %179 = arith.addf %177, %178 : vector<8x128xf32>
    %180 = math.tanh %179 : vector<8x128xf32>
    %181 = arith.mulf %176, %180 : vector<8x128xf32>
    %182 = tpu.concatenate %181, %147 in 1 : vector<8x128xf32>, vector<8x128xf32> -> vector<8x256xf32>
    %cst_62 = arith.constant dense<0.000000e+00> : vector<8x512xf32>
    %183 = tpu.matmul %182, %7, %cst_62 {dimension_numbers = #tpu.dot_dimension_numbers<[1], [0], [0], [1], [0, 0, 1, 1], [], []>} : vector<8x256xf32>, vector<256x512xf32>, vector<8x512xf32> -> vector<8x512xf32>
    %184 = arith.addf %183, %10 : vector<8x512xf32>
    %185 = vector.extract_strided_slice %184 {offsets = [0, 0], sizes = [8, 128], strides = [1, 1]} : vector<8x512xf32> to vector<8x128xf32>
    %cst_63 = arith.constant 5.000000e-01 : f32
    %186 = vector.broadcast %cst_63 : f32 to vector<8x128xf32>
    %187 = arith.mulf %186, %185 : vector<8x128xf32>
    %188 = math.tanh %187 : vector<8x128xf32>
    %cst_64 = arith.constant 5.000000e-01 : f32
    %189 = vector.broadcast %cst_64 : f32 to vector<8x128xf32>
    %190 = arith.mulf %189, %188 : vector<8x128xf32>
    %cst_65 = arith.constant 5.000000e-01 : f32
    %191 = vector.broadcast %cst_65 : f32 to vector<8x128xf32>
    %192 = arith.addf %190, %191 : vector<8x128xf32>
    %193 = vector.extract_strided_slice %184 {offsets = [0, 128], sizes = [8, 128], strides = [1, 1]} : vector<8x512xf32> to vector<8x128xf32>
    %cst_66 = arith.constant 5.000000e-01 : f32
    %194 = vector.broadcast %cst_66 : f32 to vector<8x128xf32>
    %195 = arith.mulf %194, %193 : vector<8x128xf32>
    %196 = math.tanh %195 : vector<8x128xf32>
    %cst_67 = arith.constant 5.000000e-01 : f32
    %197 = vector.broadcast %cst_67 : f32 to vector<8x128xf32>
    %198 = arith.mulf %197, %196 : vector<8x128xf32>
    %cst_68 = arith.constant 5.000000e-01 : f32
    %199 = vector.broadcast %cst_68 : f32 to vector<8x128xf32>
    %200 = arith.addf %198, %199 : vector<8x128xf32>
    %201 = vector.extract_strided_slice %184 {offsets = [0, 256], sizes = [8, 128], strides = [1, 1]} : vector<8x512xf32> to vector<8x128xf32>
    %202 = math.tanh %201 : vector<8x128xf32>
    %203 = vector.extract_strided_slice %184 {offsets = [0, 384], sizes = [8, 128], strides = [1, 1]} : vector<8x512xf32> to vector<8x128xf32>
    %cst_69 = arith.constant 5.000000e-01 : f32
    %204 = vector.broadcast %cst_69 : f32 to vector<8x128xf32>
    %205 = arith.mulf %204, %203 : vector<8x128xf32>
    %206 = math.tanh %205 : vector<8x128xf32>
    %cst_70 = arith.constant 5.000000e-01 : f32
    %207 = vector.broadcast %cst_70 : f32 to vector<8x128xf32>
    %208 = arith.mulf %207, %206 : vector<8x128xf32>
    %cst_71 = arith.constant 5.000000e-01 : f32
    %209 = vector.broadcast %cst_71 : f32 to vector<8x128xf32>
    %210 = arith.addf %208, %209 : vector<8x128xf32>
    %211 = arith.mulf %200, %145 : vector<8x128xf32>
    %212 = arith.mulf %192, %202 : vector<8x128xf32>
    %213 = arith.addf %211, %212 : vector<8x128xf32>
    %214 = math.tanh %213 : vector<8x128xf32>
    %215 = arith.mulf %210, %214 : vector<8x128xf32>
    %216 = vector.extract_strided_slice %5 {offsets = [24, 0], sizes = [8, 512], strides = [1, 1]} : vector<64x512xf32> to vector<8x512xf32>
    %cst_72 = arith.constant dense<0.000000e+00> : vector<8x512xf32>
    %217 = tpu.matmul %181, %6, %cst_72 {dimension_numbers = #tpu.dot_dimension_numbers<[1], [0], [0], [1], [0, 0, 1, 1], [], []>} : vector<8x128xf32>, vector<128x512xf32>, vector<8x512xf32> -> vector<8x512xf32>
    %218 = arith.addf %216, %217 : vector<8x512xf32>
    %219 = vector.extract_strided_slice %218 {offsets = [0, 0], sizes = [8, 128], strides = [1, 1]} : vector<8x512xf32> to vector<8x128xf32>
    %cst_73 = arith.constant 5.000000e-01 : f32
    %220 = vector.broadcast %cst_73 : f32 to vector<8x128xf32>
    %221 = arith.mulf %220, %219 : vector<8x128xf32>
    %222 = math.tanh %221 : vector<8x128xf32>
    %cst_74 = arith.constant 5.000000e-01 : f32
    %223 = vector.broadcast %cst_74 : f32 to vector<8x128xf32>
    %224 = arith.mulf %223, %222 : vector<8x128xf32>
    %cst_75 = arith.constant 5.000000e-01 : f32
    %225 = vector.broadcast %cst_75 : f32 to vector<8x128xf32>
    %226 = arith.addf %224, %225 : vector<8x128xf32>
    %227 = vector.extract_strided_slice %218 {offsets = [0, 128], sizes = [8, 128], strides = [1, 1]} : vector<8x512xf32> to vector<8x128xf32>
    %cst_76 = arith.constant 5.000000e-01 : f32
    %228 = vector.broadcast %cst_76 : f32 to vector<8x128xf32>
    %229 = arith.mulf %228, %227 : vector<8x128xf32>
    %230 = math.tanh %229 : vector<8x128xf32>
    %cst_77 = arith.constant 5.000000e-01 : f32
    %231 = vector.broadcast %cst_77 : f32 to vector<8x128xf32>
    %232 = arith.mulf %231, %230 : vector<8x128xf32>
    %cst_78 = arith.constant 5.000000e-01 : f32
    %233 = vector.broadcast %cst_78 : f32 to vector<8x128xf32>
    %234 = arith.addf %232, %233 : vector<8x128xf32>
    %235 = vector.extract_strided_slice %218 {offsets = [0, 256], sizes = [8, 128], strides = [1, 1]} : vector<8x512xf32> to vector<8x128xf32>
    %236 = math.tanh %235 : vector<8x128xf32>
    %237 = vector.extract_strided_slice %218 {offsets = [0, 384], sizes = [8, 128], strides = [1, 1]} : vector<8x512xf32> to vector<8x128xf32>
    %cst_79 = arith.constant 5.000000e-01 : f32
    %238 = vector.broadcast %cst_79 : f32 to vector<8x128xf32>
    %239 = arith.mulf %238, %237 : vector<8x128xf32>
    %240 = math.tanh %239 : vector<8x128xf32>
    %cst_80 = arith.constant 5.000000e-01 : f32
    %241 = vector.broadcast %cst_80 : f32 to vector<8x128xf32>
    %242 = arith.mulf %241, %240 : vector<8x128xf32>
    %cst_81 = arith.constant 5.000000e-01 : f32
    %243 = vector.broadcast %cst_81 : f32 to vector<8x128xf32>
    %244 = arith.addf %242, %243 : vector<8x128xf32>
    %245 = arith.mulf %234, %179 : vector<8x128xf32>
    %246 = arith.mulf %226, %236 : vector<8x128xf32>
    %247 = arith.addf %245, %246 : vector<8x128xf32>
    %248 = math.tanh %247 : vector<8x128xf32>
    %249 = arith.mulf %244, %248 : vector<8x128xf32>
    %250 = tpu.concatenate %249, %215 in 1 : vector<8x128xf32>, vector<8x128xf32> -> vector<8x256xf32>
    %cst_82 = arith.constant dense<0.000000e+00> : vector<8x512xf32>
    %251 = tpu.matmul %250, %7, %cst_82 {dimension_numbers = #tpu.dot_dimension_numbers<[1], [0], [0], [1], [0, 0, 1, 1], [], []>} : vector<8x256xf32>, vector<256x512xf32>, vector<8x512xf32> -> vector<8x512xf32>
    %252 = arith.addf %251, %10 : vector<8x512xf32>
    %253 = vector.extract_strided_slice %252 {offsets = [0, 0], sizes = [8, 128], strides = [1, 1]} : vector<8x512xf32> to vector<8x128xf32>
    %cst_83 = arith.constant 5.000000e-01 : f32
    %254 = vector.broadcast %cst_83 : f32 to vector<8x128xf32>
    %255 = arith.mulf %254, %253 : vector<8x128xf32>
    %256 = math.tanh %255 : vector<8x128xf32>
    %cst_84 = arith.constant 5.000000e-01 : f32
    %257 = vector.broadcast %cst_84 : f32 to vector<8x128xf32>
    %258 = arith.mulf %257, %256 : vector<8x128xf32>
    %cst_85 = arith.constant 5.000000e-01 : f32
    %259 = vector.broadcast %cst_85 : f32 to vector<8x128xf32>
    %260 = arith.addf %258, %259 : vector<8x128xf32>
    %261 = vector.extract_strided_slice %252 {offsets = [0, 128], sizes = [8, 128], strides = [1, 1]} : vector<8x512xf32> to vector<8x128xf32>
    %cst_86 = arith.constant 5.000000e-01 : f32
    %262 = vector.broadcast %cst_86 : f32 to vector<8x128xf32>
    %263 = arith.mulf %262, %261 : vector<8x128xf32>
    %264 = math.tanh %263 : vector<8x128xf32>
    %cst_87 = arith.constant 5.000000e-01 : f32
    %265 = vector.broadcast %cst_87 : f32 to vector<8x128xf32>
    %266 = arith.mulf %265, %264 : vector<8x128xf32>
    %cst_88 = arith.constant 5.000000e-01 : f32
    %267 = vector.broadcast %cst_88 : f32 to vector<8x128xf32>
    %268 = arith.addf %266, %267 : vector<8x128xf32>
    %269 = vector.extract_strided_slice %252 {offsets = [0, 256], sizes = [8, 128], strides = [1, 1]} : vector<8x512xf32> to vector<8x128xf32>
    %270 = math.tanh %269 : vector<8x128xf32>
    %271 = vector.extract_strided_slice %252 {offsets = [0, 384], sizes = [8, 128], strides = [1, 1]} : vector<8x512xf32> to vector<8x128xf32>
    %cst_89 = arith.constant 5.000000e-01 : f32
    %272 = vector.broadcast %cst_89 : f32 to vector<8x128xf32>
    %273 = arith.mulf %272, %271 : vector<8x128xf32>
    %274 = math.tanh %273 : vector<8x128xf32>
    %cst_90 = arith.constant 5.000000e-01 : f32
    %275 = vector.broadcast %cst_90 : f32 to vector<8x128xf32>
    %276 = arith.mulf %275, %274 : vector<8x128xf32>
    %cst_91 = arith.constant 5.000000e-01 : f32
    %277 = vector.broadcast %cst_91 : f32 to vector<8x128xf32>
    %278 = arith.addf %276, %277 : vector<8x128xf32>
    %279 = arith.mulf %268, %213 : vector<8x128xf32>
    %280 = arith.mulf %260, %270 : vector<8x128xf32>
    %281 = arith.addf %279, %280 : vector<8x128xf32>
    %282 = math.tanh %281 : vector<8x128xf32>
    %283 = arith.mulf %278, %282 : vector<8x128xf32>
    %284 = vector.extract_strided_slice %5 {offsets = [32, 0], sizes = [8, 512], strides = [1, 1]} : vector<64x512xf32> to vector<8x512xf32>
    %cst_92 = arith.constant dense<0.000000e+00> : vector<8x512xf32>
    %285 = tpu.matmul %249, %6, %cst_92 {dimension_numbers = #tpu.dot_dimension_numbers<[1], [0], [0], [1], [0, 0, 1, 1], [], []>} : vector<8x128xf32>, vector<128x512xf32>, vector<8x512xf32> -> vector<8x512xf32>
    %286 = arith.addf %284, %285 : vector<8x512xf32>
    %287 = vector.extract_strided_slice %286 {offsets = [0, 0], sizes = [8, 128], strides = [1, 1]} : vector<8x512xf32> to vector<8x128xf32>
    %cst_93 = arith.constant 5.000000e-01 : f32
    %288 = vector.broadcast %cst_93 : f32 to vector<8x128xf32>
    %289 = arith.mulf %288, %287 : vector<8x128xf32>
    %290 = math.tanh %289 : vector<8x128xf32>
    %cst_94 = arith.constant 5.000000e-01 : f32
    %291 = vector.broadcast %cst_94 : f32 to vector<8x128xf32>
    %292 = arith.mulf %291, %290 : vector<8x128xf32>
    %cst_95 = arith.constant 5.000000e-01 : f32
    %293 = vector.broadcast %cst_95 : f32 to vector<8x128xf32>
    %294 = arith.addf %292, %293 : vector<8x128xf32>
    %295 = vector.extract_strided_slice %286 {offsets = [0, 128], sizes = [8, 128], strides = [1, 1]} : vector<8x512xf32> to vector<8x128xf32>
    %cst_96 = arith.constant 5.000000e-01 : f32
    %296 = vector.broadcast %cst_96 : f32 to vector<8x128xf32>
    %297 = arith.mulf %296, %295 : vector<8x128xf32>
    %298 = math.tanh %297 : vector<8x128xf32>
    %cst_97 = arith.constant 5.000000e-01 : f32
    %299 = vector.broadcast %cst_97 : f32 to vector<8x128xf32>
    %300 = arith.mulf %299, %298 : vector<8x128xf32>
    %cst_98 = arith.constant 5.000000e-01 : f32
    %301 = vector.broadcast %cst_98 : f32 to vector<8x128xf32>
    %302 = arith.addf %300, %301 : vector<8x128xf32>
    %303 = vector.extract_strided_slice %286 {offsets = [0, 256], sizes = [8, 128], strides = [1, 1]} : vector<8x512xf32> to vector<8x128xf32>
    %304 = math.tanh %303 : vector<8x128xf32>
    %305 = vector.extract_strided_slice %286 {offsets = [0, 384], sizes = [8, 128], strides = [1, 1]} : vector<8x512xf32> to vector<8x128xf32>
    %cst_99 = arith.constant 5.000000e-01 : f32
    %306 = vector.broadcast %cst_99 : f32 to vector<8x128xf32>
    %307 = arith.mulf %306, %305 : vector<8x128xf32>
    %308 = math.tanh %307 : vector<8x128xf32>
    %cst_100 = arith.constant 5.000000e-01 : f32
    %309 = vector.broadcast %cst_100 : f32 to vector<8x128xf32>
    %310 = arith.mulf %309, %308 : vector<8x128xf32>
    %cst_101 = arith.constant 5.000000e-01 : f32
    %311 = vector.broadcast %cst_101 : f32 to vector<8x128xf32>
    %312 = arith.addf %310, %311 : vector<8x128xf32>
    %313 = arith.mulf %302, %247 : vector<8x128xf32>
    %314 = arith.mulf %294, %304 : vector<8x128xf32>
    %315 = arith.addf %313, %314 : vector<8x128xf32>
    %316 = math.tanh %315 : vector<8x128xf32>
    %317 = arith.mulf %312, %316 : vector<8x128xf32>
    %318 = tpu.concatenate %317, %283 in 1 : vector<8x128xf32>, vector<8x128xf32> -> vector<8x256xf32>
    %cst_102 = arith.constant dense<0.000000e+00> : vector<8x512xf32>
    %319 = tpu.matmul %318, %7, %cst_102 {dimension_numbers = #tpu.dot_dimension_numbers<[1], [0], [0], [1], [0, 0, 1, 1], [], []>} : vector<8x256xf32>, vector<256x512xf32>, vector<8x512xf32> -> vector<8x512xf32>
    %320 = arith.addf %319, %10 : vector<8x512xf32>
    %321 = vector.extract_strided_slice %320 {offsets = [0, 0], sizes = [8, 128], strides = [1, 1]} : vector<8x512xf32> to vector<8x128xf32>
    %cst_103 = arith.constant 5.000000e-01 : f32
    %322 = vector.broadcast %cst_103 : f32 to vector<8x128xf32>
    %323 = arith.mulf %322, %321 : vector<8x128xf32>
    %324 = math.tanh %323 : vector<8x128xf32>
    %cst_104 = arith.constant 5.000000e-01 : f32
    %325 = vector.broadcast %cst_104 : f32 to vector<8x128xf32>
    %326 = arith.mulf %325, %324 : vector<8x128xf32>
    %cst_105 = arith.constant 5.000000e-01 : f32
    %327 = vector.broadcast %cst_105 : f32 to vector<8x128xf32>
    %328 = arith.addf %326, %327 : vector<8x128xf32>
    %329 = vector.extract_strided_slice %320 {offsets = [0, 128], sizes = [8, 128], strides = [1, 1]} : vector<8x512xf32> to vector<8x128xf32>
    %cst_106 = arith.constant 5.000000e-01 : f32
    %330 = vector.broadcast %cst_106 : f32 to vector<8x128xf32>
    %331 = arith.mulf %330, %329 : vector<8x128xf32>
    %332 = math.tanh %331 : vector<8x128xf32>
    %cst_107 = arith.constant 5.000000e-01 : f32
    %333 = vector.broadcast %cst_107 : f32 to vector<8x128xf32>
    %334 = arith.mulf %333, %332 : vector<8x128xf32>
    %cst_108 = arith.constant 5.000000e-01 : f32
    %335 = vector.broadcast %cst_108 : f32 to vector<8x128xf32>
    %336 = arith.addf %334, %335 : vector<8x128xf32>
    %337 = vector.extract_strided_slice %320 {offsets = [0, 256], sizes = [8, 128], strides = [1, 1]} : vector<8x512xf32> to vector<8x128xf32>
    %338 = math.tanh %337 : vector<8x128xf32>
    %339 = vector.extract_strided_slice %320 {offsets = [0, 384], sizes = [8, 128], strides = [1, 1]} : vector<8x512xf32> to vector<8x128xf32>
    %cst_109 = arith.constant 5.000000e-01 : f32
    %340 = vector.broadcast %cst_109 : f32 to vector<8x128xf32>
    %341 = arith.mulf %340, %339 : vector<8x128xf32>
    %342 = math.tanh %341 : vector<8x128xf32>
    %cst_110 = arith.constant 5.000000e-01 : f32
    %343 = vector.broadcast %cst_110 : f32 to vector<8x128xf32>
    %344 = arith.mulf %343, %342 : vector<8x128xf32>
    %cst_111 = arith.constant 5.000000e-01 : f32
    %345 = vector.broadcast %cst_111 : f32 to vector<8x128xf32>
    %346 = arith.addf %344, %345 : vector<8x128xf32>
    %347 = arith.mulf %336, %281 : vector<8x128xf32>
    %348 = arith.mulf %328, %338 : vector<8x128xf32>
    %349 = arith.addf %347, %348 : vector<8x128xf32>
    %350 = math.tanh %349 : vector<8x128xf32>
    %351 = arith.mulf %346, %350 : vector<8x128xf32>
    %352 = vector.extract_strided_slice %5 {offsets = [40, 0], sizes = [8, 512], strides = [1, 1]} : vector<64x512xf32> to vector<8x512xf32>
    %cst_112 = arith.constant dense<0.000000e+00> : vector<8x512xf32>
    %353 = tpu.matmul %317, %6, %cst_112 {dimension_numbers = #tpu.dot_dimension_numbers<[1], [0], [0], [1], [0, 0, 1, 1], [], []>} : vector<8x128xf32>, vector<128x512xf32>, vector<8x512xf32> -> vector<8x512xf32>
    %354 = arith.addf %352, %353 : vector<8x512xf32>
    %355 = vector.extract_strided_slice %354 {offsets = [0, 0], sizes = [8, 128], strides = [1, 1]} : vector<8x512xf32> to vector<8x128xf32>
    %cst_113 = arith.constant 5.000000e-01 : f32
    %356 = vector.broadcast %cst_113 : f32 to vector<8x128xf32>
    %357 = arith.mulf %356, %355 : vector<8x128xf32>
    %358 = math.tanh %357 : vector<8x128xf32>
    %cst_114 = arith.constant 5.000000e-01 : f32
    %359 = vector.broadcast %cst_114 : f32 to vector<8x128xf32>
    %360 = arith.mulf %359, %358 : vector<8x128xf32>
    %cst_115 = arith.constant 5.000000e-01 : f32
    %361 = vector.broadcast %cst_115 : f32 to vector<8x128xf32>
    %362 = arith.addf %360, %361 : vector<8x128xf32>
    %363 = vector.extract_strided_slice %354 {offsets = [0, 128], sizes = [8, 128], strides = [1, 1]} : vector<8x512xf32> to vector<8x128xf32>
    %cst_116 = arith.constant 5.000000e-01 : f32
    %364 = vector.broadcast %cst_116 : f32 to vector<8x128xf32>
    %365 = arith.mulf %364, %363 : vector<8x128xf32>
    %366 = math.tanh %365 : vector<8x128xf32>
    %cst_117 = arith.constant 5.000000e-01 : f32
    %367 = vector.broadcast %cst_117 : f32 to vector<8x128xf32>
    %368 = arith.mulf %367, %366 : vector<8x128xf32>
    %cst_118 = arith.constant 5.000000e-01 : f32
    %369 = vector.broadcast %cst_118 : f32 to vector<8x128xf32>
    %370 = arith.addf %368, %369 : vector<8x128xf32>
    %371 = vector.extract_strided_slice %354 {offsets = [0, 256], sizes = [8, 128], strides = [1, 1]} : vector<8x512xf32> to vector<8x128xf32>
    %372 = math.tanh %371 : vector<8x128xf32>
    %373 = vector.extract_strided_slice %354 {offsets = [0, 384], sizes = [8, 128], strides = [1, 1]} : vector<8x512xf32> to vector<8x128xf32>
    %cst_119 = arith.constant 5.000000e-01 : f32
    %374 = vector.broadcast %cst_119 : f32 to vector<8x128xf32>
    %375 = arith.mulf %374, %373 : vector<8x128xf32>
    %376 = math.tanh %375 : vector<8x128xf32>
    %cst_120 = arith.constant 5.000000e-01 : f32
    %377 = vector.broadcast %cst_120 : f32 to vector<8x128xf32>
    %378 = arith.mulf %377, %376 : vector<8x128xf32>
    %cst_121 = arith.constant 5.000000e-01 : f32
    %379 = vector.broadcast %cst_121 : f32 to vector<8x128xf32>
    %380 = arith.addf %378, %379 : vector<8x128xf32>
    %381 = arith.mulf %370, %315 : vector<8x128xf32>
    %382 = arith.mulf %362, %372 : vector<8x128xf32>
    %383 = arith.addf %381, %382 : vector<8x128xf32>
    %384 = math.tanh %383 : vector<8x128xf32>
    %385 = arith.mulf %380, %384 : vector<8x128xf32>
    %386 = tpu.concatenate %385, %351 in 1 : vector<8x128xf32>, vector<8x128xf32> -> vector<8x256xf32>
    %cst_122 = arith.constant dense<0.000000e+00> : vector<8x512xf32>
    %387 = tpu.matmul %386, %7, %cst_122 {dimension_numbers = #tpu.dot_dimension_numbers<[1], [0], [0], [1], [0, 0, 1, 1], [], []>} : vector<8x256xf32>, vector<256x512xf32>, vector<8x512xf32> -> vector<8x512xf32>
    %388 = arith.addf %387, %10 : vector<8x512xf32>
    %389 = vector.extract_strided_slice %388 {offsets = [0, 0], sizes = [8, 128], strides = [1, 1]} : vector<8x512xf32> to vector<8x128xf32>
    %cst_123 = arith.constant 5.000000e-01 : f32
    %390 = vector.broadcast %cst_123 : f32 to vector<8x128xf32>
    %391 = arith.mulf %390, %389 : vector<8x128xf32>
    %392 = math.tanh %391 : vector<8x128xf32>
    %cst_124 = arith.constant 5.000000e-01 : f32
    %393 = vector.broadcast %cst_124 : f32 to vector<8x128xf32>
    %394 = arith.mulf %393, %392 : vector<8x128xf32>
    %cst_125 = arith.constant 5.000000e-01 : f32
    %395 = vector.broadcast %cst_125 : f32 to vector<8x128xf32>
    %396 = arith.addf %394, %395 : vector<8x128xf32>
    %397 = vector.extract_strided_slice %388 {offsets = [0, 128], sizes = [8, 128], strides = [1, 1]} : vector<8x512xf32> to vector<8x128xf32>
    %cst_126 = arith.constant 5.000000e-01 : f32
    %398 = vector.broadcast %cst_126 : f32 to vector<8x128xf32>
    %399 = arith.mulf %398, %397 : vector<8x128xf32>
    %400 = math.tanh %399 : vector<8x128xf32>
    %cst_127 = arith.constant 5.000000e-01 : f32
    %401 = vector.broadcast %cst_127 : f32 to vector<8x128xf32>
    %402 = arith.mulf %401, %400 : vector<8x128xf32>
    %cst_128 = arith.constant 5.000000e-01 : f32
    %403 = vector.broadcast %cst_128 : f32 to vector<8x128xf32>
    %404 = arith.addf %402, %403 : vector<8x128xf32>
    %405 = vector.extract_strided_slice %388 {offsets = [0, 256], sizes = [8, 128], strides = [1, 1]} : vector<8x512xf32> to vector<8x128xf32>
    %406 = math.tanh %405 : vector<8x128xf32>
    %407 = vector.extract_strided_slice %388 {offsets = [0, 384], sizes = [8, 128], strides = [1, 1]} : vector<8x512xf32> to vector<8x128xf32>
    %cst_129 = arith.constant 5.000000e-01 : f32
    %408 = vector.broadcast %cst_129 : f32 to vector<8x128xf32>
    %409 = arith.mulf %408, %407 : vector<8x128xf32>
    %410 = math.tanh %409 : vector<8x128xf32>
    %cst_130 = arith.constant 5.000000e-01 : f32
    %411 = vector.broadcast %cst_130 : f32 to vector<8x128xf32>
    %412 = arith.mulf %411, %410 : vector<8x128xf32>
    %cst_131 = arith.constant 5.000000e-01 : f32
    %413 = vector.broadcast %cst_131 : f32 to vector<8x128xf32>
    %414 = arith.addf %412, %413 : vector<8x128xf32>
    %415 = arith.mulf %404, %349 : vector<8x128xf32>
    %416 = arith.mulf %396, %406 : vector<8x128xf32>
    %417 = arith.addf %415, %416 : vector<8x128xf32>
    %418 = math.tanh %417 : vector<8x128xf32>
    %419 = arith.mulf %414, %418 : vector<8x128xf32>
    %420 = vector.extract_strided_slice %5 {offsets = [48, 0], sizes = [8, 512], strides = [1, 1]} : vector<64x512xf32> to vector<8x512xf32>
    %cst_132 = arith.constant dense<0.000000e+00> : vector<8x512xf32>
    %421 = tpu.matmul %385, %6, %cst_132 {dimension_numbers = #tpu.dot_dimension_numbers<[1], [0], [0], [1], [0, 0, 1, 1], [], []>} : vector<8x128xf32>, vector<128x512xf32>, vector<8x512xf32> -> vector<8x512xf32>
    %422 = arith.addf %420, %421 : vector<8x512xf32>
    %423 = vector.extract_strided_slice %422 {offsets = [0, 0], sizes = [8, 128], strides = [1, 1]} : vector<8x512xf32> to vector<8x128xf32>
    %cst_133 = arith.constant 5.000000e-01 : f32
    %424 = vector.broadcast %cst_133 : f32 to vector<8x128xf32>
    %425 = arith.mulf %424, %423 : vector<8x128xf32>
    %426 = math.tanh %425 : vector<8x128xf32>
    %cst_134 = arith.constant 5.000000e-01 : f32
    %427 = vector.broadcast %cst_134 : f32 to vector<8x128xf32>
    %428 = arith.mulf %427, %426 : vector<8x128xf32>
    %cst_135 = arith.constant 5.000000e-01 : f32
    %429 = vector.broadcast %cst_135 : f32 to vector<8x128xf32>
    %430 = arith.addf %428, %429 : vector<8x128xf32>
    %431 = vector.extract_strided_slice %422 {offsets = [0, 128], sizes = [8, 128], strides = [1, 1]} : vector<8x512xf32> to vector<8x128xf32>
    %cst_136 = arith.constant 5.000000e-01 : f32
    %432 = vector.broadcast %cst_136 : f32 to vector<8x128xf32>
    %433 = arith.mulf %432, %431 : vector<8x128xf32>
    %434 = math.tanh %433 : vector<8x128xf32>
    %cst_137 = arith.constant 5.000000e-01 : f32
    %435 = vector.broadcast %cst_137 : f32 to vector<8x128xf32>
    %436 = arith.mulf %435, %434 : vector<8x128xf32>
    %cst_138 = arith.constant 5.000000e-01 : f32
    %437 = vector.broadcast %cst_138 : f32 to vector<8x128xf32>
    %438 = arith.addf %436, %437 : vector<8x128xf32>
    %439 = vector.extract_strided_slice %422 {offsets = [0, 256], sizes = [8, 128], strides = [1, 1]} : vector<8x512xf32> to vector<8x128xf32>
    %440 = math.tanh %439 : vector<8x128xf32>
    %441 = vector.extract_strided_slice %422 {offsets = [0, 384], sizes = [8, 128], strides = [1, 1]} : vector<8x512xf32> to vector<8x128xf32>
    %cst_139 = arith.constant 5.000000e-01 : f32
    %442 = vector.broadcast %cst_139 : f32 to vector<8x128xf32>
    %443 = arith.mulf %442, %441 : vector<8x128xf32>
    %444 = math.tanh %443 : vector<8x128xf32>
    %cst_140 = arith.constant 5.000000e-01 : f32
    %445 = vector.broadcast %cst_140 : f32 to vector<8x128xf32>
    %446 = arith.mulf %445, %444 : vector<8x128xf32>
    %cst_141 = arith.constant 5.000000e-01 : f32
    %447 = vector.broadcast %cst_141 : f32 to vector<8x128xf32>
    %448 = arith.addf %446, %447 : vector<8x128xf32>
    %449 = arith.mulf %438, %383 : vector<8x128xf32>
    %450 = arith.mulf %430, %440 : vector<8x128xf32>
    %451 = arith.addf %449, %450 : vector<8x128xf32>
    %452 = math.tanh %451 : vector<8x128xf32>
    %453 = arith.mulf %448, %452 : vector<8x128xf32>
    %454 = tpu.concatenate %453, %419 in 1 : vector<8x128xf32>, vector<8x128xf32> -> vector<8x256xf32>
    %cst_142 = arith.constant dense<0.000000e+00> : vector<8x512xf32>
    %455 = tpu.matmul %454, %7, %cst_142 {dimension_numbers = #tpu.dot_dimension_numbers<[1], [0], [0], [1], [0, 0, 1, 1], [], []>} : vector<8x256xf32>, vector<256x512xf32>, vector<8x512xf32> -> vector<8x512xf32>
    %456 = arith.addf %455, %10 : vector<8x512xf32>
    %457 = vector.extract_strided_slice %456 {offsets = [0, 0], sizes = [8, 128], strides = [1, 1]} : vector<8x512xf32> to vector<8x128xf32>
    %cst_143 = arith.constant 5.000000e-01 : f32
    %458 = vector.broadcast %cst_143 : f32 to vector<8x128xf32>
    %459 = arith.mulf %458, %457 : vector<8x128xf32>
    %460 = math.tanh %459 : vector<8x128xf32>
    %cst_144 = arith.constant 5.000000e-01 : f32
    %461 = vector.broadcast %cst_144 : f32 to vector<8x128xf32>
    %462 = arith.mulf %461, %460 : vector<8x128xf32>
    %cst_145 = arith.constant 5.000000e-01 : f32
    %463 = vector.broadcast %cst_145 : f32 to vector<8x128xf32>
    %464 = arith.addf %462, %463 : vector<8x128xf32>
    %465 = vector.extract_strided_slice %456 {offsets = [0, 128], sizes = [8, 128], strides = [1, 1]} : vector<8x512xf32> to vector<8x128xf32>
    %cst_146 = arith.constant 5.000000e-01 : f32
    %466 = vector.broadcast %cst_146 : f32 to vector<8x128xf32>
    %467 = arith.mulf %466, %465 : vector<8x128xf32>
    %468 = math.tanh %467 : vector<8x128xf32>
    %cst_147 = arith.constant 5.000000e-01 : f32
    %469 = vector.broadcast %cst_147 : f32 to vector<8x128xf32>
    %470 = arith.mulf %469, %468 : vector<8x128xf32>
    %cst_148 = arith.constant 5.000000e-01 : f32
    %471 = vector.broadcast %cst_148 : f32 to vector<8x128xf32>
    %472 = arith.addf %470, %471 : vector<8x128xf32>
    %473 = vector.extract_strided_slice %456 {offsets = [0, 256], sizes = [8, 128], strides = [1, 1]} : vector<8x512xf32> to vector<8x128xf32>
    %474 = math.tanh %473 : vector<8x128xf32>
    %475 = vector.extract_strided_slice %456 {offsets = [0, 384], sizes = [8, 128], strides = [1, 1]} : vector<8x512xf32> to vector<8x128xf32>
    %cst_149 = arith.constant 5.000000e-01 : f32
    %476 = vector.broadcast %cst_149 : f32 to vector<8x128xf32>
    %477 = arith.mulf %476, %475 : vector<8x128xf32>
    %478 = math.tanh %477 : vector<8x128xf32>
    %cst_150 = arith.constant 5.000000e-01 : f32
    %479 = vector.broadcast %cst_150 : f32 to vector<8x128xf32>
    %480 = arith.mulf %479, %478 : vector<8x128xf32>
    %cst_151 = arith.constant 5.000000e-01 : f32
    %481 = vector.broadcast %cst_151 : f32 to vector<8x128xf32>
    %482 = arith.addf %480, %481 : vector<8x128xf32>
    %483 = arith.mulf %472, %417 : vector<8x128xf32>
    %484 = arith.mulf %464, %474 : vector<8x128xf32>
    %485 = arith.addf %483, %484 : vector<8x128xf32>
    %486 = math.tanh %485 : vector<8x128xf32>
    %487 = arith.mulf %482, %486 : vector<8x128xf32>
    %488 = vector.extract_strided_slice %5 {offsets = [56, 0], sizes = [8, 512], strides = [1, 1]} : vector<64x512xf32> to vector<8x512xf32>
    %cst_152 = arith.constant dense<0.000000e+00> : vector<8x512xf32>
    %489 = tpu.matmul %453, %6, %cst_152 {dimension_numbers = #tpu.dot_dimension_numbers<[1], [0], [0], [1], [0, 0, 1, 1], [], []>} : vector<8x128xf32>, vector<128x512xf32>, vector<8x512xf32> -> vector<8x512xf32>
    %490 = arith.addf %488, %489 : vector<8x512xf32>
    %491 = vector.extract_strided_slice %490 {offsets = [0, 0], sizes = [8, 128], strides = [1, 1]} : vector<8x512xf32> to vector<8x128xf32>
    %cst_153 = arith.constant 5.000000e-01 : f32
    %492 = vector.broadcast %cst_153 : f32 to vector<8x128xf32>
    %493 = arith.mulf %492, %491 : vector<8x128xf32>
    %494 = math.tanh %493 : vector<8x128xf32>
    %cst_154 = arith.constant 5.000000e-01 : f32
    %495 = vector.broadcast %cst_154 : f32 to vector<8x128xf32>
    %496 = arith.mulf %495, %494 : vector<8x128xf32>
    %cst_155 = arith.constant 5.000000e-01 : f32
    %497 = vector.broadcast %cst_155 : f32 to vector<8x128xf32>
    %498 = arith.addf %496, %497 : vector<8x128xf32>
    %499 = vector.extract_strided_slice %490 {offsets = [0, 128], sizes = [8, 128], strides = [1, 1]} : vector<8x512xf32> to vector<8x128xf32>
    %cst_156 = arith.constant 5.000000e-01 : f32
    %500 = vector.broadcast %cst_156 : f32 to vector<8x128xf32>
    %501 = arith.mulf %500, %499 : vector<8x128xf32>
    %502 = math.tanh %501 : vector<8x128xf32>
    %cst_157 = arith.constant 5.000000e-01 : f32
    %503 = vector.broadcast %cst_157 : f32 to vector<8x128xf32>
    %504 = arith.mulf %503, %502 : vector<8x128xf32>
    %cst_158 = arith.constant 5.000000e-01 : f32
    %505 = vector.broadcast %cst_158 : f32 to vector<8x128xf32>
    %506 = arith.addf %504, %505 : vector<8x128xf32>
    %507 = vector.extract_strided_slice %490 {offsets = [0, 256], sizes = [8, 128], strides = [1, 1]} : vector<8x512xf32> to vector<8x128xf32>
    %508 = math.tanh %507 : vector<8x128xf32>
    %509 = vector.extract_strided_slice %490 {offsets = [0, 384], sizes = [8, 128], strides = [1, 1]} : vector<8x512xf32> to vector<8x128xf32>
    %cst_159 = arith.constant 5.000000e-01 : f32
    %510 = vector.broadcast %cst_159 : f32 to vector<8x128xf32>
    %511 = arith.mulf %510, %509 : vector<8x128xf32>
    %512 = math.tanh %511 : vector<8x128xf32>
    %cst_160 = arith.constant 5.000000e-01 : f32
    %513 = vector.broadcast %cst_160 : f32 to vector<8x128xf32>
    %514 = arith.mulf %513, %512 : vector<8x128xf32>
    %cst_161 = arith.constant 5.000000e-01 : f32
    %515 = vector.broadcast %cst_161 : f32 to vector<8x128xf32>
    %516 = arith.addf %514, %515 : vector<8x128xf32>
    %517 = arith.mulf %506, %451 : vector<8x128xf32>
    %518 = arith.mulf %498, %508 : vector<8x128xf32>
    %519 = arith.addf %517, %518 : vector<8x128xf32>
    %520 = math.tanh %519 : vector<8x128xf32>
    %521 = arith.mulf %516, %520 : vector<8x128xf32>
    %522 = tpu.concatenate %521, %487 in 1 : vector<8x128xf32>, vector<8x128xf32> -> vector<8x256xf32>
    %cst_162 = arith.constant dense<0.000000e+00> : vector<8x512xf32>
    %523 = tpu.matmul %522, %7, %cst_162 {dimension_numbers = #tpu.dot_dimension_numbers<[1], [0], [0], [1], [0, 0, 1, 1], [], []>} : vector<8x256xf32>, vector<256x512xf32>, vector<8x512xf32> -> vector<8x512xf32>
    %524 = arith.addf %523, %10 : vector<8x512xf32>
    %525 = vector.extract_strided_slice %524 {offsets = [0, 0], sizes = [8, 128], strides = [1, 1]} : vector<8x512xf32> to vector<8x128xf32>
    %cst_163 = arith.constant 5.000000e-01 : f32
    %526 = vector.broadcast %cst_163 : f32 to vector<8x128xf32>
    %527 = arith.mulf %526, %525 : vector<8x128xf32>
    %528 = math.tanh %527 : vector<8x128xf32>
    %cst_164 = arith.constant 5.000000e-01 : f32
    %529 = vector.broadcast %cst_164 : f32 to vector<8x128xf32>
    %530 = arith.mulf %529, %528 : vector<8x128xf32>
    %cst_165 = arith.constant 5.000000e-01 : f32
    %531 = vector.broadcast %cst_165 : f32 to vector<8x128xf32>
    %532 = arith.addf %530, %531 : vector<8x128xf32>
    %533 = vector.extract_strided_slice %524 {offsets = [0, 128], sizes = [8, 128], strides = [1, 1]} : vector<8x512xf32> to vector<8x128xf32>
    %cst_166 = arith.constant 5.000000e-01 : f32
    %534 = vector.broadcast %cst_166 : f32 to vector<8x128xf32>
    %535 = arith.mulf %534, %533 : vector<8x128xf32>
    %536 = math.tanh %535 : vector<8x128xf32>
    %cst_167 = arith.constant 5.000000e-01 : f32
    %537 = vector.broadcast %cst_167 : f32 to vector<8x128xf32>
    %538 = arith.mulf %537, %536 : vector<8x128xf32>
    %cst_168 = arith.constant 5.000000e-01 : f32
    %539 = vector.broadcast %cst_168 : f32 to vector<8x128xf32>
    %540 = arith.addf %538, %539 : vector<8x128xf32>
    %541 = vector.extract_strided_slice %524 {offsets = [0, 256], sizes = [8, 128], strides = [1, 1]} : vector<8x512xf32> to vector<8x128xf32>
    %542 = math.tanh %541 : vector<8x128xf32>
    %543 = vector.extract_strided_slice %524 {offsets = [0, 384], sizes = [8, 128], strides = [1, 1]} : vector<8x512xf32> to vector<8x128xf32>
    %cst_169 = arith.constant 5.000000e-01 : f32
    %544 = vector.broadcast %cst_169 : f32 to vector<8x128xf32>
    %545 = arith.mulf %544, %543 : vector<8x128xf32>
    %546 = math.tanh %545 : vector<8x128xf32>
    %cst_170 = arith.constant 5.000000e-01 : f32
    %547 = vector.broadcast %cst_170 : f32 to vector<8x128xf32>
    %548 = arith.mulf %547, %546 : vector<8x128xf32>
    %cst_171 = arith.constant 5.000000e-01 : f32
    %549 = vector.broadcast %cst_171 : f32 to vector<8x128xf32>
    %550 = arith.addf %548, %549 : vector<8x128xf32>
    %551 = arith.mulf %540, %485 : vector<8x128xf32>
    %552 = arith.mulf %532, %542 : vector<8x128xf32>
    %553 = arith.addf %551, %552 : vector<8x128xf32>
    %554 = math.tanh %553 : vector<8x128xf32>
    %555 = arith.mulf %550, %554 : vector<8x128xf32>
    %c0_172 = arith.constant 0 : index
    %c0_173 = arith.constant 0 : index
    %556 = vector.load %arg6[%c0_172, %c0_173] : memref<128x128xf32, #tpu.memory_space<vmem>>, vector<128x128xf32>
    %cst_174 = arith.constant dense<0.000000e+00> : vector<8x128xf32>
    %557 = tpu.matmul %555, %556, %cst_174 {dimension_numbers = #tpu.dot_dimension_numbers<[1], [0], [0], [1], [0, 0, 1, 1], [], []>} : vector<8x128xf32>, vector<128x128xf32>, vector<8x128xf32> -> vector<8x128xf32>
    %c0_175 = arith.constant 0 : index
    %c0_176 = arith.constant 0 : index
    %558 = vector.load %arg7[%c0_175, %c0_176] : memref<1x128xf32, #tpu.memory_space<vmem>>, vector<1x128xf32>
    %559 = vector.broadcast %558 : vector<1x128xf32> to vector<8x128xf32>
    %560 = arith.addf %557, %559 : vector<8x128xf32>
    %c0_177 = arith.constant 0 : index
    %c0_178 = arith.constant 0 : index
    %561 = vector.load %arg8[%c0_177, %c0_178] : memref<8x128xf32, #tpu.memory_space<vmem>>, vector<8x128xf32>
    tpu.vector_store %arg8[%c0_177, %c0_178], %560 {strides = array<i32>} : memref<8x128xf32, #tpu.memory_space<vmem>>, vector<8x128xf32>,
    return
  }
}

</mosaic_0001>

<llo_original>
// kernel: stock_lstm_forward.1
$region0: #{stock_lstm_forward.1}
  #allocation0 [shape = 'u32[]', space=smem, size = 0x4, offset = 0x4, fixed_abs, tag = 'smem constant byte address 0x4 - core index']
  #allocation1 [shape = 'u32[72,128]{1,0:T(1,128)}', space=vmem, size = 0x9000, scoped, tag = 'internal scratch']
  %s0 = inlined_call_operand.vmem [shape: f32[64,1], index: 0, kind: input, shape index: {}]
  %s1 = inlined_call_operand.vmem [shape: f32[1,512], index: 1, kind: input, shape index: {}]
  %s2 = inlined_call_operand.hbm [shape: f32[128,512], index: 2, kind: input, shape index: {}]
  %s3 = inlined_call_operand.vmem [shape: f32[1,512], index: 3, kind: input, shape index: {}]
  %s4 = inlined_call_operand.hbm [shape: f32[256,512], index: 4, kind: input, shape index: {}]
  %s5 = inlined_call_operand.vmem [shape: f32[1,512], index: 5, kind: input, shape index: {}]
  %s6 = inlined_call_operand.hbm [shape: f32[128,128], index: 6, kind: input, shape index: {}]
  %s7 = inlined_call_operand.vmem [shape: f32[1,128], index: 7, kind: input, shape index: {}]
  %s8 = inlined_call_operand.vmem [shape: f32[8,128], index: 8, kind: output, shape index: {}]
  %s9 = sld [smem:[#allocation0]]
  $region54: #{stock_lstm_forward.1} parent=0
    _
  %s11 = ssub.s32 1, %s9
  %s12 = scalar_select 0, %s11, %s9
  $region1: #{stock_lstm_forward.1} parent=0
    #allocation2 [shape = 'u8[262144]{0}', space=vmem, size = 0x40000, scoped, tag = 'input window, operand 2, single buffered']
    #allocation3 [shape = 's32[1]{0}', space=sflag, size = 0x4, scoped, tag = 'scoped memory for stock_lstm_forward.1']
    #allocation4 [shape = 'u8[524288]{0}', space=vmem, size = 0x80000, scoped, tag = 'input window, operand 4, single buffered']
    #allocation5 [shape = 's32[1]{0}', space=sflag, size = 0x4, scoped, tag = 'scoped memory for stock_lstm_forward.1']
    #allocation6 [shape = 'u8[65536]{0}', space=vmem, size = 0x10000, scoped, tag = 'input window, operand 6, single buffered']
    %13 = vsyncpa [#allocation3], 0
    %14 = vsyncpa [#allocation5], 0
    // Predicated region
    $region2: #{stock_lstm_forward.1} parent=1 // pred_check
      _
    $region3: #{stock_lstm_forward.1} parent=1 // pred_check_branch
      %16 = sbr.rel (0) target = $region5
    $region4: #{stock_lstm_forward.1} parent=1 // pred_region
      _
    $region5: #{stock_lstm_forward.1} parent=1 // pred_fallthru
      _
    // Predicated region
    $region6: #{stock_lstm_forward.1} parent=1 // pred_check
      _
    $region7: #{stock_lstm_forward.1} parent=1 // pred_check_branch
      %18 = sbr.rel (0) target = $region9
    $region8: #{stock_lstm_forward.1} parent=1 // pred_region
      _
    $region9: #{stock_lstm_forward.1} parent=1 // pred_fallthru
      _
    // Predicated region
    $region10: #{stock_lstm_forward.1} parent=1 // pred_check
      _
    $region11: #{stock_lstm_forward.1} parent=1 // pred_check_branch
      %20 = sbr.rel (0) target = $region13
    $region12: #{stock_lstm_forward.1} parent=1 // pred_region
      %22 = vsyncadd [#allocation3], 0
      %s23 = sshll.u32 %s2, 4
      %s24 = int_to_ptr.hbm [resolvable:$true] %s23
      %s25 = sshll.u32 [#allocation2], 4
      %s26 = int_to_ptr.vmem [resolvable:$true] %s25
      %31 = dma.hbm_to_vmem [thread:$0]  %s24, 8192, %s26, [#allocation3], 512, 512, 32
    $region13: #{stock_lstm_forward.1} parent=1 // pred_fallthru
      _
    // Predicated region
    $region14: #{stock_lstm_forward.1} parent=1 // pred_check
      _
    $region15: #{stock_lstm_forward.1} parent=1 // pred_check_branch
      %33 = sbr.rel (0) target = $region17
    $region16: #{stock_lstm_forward.1} parent=1 // pred_region
      _
    $region17: #{stock_lstm_forward.1} parent=1 // pred_fallthru
      _
    // Predicated region
    $region18: #{stock_lstm_forward.1} parent=1 // pred_check
      _
    $region19: #{stock_lstm_forward.1} parent=1 // pred_check_branch
      %35 = sbr.rel (0) target = $region21
    $region20: #{stock_lstm_forward.1} parent=1 // pred_region
      %37 = vsyncadd [#allocation5], 0
      %s38 = sshll.u32 %s4, 4
      %s39 = int_to_ptr.hbm [resolvable:$true] %s38
      %s40 = sshll.u32 [#allocation4], 4
      %s41 = int_to_ptr.vmem [resolvable:$true] %s40
      %46 = dma.hbm_to_vmem [thread:$0]  %s39, 16384, %s41, [#allocation5], 512, 512, 32
    $region21: #{stock_lstm_forward.1} parent=1 // pred_fallthru
      _
    // Predicated region
    $region22: #{stock_lstm_forward.1} parent=1 // pred_check
      _
    $region23: #{stock_lstm_forward.1} parent=1 // pred_check_branch
      %48 = sbr.rel (0) target = $region25
    $region24: #{stock_lstm_forward.1} parent=1 // pred_region
      _
    $region25: #{stock_lstm_forward.1} parent=1 // pred_fallthru
      _
    // Predicated region
    $region26: #{stock_lstm_forward.1} parent=1 // pred_check
      _
    $region27: #{stock_lstm_forward.1} parent=1 // pred_check_branch
      %50 = sbr.rel (0) target = $region29
    $region28: #{stock_lstm_forward.1} parent=1 // pred_region
      %52 = vsyncadd [#allocation5], 0
      %s53 = sshll.u32 %s6, 4
      %s54 = int_to_ptr.hbm [resolvable:$true] %s53
      %s55 = sshll.u32 [#allocation6], 4
      %s56 = int_to_ptr.vmem [resolvable:$true] %s55
      %61 = dma.hbm_to_vmem [thread:$0]  %s54, 2048, %s56, [#allocation5], 128, 128, 8
    $region29: #{stock_lstm_forward.1} parent=1 // pred_fallthru
      _
    // Predicated region
    $region30: #{stock_lstm_forward.1} parent=1 // pred_check
      _
    $region31: #{stock_lstm_forward.1} parent=1 // pred_check_branch
      %63 = sbr.rel (0) target = $region33
    $region32: #{stock_lstm_forward.1} parent=1 // pred_region
      _
    $region33: #{stock_lstm_forward.1} parent=1 // pred_fallthru
      _
    // Predicated region
    $region34: #{stock_lstm_forward.1} parent=1 // pred_check
      _
    $region35: #{stock_lstm_forward.1} parent=1 // pred_check_branch
      %65 = sbr.rel (0) target = $region37
    $region36: #{stock_lstm_forward.1} parent=1 // pred_region
      %67 = dma.done [#allocation3], 8192
    $region37: #{stock_lstm_forward.1} parent=1 // pred_fallthru
      _
    // Predicated region
    $region38: #{stock_lstm_forward.1} parent=1 // pred_check
      _
    $region39: #{stock_lstm_forward.1} parent=1 // pred_check_branch
      %69 = sbr.rel (0) target = $region41
    $region40: #{stock_lstm_forward.1} parent=1 // pred_region
      %71 = dma.done [#allocation5], 16384
    $region41: #{stock_lstm_forward.1} parent=1 // pred_fallthru
      _
    // Predicated region
    $region42: #{stock_lstm_forward.1} parent=1 // pred_check
      _
    $region43: #{stock_lstm_forward.1} parent=1 // pred_check_branch
      %73 = sbr.rel (0) target = $region45
    $region44: #{stock_lstm_forward.1} parent=1 // pred_region
      %75 = dma.done [#allocation5], 2048
    $region45: #{stock_lstm_forward.1} parent=1 // pred_fallthru
      _
    %v76 = vld [vmem:[%s0] sm:$0xff]
    %v77 = vld [vmem:[%s0 + $0x8] sm:$0xff]
    %v78 = vld [vmem:[%s0 + $0x10] sm:$0xff]
    %v79 = vld [vmem:[%s0 + $0x18] sm:$0xff]
    %v80 = vld [vmem:[%s0 + $0x20] sm:$0xff]
    %v81 = vld [vmem:[%s0 + $0x28] sm:$0xff]
    %v82 = vld [vmem:[%s0 + $0x30] sm:$0xff]
    %v83 = vld [vmem:[%s0 + $0x38] sm:$0xff]
    %v84 = vld [vmem:[%s1] sm:$0xf]
    %v85 = vld [vmem:[%s3] sm:$0xf]
    %v87 = vperm.slane %v85, 0
    %v88 = vperm.slane %v85, 1
    %v89 = vperm.slane %v85, 2
    %v90 = vperm.slane %v85, 3
    %v96 = vperm.slane %v84, 0
    %v97 = vperm.slane %v84, 1
    %v98 = vperm.slane %v84, 2
    %v99 = vperm.slane %v84, 3
    %vm100 = vcmask 7168
    %v102 = vsel %vm100, %v76, 0
    %v105 = vsel %vm100, %v77, 0
    %v108 = vsel %vm100, %v78, 0
    %v111 = vsel %vm100, %v79, 0
    %v114 = vsel %vm100, %v80, 0
    %v117 = vsel %vm100, %v81, 0
    %v120 = vsel %vm100, %v82, 0
    %v123 = vsel %vm100, %v83, 0
    %vm125 = vcmask 1040384
    %v126 = vsel %vm125, %v96, 0
    %v128 = vsel %vm125, %v97, 0
    %v130 = vsel %vm125, %v98, 0
    %v132 = vsel %vm125, %v99, 0
    %134 = vmatpush.msra.mxu0 0.0
    %135 = vmatpush.msra.mxu0 0.0
    %136 = vmatpush.msra.mxu0 0.0
    %137 = vmatpush.msra.mxu0 0.0
    %138 = vmatpush.msra.mxu0 0.0
    %139 = vmatpush.msra.mxu0 0.0
    %140 = vmatpush.msra.mxu0 0.0
    %141 = vmatpush.msra.mxu0 0.0
    %142 = vmatpush.msra.mxu0 0.0
    %143 = vmatpush.msra.mxu0 0.0
    %144 = vmatpush.msra.mxu0 0.0
    %145 = vmatpush.msra.mxu0 0.0
    %146 = vmatpush.msra.mxu0 0.0
    %147 = vmatpush.msra.mxu0 0.0
    %148 = vmatpush.msra.mxu0 0.0
    %149 = vmatpush.msra.mxu0 %v126
    %150 = vmatmul.f32.gmra.mxu0 %v102
    %v151 = vpop.f32.mrf.mxu0
    %v152 = vadd.f32 %v87, %v151
    %153 = vmatmul.f32.gmra.mxu0 %v105
    %v154 = vpop.f32.mrf.mxu0
    %v155 = vadd.f32 %v87, %v154
    %156 = vmatmul.f32.gmra.mxu0 %v108
    %v157 = vpop.f32.mrf.mxu0
    %v158 = vadd.f32 %v87, %v157
    %159 = vmatmul.f32.gmra.mxu0 %v111
    %v160 = vpop.f32.mrf.mxu0
    %v161 = vadd.f32 %v87, %v160
    %162 = vmatmul.f32.gmra.mxu0 %v114
    %v163 = vpop.f32.mrf.mxu0
    %v164 = vadd.f32 %v87, %v163
    %165 = vmatmul.f32.gmra.mxu0 %v117
    %v166 = vpop.f32.mrf.mxu0
    %v167 = vadd.f32 %v87, %v166
    %168 = vmatmul.f32.gmra.mxu0 %v120
    %v169 = vpop.f32.mrf.mxu0
    %v170 = vadd.f32 %v87, %v169
    %171 = vmatmul.f32.gmra.mxu0 %v123
    %v172 = vpop.f32.mrf.mxu0
    %v173 = vadd.f32 %v87, %v172
    %174 = vdwg.mxu0
    %175 = vmatpush.msra.mxu0 0.0
    %176 = vmatpush.msra.mxu0 0.0
    %177 = vmatpush.msra.mxu0 0.0
    %178 = vmatpush.msra.mxu0 0.0
    %179 = vmatpush.msra.mxu0 0.0
    %180 = vmatpush.msra.mxu0 0.0
    %181 = vmatpush.msra.mxu0 0.0
    %182 = vmatpush.msra.mxu0 0.0
    %183 = vmatpush.msra.mxu0 0.0
    %184 = vmatpush.msra.mxu0 0.0
    %185 = vmatpush.msra.mxu0 0.0
    %186 = vmatpush.msra.mxu0 0.0
    %187 = vmatpush.msra.mxu0 0.0
    %188 = vmatpush.msra.mxu0 0.0
    %189 = vmatpush.msra.mxu0 0.0
    %190 = vmatpush.msra.mxu0 %v128
    %191 = vmatmul.f32.gmra.mxu0 %v102
    %v192 = vpop.f32.mrf.mxu0
    %v193 = vadd.f32 %v88, %v192
    %194 = vmatmul.f32.gmra.mxu0 %v105
    %v195 = vpop.f32.mrf.mxu0
    %v196 = vadd.f32 %v88, %v195
    %197 = vmatmul.f32.gmra.mxu0 %v108
    %v198 = vpop.f32.mrf.mxu0
    %v199 = vadd.f32 %v88, %v198
    %200 = vmatmul.f32.gmra.mxu0 %v111
    %v201 = vpop.f32.mrf.mxu0
    %v202 = vadd.f32 %v88, %v201
    %203 = vmatmul.f32.gmra.mxu0 %v114
    %v204 = vpop.f32.mrf.mxu0
    %v205 = vadd.f32 %v88, %v204
    %206 = vmatmul.f32.gmra.mxu0 %v117
    %v207 = vpop.f32.mrf.mxu0
    %v208 = vadd.f32 %v88, %v207
    %209 = vmatmul.f32.gmra.mxu0 %v120
    %v210 = vpop.f32.mrf.mxu0
    %v211 = vadd.f32 %v88, %v210
    %212 = vmatmul.f32.gmra.mxu0 %v123
    %v213 = vpop.f32.mrf.mxu0
    %v214 = vadd.f32 %v88, %v213
    %215 = vdwg.mxu0
    %216 = vmatpush.msra.mxu0 0.0
    %217 = vmatpush.msra.mxu0 0.0
    %218 = vmatpush.msra.mxu0 0.0
    %219 = vmatpush.msra.mxu0 0.0
    %220 = vmatpush.msra.mxu0 0.0
    %221 = vmatpush.msra.mxu0 0.0
    %222 = vmatpush.msra.mxu0 0.0
    %223 = vmatpush.msra.mxu0 0.0
    %224 = vmatpush.msra.mxu0 0.0
    %225 = vmatpush.msra.mxu0 0.0
    %226 = vmatpush.msra.mxu0 0.0
    %227 = vmatpush.msra.mxu0 0.0
    %228 = vmatpush.msra.mxu0 0.0
    %229 = vmatpush.msra.mxu0 0.0
    %230 = vmatpush.msra.mxu0 0.0
    %231 = vmatpush.msra.mxu0 %v130
    %232 = vmatmul.f32.gmra.mxu0 %v102
    %v233 = vpop.f32.mrf.mxu0
    %v234 = vadd.f32 %v89, %v233
    %235 = vmatmul.f32.gmra.mxu0 %v105
    %v236 = vpop.f32.mrf.mxu0
    %v237 = vadd.f32 %v89, %v236
    %238 = vmatmul.f32.gmra.mxu0 %v108
    %v239 = vpop.f32.mrf.mxu0
    %v240 = vadd.f32 %v89, %v239
    %241 = vmatmul.f32.gmra.mxu0 %v111
    %v242 = vpop.f32.mrf.mxu0
    %v243 = vadd.f32 %v89, %v242
    %244 = vmatmul.f32.gmra.mxu0 %v114
    %v245 = vpop.f32.mrf.mxu0
    %v246 = vadd.f32 %v89, %v245
    %247 = vmatmul.f32.gmra.mxu0 %v117
    %v248 = vpop.f32.mrf.mxu0
    %v249 = vadd.f32 %v89, %v248
    %250 = vmatmul.f32.gmra.mxu0 %v120
    %v251 = vpop.f32.mrf.mxu0
    %v252 = vadd.f32 %v89, %v251
    %253 = vmatmul.f32.gmra.mxu0 %v123
    %v254 = vpop.f32.mrf.mxu0
    %v255 = vadd.f32 %v89, %v254
    %256 = vdwg.mxu0
    %257 = vmatpush.msra.mxu0 0.0
    %258 = vmatpush.msra.mxu0 0.0
    %259 = vmatpush.msra.mxu0 0.0
    %260 = vmatpush.msra.mxu0 0.0
    %261 = vmatpush.msra.mxu0 0.0
    %262 = vmatpush.msra.mxu0 0.0
    %263 = vmatpush.msra.mxu0 0.0
    %264 = vmatpush.msra.mxu0 0.0
    %265 = vmatpush.msra.mxu0 0.0
    %266 = vmatpush.msra.mxu0 0.0
    %267 = vmatpush.msra.mxu0 0.0
    %268 = vmatpush.msra.mxu0 0.0
    %269 = vmatpush.msra.mxu0 0.0
    %270 = vmatpush.msra.mxu0 0.0
    %271 = vmatpush.msra.mxu0 0.0
    %272 = vmatpush.msra.mxu0 %v132
    %273 = vmatmul.f32.gmra.mxu0 %v102
    %v274 = vpop.f32.mrf.mxu0
    %v275 = vadd.f32 %v90, %v274
    %276 = vmatmul.f32.gmra.mxu0 %v105
    %v277 = vpop.f32.mrf.mxu0
    %v278 = vadd.f32 %v90, %v277
    %279 = vmatmul.f32.gmra.mxu0 %v108
    %v280 = vpop.f32.mrf.mxu0
    %v281 = vadd.f32 %v90, %v280
    %282 = vmatmul.f32.gmra.mxu0 %v111
    %v283 = vpop.f32.mrf.mxu0
    %v284 = vadd.f32 %v90, %v283
    %285 = vmatmul.f32.gmra.mxu0 %v114
    %v286 = vpop.f32.mrf.mxu0
    %v287 = vadd.f32 %v90, %v286
    %288 = vmatmul.f32.gmra.mxu0 %v117
    %v289 = vpop.f32.mrf.mxu0
    %v290 = vadd.f32 %v90, %v289
    %291 = vmatmul.f32.gmra.mxu0 %v120
    %v292 = vpop.f32.mrf.mxu0
    %v293 = vadd.f32 %v90, %v292
    %294 = vmatmul.f32.gmra.mxu0 %v123
    %v295 = vpop.f32.mrf.mxu0
    %v296 = vadd.f32 %v90, %v295
    %297 = vdwg.mxu0
    %v298 = vld [vmem:[#allocation2] sm:$0xff]
    %v299 = vld [vmem:[#allocation2 + $0x8] sm:$0xff]
    %v300 = vld [vmem:[#allocation2 + $0x10] sm:$0xff]
    %v301 = vld [vmem:[#allocation2 + $0x18] sm:$0xff]
    %v302 = vld [vmem:[#allocation2 + $0x20] sm:$0xff]
    %v303 = vld [vmem:[#allocation2 + $0x28] sm:$0xff]
    %v304 = vld [vmem:[#allocation2 + $0x30] sm:$0xff]
    %v305 = vld [vmem:[#allocation2 + $0x38] sm:$0xff]
    %v306 = vld [vmem:[#allocation2 + $0x40] sm:$0xff]
    %v307 = vld [vmem:[#allocation2 + $0x48] sm:$0xff]
    %v308 = vld [vmem:[#allocation2 + $0x50] sm:$0xff]
    %v309 = vld [vmem:[#allocation2 + $0x58] sm:$0xff]
    %v310 = vld [vmem:[#allocation2 + $0x60] sm:$0xff]
    %v311 = vld [vmem:[#allocation2 + $0x68] sm:$0xff]
    %v312 = vld [vmem:[#allocation2 + $0x70] sm:$0xff]
    %v313 = vld [vmem:[#allocation2 + $0x78] sm:$0xff]
    %v314 = vld [vmem:[#allocation2 + $0x80] sm:$0xff]
    %v315 = vld [vmem:[#allocation2 + $0x88] sm:$0xff]
    %v316 = vld [vmem:[#allocation2 + $0x90] sm:$0xff]
    %v317 = vld [vmem:[#allocation2 + $0x98] sm:$0xff]
    %v318 = vld [vmem:[#allocation2 + $0xa0] sm:$0xff]
    %v319 = vld [vmem:[#allocation2 + $0xa8] sm:$0xff]
    %v320 = vld [vmem:[#allocation2 + $0xb0] sm:$0xff]
    %v321 = vld [vmem:[#allocation2 + $0xb8] sm:$0xff]
    %v322 = vld [vmem:[#allocation2 + $0xc0] sm:$0xff]
    %v323 = vld [vmem:[#allocation2 + $0xc8] sm:$0xff]
    %v324 = vld [vmem:[#allocation2 + $0xd0] sm:$0xff]
    %v325 = vld [vmem:[#allocation2 + $0xd8] sm:$0xff]
    %v326 = vld [vmem:[#allocation2 + $0xe0] sm:$0xff]
    %v327 = vld [vmem:[#allocation2 + $0xe8] sm:$0xff]
    %v328 = vld [vmem:[#allocation2 + $0xf0] sm:$0xff]
    %v329 = vld [vmem:[#allocation2 + $0xf8] sm:$0xff]
    %v330 = vld [vmem:[#allocation2 + $0x100] sm:$0xff]
    %v331 = vld [vmem:[#allocation2 + $0x108] sm:$0xff]
    %v332 = vld [vmem:[#allocation2 + $0x110] sm:$0xff]
    %v333 = vld [vmem:[#allocation2 + $0x118] sm:$0xff]
    %v334 = vld [vmem:[#allocation2 + $0x120] sm:$0xff]
    %v335 = vld [vmem:[#allocation2 + $0x128] sm:$0xff]
    %v336 = vld [vmem:[#allocation2 + $0x130] sm:$0xff]
    %v337 = vld [vmem:[#allocation2 + $0x138] sm:$0xff]
    %v338 = vld [vmem:[#allocation2 + $0x140] sm:$0xff]
    %v339 = vld [vmem:[#allocation2 + $0x148] sm:$0xff]
    %v340 = vld [vmem:[#allocation2 + $0x150] sm:$0xff]
    %v341 = vld [vmem:[#allocation2 + $0x158] sm:$0xff]
    %v342 = vld [vmem:[#allocation2 + $0x160] sm:$0xff]
    %v343 = vld [vmem:[#allocation2 + $0x168] sm:$0xff]
    %v344 = vld [vmem:[#allocation2 + $0x170] sm:$0xff]
    %v345 = vld [vmem:[#allocation2 + $0x178] sm:$0xff]
    %v346 = vld [vmem:[#allocation2 + $0x180] sm:$0xff]
    %v347 = vld [vmem:[#allocation2 + $0x188] sm:$0xff]
    %v348 = vld [vmem:[#allocation2 + $0x190] sm:$0xff]
    %v349 = vld [vmem:[#allocation2 + $0x198] sm:$0xff]
    %v350 = vld [vmem:[#allocation2 + $0x1a0] sm:$0xff]
    %v351 = vld [vmem:[#allocation2 + $0x1a8] sm:$0xff]
    %v352 = vld [vmem:[#allocation2 + $0x1b0] sm:$0xff]
    %v353 = vld [vmem:[#allocation2 + $0x1b8] sm:$0xff]
    %v354 = vld [vmem:[#allocation2 + $0x1c0] sm:$0xff]
    %v355 = vld [vmem:[#allocation2 + $0x1c8] sm:$0xff]
    %v356 = vld [vmem:[#allocation2 + $0x1d0] sm:$0xff]
    %v357 = vld [vmem:[#allocation2 + $0x1d8] sm:$0xff]
    %v358 = vld [vmem:[#allocation2 + $0x1e0] sm:$0xff]
    %v359 = vld [vmem:[#allocation2 + $0x1e8] sm:$0xff]
    %v360 = vld [vmem:[#allocation2 + $0x1f0] sm:$0xff]
    %v361 = vld [vmem:[#allocation2 + $0x1f8] sm:$0xff]
    %v362 = vld [vmem:[#allocation4] sm:$0xff]
    %v363 = vld [vmem:[#allocation4 + $0x8] sm:$0xff]
    %v364 = vld [vmem:[#allocation4 + $0x10] sm:$0xff]
    %v365 = vld [vmem:[#allocation4 + $0x18] sm:$0xff]
    %v366 = vld [vmem:[#allocation4 + $0x20] sm:$0xff]
    %v367 = vld [vmem:[#allocation4 + $0x28] sm:$0xff]
    %v368 = vld [vmem:[#allocation4 + $0x30] sm:$0xff]
    %v369 = vld [vmem:[#allocation4 + $0x38] sm:$0xff]
    %v370 = vld [vmem:[#allocation4 + $0x40] sm:$0xff]
    %v371 = vld [vmem:[#allocation4 + $0x48] sm:$0xff]
    %v372 = vld [vmem:[#allocation4 + $0x50] sm:$0xff]
    %v373 = vld [vmem:[#allocation4 + $0x58] sm:$0xff]
    %v374 = vld [vmem:[#allocation4 + $0x60] sm:$0xff]
    %v375 = vld [vmem:[#allocation4 + $0x68] sm:$0xff]
    %v376 = vld [vmem:[#allocation4 + $0x70] sm:$0xff]
    %v377 = vld [vmem:[#allocation4 + $0x78] sm:$0xff]
    %v378 = vld [vmem:[#allocation4 + $0x80] sm:$0xff]
    %v379 = vld [vmem:[#allocation4 + $0x88] sm:$0xff]
    %v380 = vld [vmem:[#allocation4 + $0x90] sm:$0xff]
    %v381 = vld [vmem:[#allocation4 + $0x98] sm:$0xff]
    %v382 = vld [vmem:[#allocation4 + $0xa0] sm:$0xff]
    %v383 = vld [vmem:[#allocation4 + $0xa8] sm:$0xff]
    %v384 = vld [vmem:[#allocation4 + $0xb0] sm:$0xff]
    %v385 = vld [vmem:[#allocation4 + $0xb8] sm:$0xff]
    %v386 = vld [vmem:[#allocation4 + $0xc0] sm:$0xff]
    %v387 = vld [vmem:[#allocation4 + $0xc8] sm:$0xff]
    %v388 = vld [vmem:[#allocation4 + $0xd0] sm:$0xff]
    %v389 = vld [vmem:[#allocation4 + $0xd8] sm:$0xff]
    %v390 = vld [vmem:[#allocation4 + $0xe0] sm:$0xff]
    %v391 = vld [vmem:[#allocation4 + $0xe8] sm:$0xff]
    %v392 = vld [vmem:[#allocation4 + $0xf0] sm:$0xff]
    %v393 = vld [vmem:[#allocation4 + $0xf8] sm:$0xff]
    %v394 = vld [vmem:[#allocation4 + $0x100] sm:$0xff]
    %v395 = vld [vmem:[#allocation4 + $0x108] sm:$0xff]
    %v396 = vld [vmem:[#allocation4 + $0x110] sm:$0xff]
    %v397 = vld [vmem:[#allocation4 + $0x118] sm:$0xff]
    %v398 = vld [vmem:[#allocation4 + $0x120] sm:$0xff]
    %v399 = vld [vmem:[#allocation4 + $0x128] sm:$0xff]
    %v400 = vld [vmem:[#allocation4 + $0x130] sm:$0xff]
    %v401 = vld [vmem:[#allocation4 + $0x138] sm:$0xff]
    %v402 = vld [vmem:[#allocation4 + $0x140] sm:$0xff]
    %v403 = vld [vmem:[#allocation4 + $0x148] sm:$0xff]
    %v404 = vld [vmem:[#allocation4 + $0x150] sm:$0xff]
    %v405 = vld [vmem:[#allocation4 + $0x158] sm:$0xff]
    %v406 = vld [vmem:[#allocation4 + $0x160] sm:$0xff]
    %v407 = vld [vmem:[#allocation4 + $0x168] sm:$0xff]
    %v408 = vld [vmem:[#allocation4 + $0x170] sm:$0xff]
    %v409 = vld [vmem:[#allocation4 + $0x178] sm:$0xff]
    %v410 = vld [vmem:[#allocation4 + $0x180] sm:$0xff]
    %v411 = vld [vmem:[#allocation4 + $0x188] sm:$0xff]
    %v412 = vld [vmem:[#allocation4 + $0x190] sm:$0xff]
    %v413 = vld [vmem:[#allocation4 + $0x198] sm:$0xff]
    %v414 = vld [vmem:[#allocation4 + $0x1a0] sm:$0xff]
    %v415 = vld [vmem:[#allocation4 + $0x1a8] sm:$0xff]
    %v416 = vld [vmem:[#allocation4 + $0x1b0] sm:$0xff]
    %v417 = vld [vmem:[#allocation4 + $0x1b8] sm:$0xff]
    %v418 = vld [vmem:[#allocation4 + $0x1c0] sm:$0xff]
    %v419 = vld [vmem:[#allocation4 + $0x1c8] sm:$0xff]
    %v420 = vld [vmem:[#allocation4 + $0x1d0] sm:$0xff]
    %v421 = vld [vmem:[#allocation4 + $0x1d8] sm:$0xff]
    %v422 = vld [vmem:[#allocation4 + $0x1e0] sm:$0xff]
    %v423 = vld [vmem:[#allocation4 + $0x1e8] sm:$0xff]
    %v424 = vld [vmem:[#allocation4 + $0x1f0] sm:$0xff]
    %v425 = vld [vmem:[#allocation4 + $0x1f8] sm:$0xff]
    %v426 = vld [vmem:[#allocation4 + $0x200] sm:$0xff]
    %v427 = vld [vmem:[#allocation4 + $0x208] sm:$0xff]
    %v428 = vld [vmem:[#allocation4 + $0x210] sm:$0xff]
    %v429 = vld [vmem:[#allocation4 + $0x218] sm:$0xff]
    %v430 = vld [vmem:[#allocation4 + $0x220] sm:$0xff]
    %v431 = vld [vmem:[#allocation4 + $0x228] sm:$0xff]
    %v432 = vld [vmem:[#allocation4 + $0x230] sm:$0xff]
    %v433 = vld [vmem:[#allocation4 + $0x238] sm:$0xff]
    %v434 = vld [vmem:[#allocation4 + $0x240] sm:$0xff]
    %v435 = vld [vmem:[#allocation4 + $0x248] sm:$0xff]
    %v436 = vld [vmem:[#allocation4 + $0x250] sm:$0xff]
    %v437 = vld [vmem:[#allocation4 + $0x258] sm:$0xff]
    %v438 = vld [vmem:[#allocation4 + $0x260] sm:$0xff]
    %v439 = vld [vmem:[#allocation4 + $0x268] sm:$0xff]
    %v440 = vld [vmem:[#allocation4 + $0x270] sm:$0xff]
    %v441 = vld [vmem:[#allocation4 + $0x278] sm:$0xff]
    %v442 = vld [vmem:[#allocation4 + $0x280] sm:$0xff]
    %v443 = vld [vmem:[#allocation4 + $0x288] sm:$0xff]
    %v444 = vld [vmem:[#allocation4 + $0x290] sm:$0xff]
    %v445 = vld [vmem:[#allocation4 + $0x298] sm:$0xff]
    %v446 = vld [vmem:[#allocation4 + $0x2a0] sm:$0xff]
    %v447 = vld [vmem:[#allocation4 + $0x2a8] sm:$0xff]
    %v448 = vld [vmem:[#allocation4 + $0x2b0] sm:$0xff]
    %v449 = vld [vmem:[#allocation4 + $0x2b8] sm:$0xff]
    %v450 = vld [vmem:[#allocation4 + $0x2c0] sm:$0xff]
    %v451 = vld [vmem:[#allocation4 + $0x2c8] sm:$0xff]
    %v452 = vld [vmem:[#allocation4 + $0x2d0] sm:$0xff]
    %v453 = vld [vmem:[#allocation4 + $0x2d8] sm:$0xff]
    %v454 = vld [vmem:[#allocation4 + $0x2e0] sm:$0xff]
    %v455 = vld [vmem:[#allocation4 + $0x2e8] sm:$0xff]
    %v456 = vld [vmem:[#allocation4 + $0x2f0] sm:$0xff]
    %v457 = vld [vmem:[#allocation4 + $0x2f8] sm:$0xff]
    %v458 = vld [vmem:[#allocation4 + $0x300] sm:$0xff]
    %v459 = vld [vmem:[#allocation4 + $0x308] sm:$0xff]
    %v460 = vld [vmem:[#allocation4 + $0x310] sm:$0xff]
    %v461 = vld [vmem:[#allocation4 + $0x318] sm:$0xff]
    %v462 = vld [vmem:[#allocation4 + $0x320] sm:$0xff]
    %v463 = vld [vmem:[#allocation4 + $0x328] sm:$0xff]
    %v464 = vld [vmem:[#allocation4 + $0x330] sm:$0xff]
    %v465 = vld [vmem:[#allocation4 + $0x338] sm:$0xff]
    %v466 = vld [vmem:[#allocation4 + $0x340] sm:$0xff]
    %v467 = vld [vmem:[#allocation4 + $0x348] sm:$0xff]
    %v468 = vld [vmem:[#allocation4 + $0x350] sm:$0xff]
    %v469 = vld [vmem:[#allocation4 + $0x358] sm:$0xff]
    %v470 = vld [vmem:[#allocation4 + $0x360] sm:$0xff]
    %v471 = vld [vmem:[#allocation4 + $0x368] sm:$0xff]
    %v472 = vld [vmem:[#allocation4 + $0x370] sm:$0xff]
    %v473 = vld [vmem:[#allocation4 + $0x378] sm:$0xff]
    %v474 = vld [vmem:[#allocation4 + $0x380] sm:$0xff]
    %v475 = vld [vmem:[#allocation4 + $0x388] sm:$0xff]
    %v476 = vld [vmem:[#allocation4 + $0x390] sm:$0xff]
    %v477 = vld [vmem:[#allocation4 + $0x398] sm:$0xff]
    %v478 = vld [vmem:[#allocation4 + $0x3a0] sm:$0xff]
    %v479 = vld [vmem:[#allocation4 + $0x3a8] sm:$0xff]
    %v480 = vld [vmem:[#allocation4 + $0x3b0] sm:$0xff]
    %v481 = vld [vmem:[#allocation4 + $0x3b8] sm:$0xff]
    %v482 = vld [vmem:[#allocation4 + $0x3c0] sm:$0xff]
    %v483 = vld [vmem:[#allocation4 + $0x3c8] sm:$0xff]
    %v484 = vld [vmem:[#allocation4 + $0x3d0] sm:$0xff]
    %v485 = vld [vmem:[#allocation4 + $0x3d8] sm:$0xff]
    %v486 = vld [vmem:[#allocation4 + $0x3e0] sm:$0xff]
    %v487 = vld [vmem:[#allocation4 + $0x3e8] sm:$0xff]
    %v488 = vld [vmem:[#allocation4 + $0x3f0] sm:$0xff]
    %v489 = vld [vmem:[#allocation4 + $0x3f8] sm:$0xff]
    %v490 = vld [vmem:[%s5] sm:$0xf]
    %v492 = vperm.slane %v490, 0
    %v493 = vperm.slane %v490, 1
    %v494 = vperm.slane %v490, 2
    %v495 = vperm.slane %v490, 3
    %500 = vmatpush.msra.mxu0 %v358
    %501 = vmatpush.msra.mxu0 %v354
    %502 = vmatpush.msra.mxu0 %v350
    %503 = vmatpush.msra.mxu0 %v346
    %504 = vmatpush.msra.mxu0 %v342
    %505 = vmatpush.msra.mxu0 %v338
    %506 = vmatpush.msra.mxu0 %v334
    %507 = vmatpush.msra.mxu0 %v330
    %508 = vmatpush.msra.mxu0 %v326
    %509 = vmatpush.msra.mxu0 %v322
    %510 = vmatpush.msra.mxu0 %v318
    %511 = vmatpush.msra.mxu0 %v314
    %512 = vmatpush.msra.mxu0 %v310
    %513 = vmatpush.msra.mxu0 %v306
    %514 = vmatpush.msra.mxu0 %v302
    %515 = vmatpush.msra.mxu0 %v298
    %516 = vmatmul.f32.gmra.mxu0 0.0
    %v517 = vpop.f32.mrf.mxu0
    %v518 = vadd.f32 0.0, %v517
    %519 = vdwg.mxu0
    %520 = vmatpush.msra.mxu0 %v359
    %521 = vmatpush.msra.mxu0 %v355
    %522 = vmatpush.msra.mxu0 %v351
    %523 = vmatpush.msra.mxu0 %v347
    %524 = vmatpush.msra.mxu0 %v343
    %525 = vmatpush.msra.mxu0 %v339
    %526 = vmatpush.msra.mxu0 %v335
    %527 = vmatpush.msra.mxu0 %v331
    %528 = vmatpush.msra.mxu0 %v327
    %529 = vmatpush.msra.mxu0 %v323
    %530 = vmatpush.msra.mxu0 %v319
    %531 = vmatpush.msra.mxu0 %v315
    %532 = vmatpush.msra.mxu0 %v311
    %533 = vmatpush.msra.mxu0 %v307
    %534 = vmatpush.msra.mxu0 %v303
    %535 = vmatpush.msra.mxu0 %v299
    %536 = vmatmul.f32.gmra.mxu0 0.0
    %v537 = vpop.f32.mrf.mxu0
    %v538 = vadd.f32 0.0, %v537
    %539 = vdwg.mxu0
    %540 = vmatpush.msra.mxu0 %v360
    %541 = vmatpush.msra.mxu0 %v356
    %542 = vmatpush.msra.mxu0 %v352
    %543 = vmatpush.msra.mxu0 %v348
    %544 = vmatpush.msra.mxu0 %v344
    %545 = vmatpush.msra.mxu0 %v340
    %546 = vmatpush.msra.mxu0 %v336
    %547 = vmatpush.msra.mxu0 %v332
    %548 = vmatpush.msra.mxu0 %v328
    %549 = vmatpush.msra.mxu0 %v324
    %550 = vmatpush.msra.mxu0 %v320
    %551 = vmatpush.msra.mxu0 %v316
    %552 = vmatpush.msra.mxu0 %v312
    %553 = vmatpush.msra.mxu0 %v308
    %554 = vmatpush.msra.mxu0 %v304
    %555 = vmatpush.msra.mxu0 %v300
    %556 = vmatmul.f32.gmra.mxu0 0.0
    %v557 = vpop.f32.mrf.mxu0
    %v558 = vadd.f32 0.0, %v557
    %559 = vdwg.mxu0
    %560 = vmatpush.msra.mxu0 %v361
    %561 = vmatpush.msra.mxu0 %v357
    %562 = vmatpush.msra.mxu0 %v353
    %563 = vmatpush.msra.mxu0 %v349
    %564 = vmatpush.msra.mxu0 %v345
    %565 = vmatpush.msra.mxu0 %v341
    %566 = vmatpush.msra.mxu0 %v337
    %567 = vmatpush.msra.mxu0 %v333
    %568 = vmatpush.msra.mxu0 %v329
    %569 = vmatpush.msra.mxu0 %v325
    %570 = vmatpush.msra.mxu0 %v321
    %571 = vmatpush.msra.mxu0 %v317
    %572 = vmatpush.msra.mxu0 %v313
    %573 = vmatpush.msra.mxu0 %v309
    %574 = vmatpush.msra.mxu0 %v305
    %575 = vmatpush.msra.mxu0 %v301
    %576 = vmatmul.f32.gmra.mxu0 0.0
    %v577 = vpop.f32.mrf.mxu0
    %v578 = vadd.f32 0.0, %v577
    %579 = vdwg.mxu0
    %v580 = vadd.f32 %v152, %v518
    %v581 = vadd.f32 %v193, %v538
    %v582 = vadd.f32 %v234, %v558
    %v583 = vadd.f32 %v275, %v578
    %v584 = vmul.f32 %v580, 0.5
    %v585 = vtanh.pop %v584
    %v586 = vmul.f32 %v585, 0.5
    %v587 = vadd.f32 %v586, 0.5
    %v588 = vmul.f32 %v581, 0.5
    %v589 = vtanh.pop %v588
    %v590 = vmul.f32 %v589, 0.5
    %v591 = vadd.f32 %v590, 0.5
    %v592 = vtanh.pop %v582
    %v593 = vmul.f32 %v583, 0.5
    %v594 = vtanh.pop %v593
    %v595 = vmul.f32 %v594, 0.5
    %v596 = vadd.f32 %v595, 0.5
    %v597 = vmul.f32 %v591, 0.0
    %v598 = vmul.f32 %v587, %v592
    %v599 = vadd.f32 %v597, %v598
    %v600 = vtanh.pop %v599
    %v601 = vmul.f32 %v596, %v600
    %602 = vmatpush.msra.mxu0 %v422
    %603 = vmatpush.msra.mxu0 %v418
    %604 = vmatpush.msra.mxu0 %v414
    %605 = vmatpush.msra.mxu0 %v410
    %606 = vmatpush.msra.mxu0 %v406
    %607 = vmatpush.msra.mxu0 %v402
    %608 = vmatpush.msra.mxu0 %v398
    %609 = vmatpush.msra.mxu0 %v394
    %610 = vmatpush.msra.mxu0 %v390
    %611 = vmatpush.msra.mxu0 %v386
    %612 = vmatpush.msra.mxu0 %v382
    %613 = vmatpush.msra.mxu0 %v378
    %614 = vmatpush.msra.mxu0 %v374
    %615 = vmatpush.msra.mxu0 %v370
    %616 = vmatpush.msra.mxu0 %v366
    %617 = vmatpush.msra.mxu0 %v362
    %618 = vmatmul.f32.gmra.mxu0 %v601
    %v619 = vpop.f32.mrf.mxu0
    %v620 = vadd.f32 %v492, %v619
    %621 = vdwg.mxu0
    %622 = vmatpush.msra.mxu0 %v486
    %623 = vmatpush.msra.mxu0 %v482
    %624 = vmatpush.msra.mxu0 %v478
    %625 = vmatpush.msra.mxu0 %v474
    %626 = vmatpush.msra.mxu0 %v470
    %627 = vmatpush.msra.mxu0 %v466
    %628 = vmatpush.msra.mxu0 %v462
    %629 = vmatpush.msra.mxu0 %v458
    %630 = vmatpush.msra.mxu0 %v454
    %631 = vmatpush.msra.mxu0 %v450
    %632 = vmatpush.msra.mxu0 %v446
    %633 = vmatpush.msra.mxu0 %v442
    %634 = vmatpush.msra.mxu0 %v438
    %635 = vmatpush.msra.mxu0 %v434
    %636 = vmatpush.msra.mxu0 %v430
    %637 = vmatpush.msra.mxu0 %v426
    %638 = vmatmul.f32.gmra.mxu0 0.0
    %v639 = vpop.f32.mrf.mxu0
    %v640 = vadd.f32 %v620, %v639
    %641 = vdwg.mxu0
    %642 = vmatpush.msra.mxu0 %v423
    %643 = vmatpush.msra.mxu0 %v419
    %644 = vmatpush.msra.mxu0 %v415
    %645 = vmatpush.msra.mxu0 %v411
    %646 = vmatpush.msra.mxu0 %v407
    %647 = vmatpush.msra.mxu0 %v403
    %648 = vmatpush.msra.mxu0 %v399
    %649 = vmatpush.msra.mxu0 %v395
    %650 = vmatpush.msra.mxu0 %v391
    %651 = vmatpush.msra.mxu0 %v387
    %652 = vmatpush.msra.mxu0 %v383
    %653 = vmatpush.msra.mxu0 %v379
    %654 = vmatpush.msra.mxu0 %v375
    %655 = vmatpush.msra.mxu0 %v371
    %656 = vmatpush.msra.mxu0 %v367
    %657 = vmatpush.msra.mxu0 %v363
    %658 = vmatmul.f32.gmra.mxu0 %v601
    %v659 = vpop.f32.mrf.mxu0
    %v660 = vadd.f32 %v493, %v659
    %661 = vdwg.mxu0
    %662 = vmatpush.msra.mxu0 %v487
    %663 = vmatpush.msra.mxu0 %v483
    %664 = vmatpush.msra.mxu0 %v479
    %665 = vmatpush.msra.mxu0 %v475
    %666 = vmatpush.msra.mxu0 %v471
    %667 = vmatpush.msra.mxu0 %v467
    %668 = vmatpush.msra.mxu0 %v463
    %669 = vmatpush.msra.mxu0 %v459
    %670 = vmatpush.msra.mxu0 %v455
    %671 = vmatpush.msra.mxu0 %v451
    %672 = vmatpush.msra.mxu0 %v447
    %673 = vmatpush.msra.mxu0 %v443
    %674 = vmatpush.msra.mxu0 %v439
    %675 = vmatpush.msra.mxu0 %v435
    %676 = vmatpush.msra.mxu0 %v431
    %677 = vmatpush.msra.mxu0 %v427
    %678 = vmatmul.f32.gmra.mxu0 0.0
    %v679 = vpop.f32.mrf.mxu0
    %v680 = vadd.f32 %v660, %v679
    %681 = vdwg.mxu0
    %682 = vmatpush.msra.mxu0 %v424
    %683 = vmatpush.msra.mxu0 %v420
    %684 = vmatpush.msra.mxu0 %v416
    %685 = vmatpush.msra.mxu0 %v412
    %686 = vmatpush.msra.mxu0 %v408
    %687 = vmatpush.msra.mxu0 %v404
    %688 = vmatpush.msra.mxu0 %v400
    %689 = vmatpush.msra.mxu0 %v396
    %690 = vmatpush.msra.mxu0 %v392
    %691 = vmatpush.msra.mxu0 %v388
    %692 = vmatpush.msra.mxu0 %v384
    %693 = vmatpush.msra.mxu0 %v380
    %694 = vmatpush.msra.mxu0 %v376
    %695 = vmatpush.msra.mxu0 %v372
    %696 = vmatpush.msra.mxu0 %v368
    %697 = vmatpush.msra.mxu0 %v364
    %698 = vmatmul.f32.gmra.mxu0 %v601
    %v699 = vpop.f32.mrf.mxu0
    %v700 = vadd.f32 %v494, %v699
    %701 = vdwg.mxu0
    %702 = vmatpush.msra.mxu0 %v488
    %703 = vmatpush.msra.mxu0 %v484
    %704 = vmatpush.msra.mxu0 %v480
    %705 = vmatpush.msra.mxu0 %v476
    %706 = vmatpush.msra.mxu0 %v472
    %707 = vmatpush.msra.mxu0 %v468
    %708 = vmatpush.msra.mxu0 %v464
    %709 = vmatpush.msra.mxu0 %v460
    %710 = vmatpush.msra.mxu0 %v456
    %711 = vmatpush.msra.mxu0 %v452
    %712 = vmatpush.msra.mxu0 %v448
    %713 = vmatpush.msra.mxu0 %v444
    %714 = vmatpush.msra.mxu0 %v440
    %715 = vmatpush.msra.mxu0 %v436
    %716 = vmatpush.msra.mxu0 %v432
    %717 = vmatpush.msra.mxu0 %v428
    %718 = vmatmul.f32.gmra.mxu0 0.0
    %v719 = vpop.f32.mrf.mxu0
    %v720 = vadd.f32 %v700, %v719
    %721 = vdwg.mxu0
    %722 = vmatpush.msra.mxu0 %v425
    %723 = vmatpush.msra.mxu0 %v421
    %724 = vmatpush.msra.mxu0 %v417
    %725 = vmatpush.msra.mxu0 %v413
    %726 = vmatpush.msra.mxu0 %v409
    %727 = vmatpush.msra.mxu0 %v405
    %728 = vmatpush.msra.mxu0 %v401
    %729 = vmatpush.msra.mxu0 %v397
    %730 = vmatpush.msra.mxu0 %v393
    %731 = vmatpush.msra.mxu0 %v389
    %732 = vmatpush.msra.mxu0 %v385
    %733 = vmatpush.msra.mxu0 %v381
    %734 = vmatpush.msra.mxu0 %v377
    %735 = vmatpush.msra.mxu0 %v373
    %736 = vmatpush.msra.mxu0 %v369
    %737 = vmatpush.msra.mxu0 %v365
    %738 = vmatmul.f32.gmra.mxu0 %v601
    %v739 = vpop.f32.mrf.mxu0
    %v740 = vadd.f32 %v495, %v739
    %741 = vdwg.mxu0
    %742 = vmatpush.msra.mxu0 %v489
    %743 = vmatpush.msra.mxu0 %v485
    %744 = vmatpush.msra.mxu0 %v481
    %745 = vmatpush.msra.mxu0 %v477
    %746 = vmatpush.msra.mxu0 %v473
    %747 = vmatpush.msra.mxu0 %v469
    %748 = vmatpush.msra.mxu0 %v465
    %749 = vmatpush.msra.mxu0 %v461
    %750 = vmatpush.msra.mxu0 %v457
    %751 = vmatpush.msra.mxu0 %v453
    %752 = vmatpush.msra.mxu0 %v449
    %753 = vmatpush.msra.mxu0 %v445
    %754 = vmatpush.msra.mxu0 %v441
    %755 = vmatpush.msra.mxu0 %v437
    %756 = vmatpush.msra.mxu0 %v433
    %757 = vmatpush.msra.mxu0 %v429
    %758 = vmatmul.f32.gmra.mxu0 0.0
    %v759 = vpop.f32.mrf.mxu0
    %v760 = vadd.f32 %v740, %v759
    %761 = vdwg.mxu0
    %v762 = vmul.f32 %v640, 0.5
    %v763 = vtanh.pop %v762
    %v764 = vmul.f32 %v763, 0.5
    %v765 = vadd.f32 %v764, 0.5
    %v766 = vmul.f32 %v680, 0.5
    %v767 = vtanh.pop %v766
    %v768 = vmul.f32 %v767, 0.5
    %v769 = vadd.f32 %v768, 0.5
    %v770 = vtanh.pop %v720
    %v771 = vmul.f32 %v760, 0.5
    %v772 = vtanh.pop %v771
    %v773 = vmul.f32 %v772, 0.5
    %v774 = vadd.f32 %v773, 0.5
    %v775 = vmul.f32 %v769, 0.0
    %v776 = vmul.f32 %v765, %v770
    %v777 = vadd.f32 %v775, %v776
    %v778 = vtanh.pop %v777
    %v779 = vmul.f32 %v774, %v778
    %780 = vmatpush.msra.mxu0 %v358
    %781 = vmatpush.msra.mxu0 %v354
    %782 = vmatpush.msra.mxu0 %v350
    %783 = vmatpush.msra.mxu0 %v346
    %784 = vmatpush.msra.mxu0 %v342
    %785 = vmatpush.msra.mxu0 %v338
    %786 = vmatpush.msra.mxu0 %v334
    %787 = vmatpush.msra.mxu0 %v330
    %788 = vmatpush.msra.mxu0 %v326
    %789 = vmatpush.msra.mxu0 %v322
    %790 = vmatpush.msra.mxu0 %v318
    %791 = vmatpush.msra.mxu0 %v314
    %792 = vmatpush.msra.mxu0 %v310
    %793 = vmatpush.msra.mxu0 %v306
    %794 = vmatpush.msra.mxu0 %v302
    %795 = vmatpush.msra.mxu0 %v298
    %796 = vmatmul.f32.gmra.mxu0 %v601
    %v797 = vpop.f32.mrf.mxu0
    %v798 = vadd.f32 0.0, %v797
    %799 = vdwg.mxu0
    %800 = vmatpush.msra.mxu0 %v359
    %801 = vmatpush.msra.mxu0 %v355
    %802 = vmatpush.msra.mxu0 %v351
    %803 = vmatpush.msra.mxu0 %v347
    %804 = vmatpush.msra.mxu0 %v343
    %805 = vmatpush.msra.mxu0 %v339
    %806 = vmatpush.msra.mxu0 %v335
    %807 = vmatpush.msra.mxu0 %v331
    %808 = vmatpush.msra.mxu0 %v327
    %809 = vmatpush.msra.mxu0 %v323
    %810 = vmatpush.msra.mxu0 %v319
    %811 = vmatpush.msra.mxu0 %v315
    %812 = vmatpush.msra.mxu0 %v311
    %813 = vmatpush.msra.mxu0 %v307
    %814 = vmatpush.msra.mxu0 %v303
    %815 = vmatpush.msra.mxu0 %v299
    %816 = vmatmul.f32.gmra.mxu0 %v601
    %v817 = vpop.f32.mrf.mxu0
    %v818 = vadd.f32 0.0, %v817
    %819 = vdwg.mxu0
    %820 = vmatpush.msra.mxu0 %v360
    %821 = vmatpush.msra.mxu0 %v356
    %822 = vmatpush.msra.mxu0 %v352
    %823 = vmatpush.msra.mxu0 %v348
    %824 = vmatpush.msra.mxu0 %v344
    %825 = vmatpush.msra.mxu0 %v340
    %826 = vmatpush.msra.mxu0 %v336
    %827 = vmatpush.msra.mxu0 %v332
    %828 = vmatpush.msra.mxu0 %v328
    %829 = vmatpush.msra.mxu0 %v324
    %830 = vmatpush.msra.mxu0 %v320
    %831 = vmatpush.msra.mxu0 %v316
    %832 = vmatpush.msra.mxu0 %v312
    %833 = vmatpush.msra.mxu0 %v308
    %834 = vmatpush.msra.mxu0 %v304
    %835 = vmatpush.msra.mxu0 %v300
    %836 = vmatmul.f32.gmra.mxu0 %v601
    %v837 = vpop.f32.mrf.mxu0
    %v838 = vadd.f32 0.0, %v837
    %839 = vdwg.mxu0
    %840 = vmatpush.msra.mxu0 %v361
    %841 = vmatpush.msra.mxu0 %v357
    %842 = vmatpush.msra.mxu0 %v353
    %843 = vmatpush.msra.mxu0 %v349
    %844 = vmatpush.msra.mxu0 %v345
    %845 = vmatpush.msra.mxu0 %v341
    %846 = vmatpush.msra.mxu0 %v337
    %847 = vmatpush.msra.mxu0 %v333
    %848 = vmatpush.msra.mxu0 %v329
    %849 = vmatpush.msra.mxu0 %v325
    %850 = vmatpush.msra.mxu0 %v321
    %851 = vmatpush.msra.mxu0 %v317
    %852 = vmatpush.msra.mxu0 %v313
    %853 = vmatpush.msra.mxu0 %v309
    %854 = vmatpush.msra.mxu0 %v305
    %855 = vmatpush.msra.mxu0 %v301
    %856 = vmatmul.f32.gmra.mxu0 %v601
    %v857 = vpop.f32.mrf.mxu0
    %v858 = vadd.f32 0.0, %v857
    %859 = vdwg.mxu0
    %v860 = vadd.f32 %v155, %v798
    %v861 = vadd.f32 %v196, %v818
    %v862 = vadd.f32 %v237, %v838
    %v863 = vadd.f32 %v278, %v858
    %v864 = vmul.f32 %v860, 0.5
    %v865 = vtanh.pop %v864
    %v866 = vmul.f32 %v865, 0.5
    %v867 = vadd.f32 %v866, 0.5
    %v868 = vmul.f32 %v861, 0.5
    %v869 = vtanh.pop %v868
    %v870 = vmul.f32 %v869, 0.5
    %v871 = vadd.f32 %v870, 0.5
    %v872 = vtanh.pop %v862
    %v873 = vmul.f32 %v863, 0.5
    %v874 = vtanh.pop %v873
    %v875 = vmul.f32 %v874, 0.5
    %v876 = vadd.f32 %v875, 0.5
    %v877 = vmul.f32 %v871, %v599
    %v878 = vmul.f32 %v867, %v872
    %v879 = vadd.f32 %v877, %v878
    %v880 = vtanh.pop %v879
    %v881 = vmul.f32 %v876, %v880
    %882 = vmatpush.msra.mxu0 %v422
    %883 = vmatpush.msra.mxu0 %v418
    %884 = vmatpush.msra.mxu0 %v414
    %885 = vmatpush.msra.mxu0 %v410
    %886 = vmatpush.msra.mxu0 %v406
    %887 = vmatpush.msra.mxu0 %v402
    %888 = vmatpush.msra.mxu0 %v398
    %889 = vmatpush.msra.mxu0 %v394
    %890 = vmatpush.msra.mxu0 %v390
    %891 = vmatpush.msra.mxu0 %v386
    %892 = vmatpush.msra.mxu0 %v382
    %893 = vmatpush.msra.mxu0 %v378
    %894 = vmatpush.msra.mxu0 %v374
    %895 = vmatpush.msra.mxu0 %v370
    %896 = vmatpush.msra.mxu0 %v366
    %897 = vmatpush.msra.mxu0 %v362
    %898 = vmatmul.f32.gmra.mxu0 %v881
    %v899 = vpop.f32.mrf.mxu0
    %v900 = vadd.f32 %v492, %v899
    %901 = vdwg.mxu0
    %902 = vmatpush.msra.mxu0 %v486
    %903 = vmatpush.msra.mxu0 %v482
    %904 = vmatpush.msra.mxu0 %v478
    %905 = vmatpush.msra.mxu0 %v474
    %906 = vmatpush.msra.mxu0 %v470
    %907 = vmatpush.msra.mxu0 %v466
    %908 = vmatpush.msra.mxu0 %v462
    %909 = vmatpush.msra.mxu0 %v458
    %910 = vmatpush.msra.mxu0 %v454
    %911 = vmatpush.msra.mxu0 %v450
    %912 = vmatpush.msra.mxu0 %v446
    %913 = vmatpush.msra.mxu0 %v442
    %914 = vmatpush.msra.mxu0 %v438
    %915 = vmatpush.msra.mxu0 %v434
    %916 = vmatpush.msra.mxu0 %v430
    %917 = vmatpush.msra.mxu0 %v426
    %918 = vmatmul.f32.gmra.mxu0 %v779
    %v919 = vpop.f32.mrf.mxu0
    %v920 = vadd.f32 %v900, %v919
    %921 = vdwg.mxu0
    %922 = vmatpush.msra.mxu0 %v423
    %923 = vmatpush.msra.mxu0 %v419
    %924 = vmatpush.msra.mxu0 %v415
    %925 = vmatpush.msra.mxu0 %v411
    %926 = vmatpush.msra.mxu0 %v407
    %927 = vmatpush.msra.mxu0 %v403
    %928 = vmatpush.msra.mxu0 %v399
    %929 = vmatpush.msra.mxu0 %v395
    %930 = vmatpush.msra.mxu0 %v391
    %931 = vmatpush.msra.mxu0 %v387
    %932 = vmatpush.msra.mxu0 %v383
    %933 = vmatpush.msra.mxu0 %v379
    %934 = vmatpush.msra.mxu0 %v375
    %935 = vmatpush.msra.mxu0 %v371
    %936 = vmatpush.msra.mxu0 %v367
    %937 = vmatpush.msra.mxu0 %v363
    %938 = vmatmul.f32.gmra.mxu0 %v881
    %v939 = vpop.f32.mrf.mxu0
    %v940 = vadd.f32 %v493, %v939
    %941 = vdwg.mxu0
    %942 = vmatpush.msra.mxu0 %v487
    %943 = vmatpush.msra.mxu0 %v483
    %944 = vmatpush.msra.mxu0 %v479
    %945 = vmatpush.msra.mxu0 %v475
    %946 = vmatpush.msra.mxu0 %v471
    %947 = vmatpush.msra.mxu0 %v467
    %948 = vmatpush.msra.mxu0 %v463
    %949 = vmatpush.msra.mxu0 %v459
    %950 = vmatpush.msra.mxu0 %v455
    %951 = vmatpush.msra.mxu0 %v451
    %952 = vmatpush.msra.mxu0 %v447
    %953 = vmatpush.msra.mxu0 %v443
    %954 = vmatpush.msra.mxu0 %v439
    %955 = vmatpush.msra.mxu0 %v435
    %956 = vmatpush.msra.mxu0 %v431
    %957 = vmatpush.msra.mxu0 %v427
    %958 = vmatmul.f32.gmra.mxu0 %v779
    %v959 = vpop.f32.mrf.mxu0
    %v960 = vadd.f32 %v940, %v959
    %961 = vdwg.mxu0
    %962 = vmatpush.msra.mxu0 %v424
    %963 = vmatpush.msra.mxu0 %v420
    %964 = vmatpush.msra.mxu0 %v416
    %965 = vmatpush.msra.mxu0 %v412
    %966 = vmatpush.msra.mxu0 %v408
    %967 = vmatpush.msra.mxu0 %v404
    %968 = vmatpush.msra.mxu0 %v400
    %969 = vmatpush.msra.mxu0 %v396
    %970 = vmatpush.msra.mxu0 %v392
    %971 = vmatpush.msra.mxu0 %v388
    %972 = vmatpush.msra.mxu0 %v384
    %973 = vmatpush.msra.mxu0 %v380
    %974 = vmatpush.msra.mxu0 %v376
    %975 = vmatpush.msra.mxu0 %v372
    %976 = vmatpush.msra.mxu0 %v368
    %977 = vmatpush.msra.mxu0 %v364
    %978 = vmatmul.f32.gmra.mxu0 %v881
    %v979 = vpop.f32.mrf.mxu0
    %v980 = vadd.f32 %v494, %v979
    %981 = vdwg.mxu0
    %982 = vmatpush.msra.mxu0 %v488
    %983 = vmatpush.msra.mxu0 %v484
    %984 = vmatpush.msra.mxu0 %v480
    %985 = vmatpush.msra.mxu0 %v476
    %986 = vmatpush.msra.mxu0 %v472
    %987 = vmatpush.msra.mxu0 %v468
    %988 = vmatpush.msra.mxu0 %v464
    %989 = vmatpush.msra.mxu0 %v460
    %990 = vmatpush.msra.mxu0 %v456
    %991 = vmatpush.msra.mxu0 %v452
    %992 = vmatpush.msra.mxu0 %v448
    %993 = vmatpush.msra.mxu0 %v444
    %994 = vmatpush.msra.mxu0 %v440
    %995 = vmatpush.msra.mxu0 %v436
    %996 = vmatpush.msra.mxu0 %v432
    %997 = vmatpush.msra.mxu0 %v428
    %998 = vmatmul.f32.gmra.mxu0 %v779
    %v999 = vpop.f32.mrf.mxu0
    %v1000 = vadd.f32 %v980, %v999
    %1001 = vdwg.mxu0
    %1002 = vmatpush.msra.mxu0 %v425
    %1003 = vmatpush.msra.mxu0 %v421
    %1004 = vmatpush.msra.mxu0 %v417
    %1005 = vmatpush.msra.mxu0 %v413
    %1006 = vmatpush.msra.mxu0 %v409
    %1007 = vmatpush.msra.mxu0 %v405
    %1008 = vmatpush.msra.mxu0 %v401
    %1009 = vmatpush.msra.mxu0 %v397
    %1010 = vmatpush.msra.mxu0 %v393
    %1011 = vmatpush.msra.mxu0 %v389
    %1012 = vmatpush.msra.mxu0 %v385
    %1013 = vmatpush.msra.mxu0 %v381
    %1014 = vmatpush.msra.mxu0 %v377
    %1015 = vmatpush.msra.mxu0 %v373
    %1016 = vmatpush.msra.mxu0 %v369
    %1017 = vmatpush.msra.mxu0 %v365
    %1018 = vmatmul.f32.gmra.mxu0 %v881
    %v1019 = vpop.f32.mrf.mxu0
    %v1020 = vadd.f32 %v495, %v1019
    %1021 = vdwg.mxu0
    %1022 = vmatpush.msra.mxu0 %v489
    %1023 = vmatpush.msra.mxu0 %v485
    %1024 = vmatpush.msra.mxu0 %v481
    %1025 = vmatpush.msra.mxu0 %v477
    %1026 = vmatpush.msra.mxu0 %v473
    %1027 = vmatpush.msra.mxu0 %v469
    %1028 = vmatpush.msra.mxu0 %v465
    %1029 = vmatpush.msra.mxu0 %v461
    %1030 = vmatpush.msra.mxu0 %v457
    %1031 = vmatpush.msra.mxu0 %v453
    %1032 = vmatpush.msra.mxu0 %v449
    %1033 = vmatpush.msra.mxu0 %v445
    %1034 = vmatpush.msra.mxu0 %v441
    %1035 = vmatpush.msra.mxu0 %v437
    %1036 = vmatpush.msra.mxu0 %v433
    %1037 = vmatpush.msra.mxu0 %v429
    %1038 = vmatmul.f32.gmra.mxu0 %v779
    %v1039 = vpop.f32.mrf.mxu0
    %v1040 = vadd.f32 %v1020, %v1039
    %1041 = vdwg.mxu0
    %v1042 = vmul.f32 %v920, 0.5
    %v1043 = vtanh.pop %v1042
    %v1044 = vmul.f32 %v1043, 0.5
    %v1045 = vadd.f32 %v1044, 0.5
    %v1046 = vmul.f32 %v960, 0.5
    %v1047 = vtanh.pop %v1046
    %v1048 = vmul.f32 %v1047, 0.5
    %v1049 = vadd.f32 %v1048, 0.5
    %v1050 = vtanh.pop %v1000
    %v1051 = vmul.f32 %v1040, 0.5
    %v1052 = vtanh.pop %v1051
    %v1053 = vmul.f32 %v1052, 0.5
    %v1054 = vadd.f32 %v1053, 0.5
    %v1055 = vmul.f32 %v1049, %v777
    %v1056 = vmul.f32 %v1045, %v1050
    %v1057 = vadd.f32 %v1055, %v1056
    %v1058 = vtanh.pop %v1057
    %v1059 = vmul.f32 %v1054, %v1058
    %1060 = vmatpush.msra.mxu0 %v358
    %1061 = vmatpush.msra.mxu0 %v354
    %1062 = vmatpush.msra.mxu0 %v350
    %1063 = vmatpush.msra.mxu0 %v346
    %1064 = vmatpush.msra.mxu0 %v342
    %1065 = vmatpush.msra.mxu0 %v338
    %1066 = vmatpush.msra.mxu0 %v334
    %1067 = vmatpush.msra.mxu0 %v330
    %1068 = vmatpush.msra.mxu0 %v326
    %1069 = vmatpush.msra.mxu0 %v322
    %1070 = vmatpush.msra.mxu0 %v318
    %1071 = vmatpush.msra.mxu0 %v314
    %1072 = vmatpush.msra.mxu0 %v310
    %1073 = vmatpush.msra.mxu0 %v306
    %1074 = vmatpush.msra.mxu0 %v302
    %1075 = vmatpush.msra.mxu0 %v298
    %1076 = vmatmul.f32.gmra.mxu0 %v881
    %v1077 = vpop.f32.mrf.mxu0
    %v1078 = vadd.f32 0.0, %v1077
    %1079 = vdwg.mxu0
    %1080 = vmatpush.msra.mxu0 %v359
    %1081 = vmatpush.msra.mxu0 %v355
    %1082 = vmatpush.msra.mxu0 %v351
    %1083 = vmatpush.msra.mxu0 %v347
    %1084 = vmatpush.msra.mxu0 %v343
    %1085 = vmatpush.msra.mxu0 %v339
    %1086 = vmatpush.msra.mxu0 %v335
    %1087 = vmatpush.msra.mxu0 %v331
    %1088 = vmatpush.msra.mxu0 %v327
    %1089 = vmatpush.msra.mxu0 %v323
    %1090 = vmatpush.msra.mxu0 %v319
    %1091 = vmatpush.msra.mxu0 %v315
    %1092 = vmatpush.msra.mxu0 %v311
    %1093 = vmatpush.msra.mxu0 %v307
    %1094 = vmatpush.msra.mxu0 %v303
    %1095 = vmatpush.msra.mxu0 %v299
    %1096 = vmatmul.f32.gmra.mxu0 %v881
    %v1097 = vpop.f32.mrf.mxu0
    %v1098 = vadd.f32 0.0, %v1097
    %1099 = vdwg.mxu0
    %1100 = vmatpush.msra.mxu0 %v360
    %1101 = vmatpush.msra.mxu0 %v356
    %1102 = vmatpush.msra.mxu0 %v352
    %1103 = vmatpush.msra.mxu0 %v348
    %1104 = vmatpush.msra.mxu0 %v344
    %1105 = vmatpush.msra.mxu0 %v340
    %1106 = vmatpush.msra.mxu0 %v336
    %1107 = vmatpush.msra.mxu0 %v332
    %1108 = vmatpush.msra.mxu0 %v328
    %1109 = vmatpush.msra.mxu0 %v324
    %1110 = vmatpush.msra.mxu0 %v320
    %1111 = vmatpush.msra.mxu0 %v316
    %1112 = vmatpush.msra.mxu0 %v312
    %1113 = vmatpush.msra.mxu0 %v308
    %1114 = vmatpush.msra.mxu0 %v304
    %1115 = vmatpush.msra.mxu0 %v300
    %1116 = vmatmul.f32.gmra.mxu0 %v881
    %v1117 = vpop.f32.mrf.mxu0
    %v1118 = vadd.f32 0.0, %v1117
    %1119 = vdwg.mxu0
    %1120 = vmatpush.msra.mxu0 %v361
    %1121 = vmatpush.msra.mxu0 %v357
    %1122 = vmatpush.msra.mxu0 %v353
    %1123 = vmatpush.msra.mxu0 %v349
    %1124 = vmatpush.msra.mxu0 %v345
    %1125 = vmatpush.msra.mxu0 %v341
    %1126 = vmatpush.msra.mxu0 %v337
    %1127 = vmatpush.msra.mxu0 %v333
    %1128 = vmatpush.msra.mxu0 %v329
    %1129 = vmatpush.msra.mxu0 %v325
    %1130 = vmatpush.msra.mxu0 %v321
    %1131 = vmatpush.msra.mxu0 %v317
    %1132 = vmatpush.msra.mxu0 %v313
    %1133 = vmatpush.msra.mxu0 %v309
    %1134 = vmatpush.msra.mxu0 %v305
    %1135 = vmatpush.msra.mxu0 %v301
    %1136 = vmatmul.f32.gmra.mxu0 %v881
    %v1137 = vpop.f32.mrf.mxu0
    %v1138 = vadd.f32 0.0, %v1137
    %1139 = vdwg.mxu0
    %v1140 = vadd.f32 %v158, %v1078
    %v1141 = vadd.f32 %v199, %v1098
    %v1142 = vadd.f32 %v240, %v1118
    %v1143 = vadd.f32 %v281, %v1138
    %v1144 = vmul.f32 %v1140, 0.5
    %v1145 = vtanh.pop %v1144
    %v1146 = vmul.f32 %v1145, 0.5
    %v1147 = vadd.f32 %v1146, 0.5
    %v1148 = vmul.f32 %v1141, 0.5
    %v1149 = vtanh.pop %v1148
    %v1150 = vmul.f32 %v1149, 0.5
    %v1151 = vadd.f32 %v1150, 0.5
    %v1152 = vtanh.pop %v1142
    %v1153 = vmul.f32 %v1143, 0.5
    %v1154 = vtanh.pop %v1153
    %v1155 = vmul.f32 %v1154, 0.5
    %v1156 = vadd.f32 %v1155, 0.5
    %v1157 = vmul.f32 %v1151, %v879
    %v1158 = vmul.f32 %v1147, %v1152
    %v1159 = vadd.f32 %v1157, %v1158
    %v1160 = vtanh.pop %v1159
    %v1161 = vmul.f32 %v1156, %v1160
    %1162 = vmatpush.msra.mxu0 %v422
    %1163 = vmatpush.msra.mxu0 %v418
    %1164 = vmatpush.msra.mxu0 %v414
    %1165 = vmatpush.msra.mxu0 %v410
    %1166 = vmatpush.msra.mxu0 %v406
    %1167 = vmatpush.msra.mxu0 %v402
    %1168 = vmatpush.msra.mxu0 %v398
    %1169 = vmatpush.msra.mxu0 %v394
    %1170 = vmatpush.msra.mxu0 %v390
    %1171 = vmatpush.msra.mxu0 %v386
    %1172 = vmatpush.msra.mxu0 %v382
    %1173 = vmatpush.msra.mxu0 %v378
    %1174 = vmatpush.msra.mxu0 %v374
    %1175 = vmatpush.msra.mxu0 %v370
    %1176 = vmatpush.msra.mxu0 %v366
    %1177 = vmatpush.msra.mxu0 %v362
    %1178 = vmatmul.f32.gmra.mxu0 %v1161
    %v1179 = vpop.f32.mrf.mxu0
    %v1180 = vadd.f32 %v492, %v1179
    %1181 = vdwg.mxu0
    %1182 = vmatpush.msra.mxu0 %v486
    %1183 = vmatpush.msra.mxu0 %v482
    %1184 = vmatpush.msra.mxu0 %v478
    %1185 = vmatpush.msra.mxu0 %v474
    %1186 = vmatpush.msra.mxu0 %v470
    %1187 = vmatpush.msra.mxu0 %v466
    %1188 = vmatpush.msra.mxu0 %v462
    %1189 = vmatpush.msra.mxu0 %v458
    %1190 = vmatpush.msra.mxu0 %v454
    %1191 = vmatpush.msra.mxu0 %v450
    %1192 = vmatpush.msra.mxu0 %v446
    %1193 = vmatpush.msra.mxu0 %v442
    %1194 = vmatpush.msra.mxu0 %v438
    %1195 = vmatpush.msra.mxu0 %v434
    %1196 = vmatpush.msra.mxu0 %v430
    %1197 = vmatpush.msra.mxu0 %v426
    %1198 = vmatmul.f32.gmra.mxu0 %v1059
    %v1199 = vpop.f32.mrf.mxu0
    %v1200 = vadd.f32 %v1180, %v1199
    %1201 = vdwg.mxu0
    %1202 = vmatpush.msra.mxu0 %v423
    %1203 = vmatpush.msra.mxu0 %v419
    %1204 = vmatpush.msra.mxu0 %v415
    %1205 = vmatpush.msra.mxu0 %v411
    %1206 = vmatpush.msra.mxu0 %v407
    %1207 = vmatpush.msra.mxu0 %v403
    %1208 = vmatpush.msra.mxu0 %v399
    %1209 = vmatpush.msra.mxu0 %v395
    %1210 = vmatpush.msra.mxu0 %v391
    %1211 = vmatpush.msra.mxu0 %v387
    %1212 = vmatpush.msra.mxu0 %v383
    %1213 = vmatpush.msra.mxu0 %v379
    %1214 = vmatpush.msra.mxu0 %v375
    %1215 = vmatpush.msra.mxu0 %v371
    %1216 = vmatpush.msra.mxu0 %v367
    %1217 = vmatpush.msra.mxu0 %v363
    %1218 = vmatmul.f32.gmra.mxu0 %v1161
    %v1219 = vpop.f32.mrf.mxu0
    %v1220 = vadd.f32 %v493, %v1219
    %1221 = vdwg.mxu0
    %1222 = vmatpush.msra.mxu0 %v487
    %1223 = vmatpush.msra.mxu0 %v483
    %1224 = vmatpush.msra.mxu0 %v479
    %1225 = vmatpush.msra.mxu0 %v475
    %1226 = vmatpush.msra.mxu0 %v471
    %1227 = vmatpush.msra.mxu0 %v467
    %1228 = vmatpush.msra.mxu0 %v463
    %1229 = vmatpush.msra.mxu0 %v459
    %1230 = vmatpush.msra.mxu0 %v455
    %1231 = vmatpush.msra.mxu0 %v451
    %1232 = vmatpush.msra.mxu0 %v447
    %1233 = vmatpush.msra.mxu0 %v443
    %1234 = vmatpush.msra.mxu0 %v439
    %1235 = vmatpush.msra.mxu0 %v435
    %1236 = vmatpush.msra.mxu0 %v431
    %1237 = vmatpush.msra.mxu0 %v427
    %1238 = vmatmul.f32.gmra.mxu0 %v1059
    %v1239 = vpop.f32.mrf.mxu0
    %v1240 = vadd.f32 %v1220, %v1239
    %1241 = vdwg.mxu0
    %1242 = vmatpush.msra.mxu0 %v424
    %1243 = vmatpush.msra.mxu0 %v420
    %1244 = vmatpush.msra.mxu0 %v416
    %1245 = vmatpush.msra.mxu0 %v412
    %1246 = vmatpush.msra.mxu0 %v408
    %1247 = vmatpush.msra.mxu0 %v404
    %1248 = vmatpush.msra.mxu0 %v400
    %1249 = vmatpush.msra.mxu0 %v396
    %1250 = vmatpush.msra.mxu0 %v392
    %1251 = vmatpush.msra.mxu0 %v388
    %1252 = vmatpush.msra.mxu0 %v384
    %1253 = vmatpush.msra.mxu0 %v380
    %1254 = vmatpush.msra.mxu0 %v376
    %1255 = vmatpush.msra.mxu0 %v372
    %1256 = vmatpush.msra.mxu0 %v368
    %1257 = vmatpush.msra.mxu0 %v364
    %1258 = vmatmul.f32.gmra.mxu0 %v1161
    %v1259 = vpop.f32.mrf.mxu0
    %v1260 = vadd.f32 %v494, %v1259
    %1261 = vdwg.mxu0
    %1262 = vmatpush.msra.mxu0 %v488
    %1263 = vmatpush.msra.mxu0 %v484
    %1264 = vmatpush.msra.mxu0 %v480
    %1265 = vmatpush.msra.mxu0 %v476
    %1266 = vmatpush.msra.mxu0 %v472
    %1267 = vmatpush.msra.mxu0 %v468
    %1268 = vmatpush.msra.mxu0 %v464
    %1269 = vmatpush.msra.mxu0 %v460
    %1270 = vmatpush.msra.mxu0 %v456
    %1271 = vmatpush.msra.mxu0 %v452
    %1272 = vmatpush.msra.mxu0 %v448
    %1273 = vmatpush.msra.mxu0 %v444
    %1274 = vmatpush.msra.mxu0 %v440
    %1275 = vmatpush.msra.mxu0 %v436
    %1276 = vmatpush.msra.mxu0 %v432
    %1277 = vmatpush.msra.mxu0 %v428
    %1278 = vmatmul.f32.gmra.mxu0 %v1059
    %v1279 = vpop.f32.mrf.mxu0
    %v1280 = vadd.f32 %v1260, %v1279
    %1281 = vdwg.mxu0
    %1282 = vmatpush.msra.mxu0 %v425
    %1283 = vmatpush.msra.mxu0 %v421
    %1284 = vmatpush.msra.mxu0 %v417
    %1285 = vmatpush.msra.mxu0 %v413
    %1286 = vmatpush.msra.mxu0 %v409
    %1287 = vmatpush.msra.mxu0 %v405
    %1288 = vmatpush.msra.mxu0 %v401
    %1289 = vmatpush.msra.mxu0 %v397
    %1290 = vmatpush.msra.mxu0 %v393
    %1291 = vmatpush.msra.mxu0 %v389
    %1292 = vmatpush.msra.mxu0 %v385
    %1293 = vmatpush.msra.mxu0 %v381
    %1294 = vmatpush.msra.mxu0 %v377
    %1295 = vmatpush.msra.mxu0 %v373
    %1296 = vmatpush.msra.mxu0 %v369
    %1297 = vmatpush.msra.mxu0 %v365
    %1298 = vmatmul.f32.gmra.mxu0 %v1161
    %v1299 = vpop.f32.mrf.mxu0
    %v1300 = vadd.f32 %v495, %v1299
    %1301 = vdwg.mxu0
    %1302 = vmatpush.msra.mxu0 %v489
    %1303 = vmatpush.msra.mxu0 %v485
    %1304 = vmatpush.msra.mxu0 %v481
    %1305 = vmatpush.msra.mxu0 %v477
    %1306 = vmatpush.msra.mxu0 %v473
    %1307 = vmatpush.msra.mxu0 %v469
    %1308 = vmatpush.msra.mxu0 %v465
    %1309 = vmatpush.msra.mxu0 %v461
    %1310 = vmatpush.msra.mxu0 %v457
    %1311 = vmatpush.msra.mxu0 %v453
    %1312 = vmatpush.msra.mxu0 %v449
    %1313 = vmatpush.msra.mxu0 %v445
    %1314 = vmatpush.msra.mxu0 %v441
    %1315 = vmatpush.msra.mxu0 %v437
    %1316 = vmatpush.msra.mxu0 %v433
    %1317 = vmatpush.msra.mxu0 %v429
    %1318 = vmatmul.f32.gmra.mxu0 %v1059
    %v1319 = vpop.f32.mrf.mxu0
    %v1320 = vadd.f32 %v1300, %v1319
    %1321 = vdwg.mxu0
    %v1322 = vmul.f32 %v1200, 0.5
    %v1323 = vtanh.pop %v1322
    %v1324 = vmul.f32 %v1323, 0.5
    %v1325 = vadd.f32 %v1324, 0.5
    %v1326 = vmul.f32 %v1240, 0.5
    %v1327 = vtanh.pop %v1326
    %v1328 = vmul.f32 %v1327, 0.5
    %v1329 = vadd.f32 %v1328, 0.5
    %v1330 = vtanh.pop %v1280
    %v1331 = vmul.f32 %v1320, 0.5
    %v1332 = vtanh.pop %v1331
    %v1333 = vmul.f32 %v1332, 0.5
    %v1334 = vadd.f32 %v1333, 0.5
    %v1335 = vmul.f32 %v1329, %v1057
    %v1336 = vmul.f32 %v1325, %v1330
    %v1337 = vadd.f32 %v1335, %v1336
    %v1338 = vtanh.pop %v1337
    %v1339 = vmul.f32 %v1334, %v1338
    %1340 = vmatpush.msra.mxu0 %v358
    %1341 = vmatpush.msra.mxu0 %v354
    %1342 = vmatpush.msra.mxu0 %v350
    %1343 = vmatpush.msra.mxu0 %v346
    %1344 = vmatpush.msra.mxu0 %v342
    %1345 = vmatpush.msra.mxu0 %v338
    %1346 = vmatpush.msra.mxu0 %v334
    %1347 = vmatpush.msra.mxu0 %v330
    %1348 = vmatpush.msra.mxu0 %v326
    %1349 = vmatpush.msra.mxu0 %v322
    %1350 = vmatpush.msra.mxu0 %v318
    %1351 = vmatpush.msra.mxu0 %v314
    %1352 = vmatpush.msra.mxu0 %v310
    %1353 = vmatpush.msra.mxu0 %v306
    %1354 = vmatpush.msra.mxu0 %v302
    %1355 = vmatpush.msra.mxu0 %v298
    %1356 = vmatmul.f32.gmra.mxu0 %v1161
    %v1357 = vpop.f32.mrf.mxu0
    %v1358 = vadd.f32 0.0, %v1357
    %1359 = vdwg.mxu0
    %1360 = vmatpush.msra.mxu0 %v359
    %1361 = vmatpush.msra.mxu0 %v355
    %1362 = vmatpush.msra.mxu0 %v351
    %1363 = vmatpush.msra.mxu0 %v347
    %1364 = vmatpush.msra.mxu0 %v343
    %1365 = vmatpush.msra.mxu0 %v339
    %1366 = vmatpush.msra.mxu0 %v335
    %1367 = vmatpush.msra.mxu0 %v331
    %1368 = vmatpush.msra.mxu0 %v327
    %1369 = vmatpush.msra.mxu0 %v323
    %1370 = vmatpush.msra.mxu0 %v319
    %1371 = vmatpush.msra.mxu0 %v315
    %1372 = vmatpush.msra.mxu0 %v311
    %1373 = vmatpush.msra.mxu0 %v307
    %1374 = vmatpush.msra.mxu0 %v303
    %1375 = vmatpush.msra.mxu0 %v299
    %1376 = vmatmul.f32.gmra.mxu0 %v1161
    %v1377 = vpop.f32.mrf.mxu0
    %v1378 = vadd.f32 0.0, %v1377
    %1379 = vdwg.mxu0
    %1380 = vmatpush.msra.mxu0 %v360
    %1381 = vmatpush.msra.mxu0 %v356
    %1382 = vmatpush.msra.mxu0 %v352
    %1383 = vmatpush.msra.mxu0 %v348
    %1384 = vmatpush.msra.mxu0 %v344
    %1385 = vmatpush.msra.mxu0 %v340
    %1386 = vmatpush.msra.mxu0 %v336
    %1387 = vmatpush.msra.mxu0 %v332
    %1388 = vmatpush.msra.mxu0 %v328
    %1389 = vmatpush.msra.mxu0 %v324
    %1390 = vmatpush.msra.mxu0 %v320
    %1391 = vmatpush.msra.mxu0 %v316
    %1392 = vmatpush.msra.mxu0 %v312
    %1393 = vmatpush.msra.mxu0 %v308
    %1394 = vmatpush.msra.mxu0 %v304
    %1395 = vmatpush.msra.mxu0 %v300
    %1396 = vmatmul.f32.gmra.mxu0 %v1161
    %v1397 = vpop.f32.mrf.mxu0
    %v1398 = vadd.f32 0.0, %v1397
    %1399 = vdwg.mxu0
    %1400 = vmatpush.msra.mxu0 %v361
    %1401 = vmatpush.msra.mxu0 %v357
    %1402 = vmatpush.msra.mxu0 %v353
    %1403 = vmatpush.msra.mxu0 %v349
    %1404 = vmatpush.msra.mxu0 %v345
    %1405 = vmatpush.msra.mxu0 %v341
    %1406 = vmatpush.msra.mxu0 %v337
    %1407 = vmatpush.msra.mxu0 %v333
    %1408 = vmatpush.msra.mxu0 %v329
    %1409 = vmatpush.msra.mxu0 %v325
    %1410 = vmatpush.msra.mxu0 %v321
    %1411 = vmatpush.msra.mxu0 %v317
    %1412 = vmatpush.msra.mxu0 %v313
    %1413 = vmatpush.msra.mxu0 %v309
    %1414 = vmatpush.msra.mxu0 %v305
    %1415 = vmatpush.msra.mxu0 %v301
    %1416 = vmatmul.f32.gmra.mxu0 %v1161
    %v1417 = vpop.f32.mrf.mxu0
    %v1418 = vadd.f32 0.0, %v1417
    %1419 = vdwg.mxu0
    %v1420 = vadd.f32 %v161, %v1358
    %v1421 = vadd.f32 %v202, %v1378
    %v1422 = vadd.f32 %v243, %v1398
    %v1423 = vadd.f32 %v284, %v1418
    %v1424 = vmul.f32 %v1420, 0.5
    %v1425 = vtanh.pop %v1424
    %v1426 = vmul.f32 %v1425, 0.5
    %v1427 = vadd.f32 %v1426, 0.5
    %v1428 = vmul.f32 %v1421, 0.5
    %v1429 = vtanh.pop %v1428
    %v1430 = vmul.f32 %v1429, 0.5
    %v1431 = vadd.f32 %v1430, 0.5
    %v1432 = vtanh.pop %v1422
    %v1433 = vmul.f32 %v1423, 0.5
    %v1434 = vtanh.pop %v1433
    %v1435 = vmul.f32 %v1434, 0.5
    %v1436 = vadd.f32 %v1435, 0.5
    %v1437 = vmul.f32 %v1431, %v1159
    %v1438 = vmul.f32 %v1427, %v1432
    %v1439 = vadd.f32 %v1437, %v1438
    %v1440 = vtanh.pop %v1439
    %v1441 = vmul.f32 %v1436, %v1440
    %1442 = vmatpush.msra.mxu0 %v422
    %1443 = vmatpush.msra.mxu0 %v418
    %1444 = vmatpush.msra.mxu0 %v414
    %1445 = vmatpush.msra.mxu0 %v410
    %1446 = vmatpush.msra.mxu0 %v406
    %1447 = vmatpush.msra.mxu0 %v402
    %1448 = vmatpush.msra.mxu0 %v398
    %1449 = vmatpush.msra.mxu0 %v394
    %1450 = vmatpush.msra.mxu0 %v390
    %1451 = vmatpush.msra.mxu0 %v386
    %1452 = vmatpush.msra.mxu0 %v382
    %1453 = vmatpush.msra.mxu0 %v378
    %1454 = vmatpush.msra.mxu0 %v374
    %1455 = vmatpush.msra.mxu0 %v370
    %1456 = vmatpush.msra.mxu0 %v366
    %1457 = vmatpush.msra.mxu0 %v362
    %1458 = vmatmul.f32.gmra.mxu0 %v1441
    %v1459 = vpop.f32.mrf.mxu0
    %v1460 = vadd.f32 %v492, %v1459
    %1461 = vdwg.mxu0
    %1462 = vmatpush.msra.mxu0 %v486
    %1463 = vmatpush.msra.mxu0 %v482
    %1464 = vmatpush.msra.mxu0 %v478
    %1465 = vmatpush.msra.mxu0 %v474
    %1466 = vmatpush.msra.mxu0 %v470
    %1467 = vmatpush.msra.mxu0 %v466
    %1468 = vmatpush.msra.mxu0 %v462
    %1469 = vmatpush.msra.mxu0 %v458
    %1470 = vmatpush.msra.mxu0 %v454
    %1471 = vmatpush.msra.mxu0 %v450
    %1472 = vmatpush.msra.mxu0 %v446
    %1473 = vmatpush.msra.mxu0 %v442
    %1474 = vmatpush.msra.mxu0 %v438
    %1475 = vmatpush.msra.mxu0 %v434
    %1476 = vmatpush.msra.mxu0 %v430
    %1477 = vmatpush.msra.mxu0 %v426
    %1478 = vmatmul.f32.gmra.mxu0 %v1339
    %v1479 = vpop.f32.mrf.mxu0
    %v1480 = vadd.f32 %v1460, %v1479
    %1481 = vdwg.mxu0
    %1482 = vmatpush.msra.mxu0 %v423
    %1483 = vmatpush.msra.mxu0 %v419
    %1484 = vmatpush.msra.mxu0 %v415
    %1485 = vmatpush.msra.mxu0 %v411
    %1486 = vmatpush.msra.mxu0 %v407
    %1487 = vmatpush.msra.mxu0 %v403
    %1488 = vmatpush.msra.mxu0 %v399
    %1489 = vmatpush.msra.mxu0 %v395
    %1490 = vmatpush.msra.mxu0 %v391
    %1491 = vmatpush.msra.mxu0 %v387
    %1492 = vmatpush.msra.mxu0 %v383
    %1493 = vmatpush.msra.mxu0 %v379
    %1494 = vmatpush.msra.mxu0 %v375
    %1495 = vmatpush.msra.mxu0 %v371
    %1496 = vmatpush.msra.mxu0 %v367
    %1497 = vmatpush.msra.mxu0 %v363
    %1498 = vmatmul.f32.gmra.mxu0 %v1441
    %v1499 = vpop.f32.mrf.mxu0
    %v1500 = vadd.f32 %v493, %v1499
    %1501 = vdwg.mxu0
    %1502 = vmatpush.msra.mxu0 %v487
    %1503 = vmatpush.msra.mxu0 %v483
    %1504 = vmatpush.msra.mxu0 %v479
    %1505 = vmatpush.msra.mxu0 %v475
    %1506 = vmatpush.msra.mxu0 %v471
    %1507 = vmatpush.msra.mxu0 %v467
    %1508 = vmatpush.msra.mxu0 %v463
    %1509 = vmatpush.msra.mxu0 %v459
    %1510 = vmatpush.msra.mxu0 %v455
    %1511 = vmatpush.msra.mxu0 %v451
    %1512 = vmatpush.msra.mxu0 %v447
    %1513 = vmatpush.msra.mxu0 %v443
    %1514 = vmatpush.msra.mxu0 %v439
    %1515 = vmatpush.msra.mxu0 %v435
    %1516 = vmatpush.msra.mxu0 %v431
    %1517 = vmatpush.msra.mxu0 %v427
    %1518 = vmatmul.f32.gmra.mxu0 %v1339
    %v1519 = vpop.f32.mrf.mxu0
    %v1520 = vadd.f32 %v1500, %v1519
    %1521 = vdwg.mxu0
    %1522 = vmatpush.msra.mxu0 %v424
    %1523 = vmatpush.msra.mxu0 %v420
    %1524 = vmatpush.msra.mxu0 %v416
    %1525 = vmatpush.msra.mxu0 %v412
    %1526 = vmatpush.msra.mxu0 %v408
    %1527 = vmatpush.msra.mxu0 %v404
    %1528 = vmatpush.msra.mxu0 %v400
    %1529 = vmatpush.msra.mxu0 %v396
    %1530 = vmatpush.msra.mxu0 %v392
    %1531 = vmatpush.msra.mxu0 %v388
    %1532 = vmatpush.msra.mxu0 %v384
    %1533 = vmatpush.msra.mxu0 %v380
    %1534 = vmatpush.msra.mxu0 %v376
    %1535 = vmatpush.msra.mxu0 %v372
    %1536 = vmatpush.msra.mxu0 %v368
    %1537 = vmatpush.msra.mxu0 %v364
    %1538 = vmatmul.f32.gmra.mxu0 %v1441
    %v1539 = vpop.f32.mrf.mxu0
    %v1540 = vadd.f32 %v494, %v1539
    %1541 = vdwg.mxu0
    %1542 = vmatpush.msra.mxu0 %v488
    %1543 = vmatpush.msra.mxu0 %v484
    %1544 = vmatpush.msra.mxu0 %v480
    %1545 = vmatpush.msra.mxu0 %v476
    %1546 = vmatpush.msra.mxu0 %v472
    %1547 = vmatpush.msra.mxu0 %v468
    %1548 = vmatpush.msra.mxu0 %v464
    %1549 = vmatpush.msra.mxu0 %v460
    %1550 = vmatpush.msra.mxu0 %v456
    %1551 = vmatpush.msra.mxu0 %v452
    %1552 = vmatpush.msra.mxu0 %v448
    %1553 = vmatpush.msra.mxu0 %v444
    %1554 = vmatpush.msra.mxu0 %v440
    %1555 = vmatpush.msra.mxu0 %v436
    %1556 = vmatpush.msra.mxu0 %v432
    %1557 = vmatpush.msra.mxu0 %v428
    %1558 = vmatmul.f32.gmra.mxu0 %v1339
    %v1559 = vpop.f32.mrf.mxu0
    %v1560 = vadd.f32 %v1540, %v1559
    %1561 = vdwg.mxu0
    %1562 = vmatpush.msra.mxu0 %v425
    %1563 = vmatpush.msra.mxu0 %v421
    %1564 = vmatpush.msra.mxu0 %v417
    %1565 = vmatpush.msra.mxu0 %v413
    %1566 = vmatpush.msra.mxu0 %v409
    %1567 = vmatpush.msra.mxu0 %v405
    %1568 = vmatpush.msra.mxu0 %v401
    %1569 = vmatpush.msra.mxu0 %v397
    %1570 = vmatpush.msra.mxu0 %v393
    %1571 = vmatpush.msra.mxu0 %v389
    %1572 = vmatpush.msra.mxu0 %v385
    %1573 = vmatpush.msra.mxu0 %v381
    %1574 = vmatpush.msra.mxu0 %v377
    %1575 = vmatpush.msra.mxu0 %v373
    %1576 = vmatpush.msra.mxu0 %v369
    %1577 = vmatpush.msra.mxu0 %v365
    %1578 = vmatmul.f32.gmra.mxu0 %v1441
    %v1579 = vpop.f32.mrf.mxu0
    %v1580 = vadd.f32 %v495, %v1579
    %1581 = vdwg.mxu0
    %1582 = vmatpush.msra.mxu0 %v489
    %1583 = vmatpush.msra.mxu0 %v485
    %1584 = vmatpush.msra.mxu0 %v481
    %1585 = vmatpush.msra.mxu0 %v477
    %1586 = vmatpush.msra.mxu0 %v473
    %1587 = vmatpush.msra.mxu0 %v469
    %1588 = vmatpush.msra.mxu0 %v465
    %1589 = vmatpush.msra.mxu0 %v461
    %1590 = vmatpush.msra.mxu0 %v457
    %1591 = vmatpush.msra.mxu0 %v453
    %1592 = vmatpush.msra.mxu0 %v449
    %1593 = vmatpush.msra.mxu0 %v445
    %1594 = vmatpush.msra.mxu0 %v441
    %1595 = vmatpush.msra.mxu0 %v437
    %1596 = vmatpush.msra.mxu0 %v433
    %1597 = vmatpush.msra.mxu0 %v429
    %1598 = vmatmul.f32.gmra.mxu0 %v1339
    %v1599 = vpop.f32.mrf.mxu0
    %v1600 = vadd.f32 %v1580, %v1599
    %1601 = vdwg.mxu0
    %v1602 = vmul.f32 %v1480, 0.5
    %v1603 = vtanh.pop %v1602
    %v1604 = vmul.f32 %v1603, 0.5
    %v1605 = vadd.f32 %v1604, 0.5
    %v1606 = vmul.f32 %v1520, 0.5
    %v1607 = vtanh.pop %v1606
    %v1608 = vmul.f32 %v1607, 0.5
    %v1609 = vadd.f32 %v1608, 0.5
    %v1610 = vtanh.pop %v1560
    %v1611 = vmul.f32 %v1600, 0.5
    %v1612 = vtanh.pop %v1611
    %v1613 = vmul.f32 %v1612, 0.5
    %v1614 = vadd.f32 %v1613, 0.5
    %v1615 = vmul.f32 %v1609, %v1337
    %v1616 = vmul.f32 %v1605, %v1610
    %v1617 = vadd.f32 %v1615, %v1616
    %v1618 = vtanh.pop %v1617
    %v1619 = vmul.f32 %v1614, %v1618
    %1620 = vmatpush.msra.mxu0 %v358
    %1621 = vmatpush.msra.mxu0 %v354
    %1622 = vmatpush.msra.mxu0 %v350
    %1623 = vmatpush.msra.mxu0 %v346
    %1624 = vmatpush.msra.mxu0 %v342
    %1625 = vmatpush.msra.mxu0 %v338
    %1626 = vmatpush.msra.mxu0 %v334
    %1627 = vmatpush.msra.mxu0 %v330
    %1628 = vmatpush.msra.mxu0 %v326
    %1629 = vmatpush.msra.mxu0 %v322
    %1630 = vmatpush.msra.mxu0 %v318
    %1631 = vmatpush.msra.mxu0 %v314
    %1632 = vmatpush.msra.mxu0 %v310
    %1633 = vmatpush.msra.mxu0 %v306
    %1634 = vmatpush.msra.mxu0 %v302
    %1635 = vmatpush.msra.mxu0 %v298
    %1636 = vmatmul.f32.gmra.mxu0 %v1441
    %v1637 = vpop.f32.mrf.mxu0
    %v1638 = vadd.f32 0.0, %v1637
    %1639 = vdwg.mxu0
    %1640 = vmatpush.msra.mxu0 %v359
    %1641 = vmatpush.msra.mxu0 %v355
    %1642 = vmatpush.msra.mxu0 %v351
    %1643 = vmatpush.msra.mxu0 %v347
    %1644 = vmatpush.msra.mxu0 %v343
    %1645 = vmatpush.msra.mxu0 %v339
    %1646 = vmatpush.msra.mxu0 %v335
    %1647 = vmatpush.msra.mxu0 %v331
    %1648 = vmatpush.msra.mxu0 %v327
    %1649 = vmatpush.msra.mxu0 %v323
    %1650 = vmatpush.msra.mxu0 %v319
    %1651 = vmatpush.msra.mxu0 %v315
    %1652 = vmatpush.msra.mxu0 %v311
    %1653 = vmatpush.msra.mxu0 %v307
    %1654 = vmatpush.msra.mxu0 %v303
    %1655 = vmatpush.msra.mxu0 %v299
    %1656 = vmatmul.f32.gmra.mxu0 %v1441
    %v1657 = vpop.f32.mrf.mxu0
    %v1658 = vadd.f32 0.0, %v1657
    %1659 = vdwg.mxu0
    %1660 = vmatpush.msra.mxu0 %v360
    %1661 = vmatpush.msra.mxu0 %v356
    %1662 = vmatpush.msra.mxu0 %v352
    %1663 = vmatpush.msra.mxu0 %v348
    %1664 = vmatpush.msra.mxu0 %v344
    %1665 = vmatpush.msra.mxu0 %v340
    %1666 = vmatpush.msra.mxu0 %v336
    %1667 = vmatpush.msra.mxu0 %v332
    %1668 = vmatpush.msra.mxu0 %v328
    %1669 = vmatpush.msra.mxu0 %v324
    %1670 = vmatpush.msra.mxu0 %v320
    %1671 = vmatpush.msra.mxu0 %v316
    %1672 = vmatpush.msra.mxu0 %v312
    %1673 = vmatpush.msra.mxu0 %v308
    %1674 = vmatpush.msra.mxu0 %v304
    %1675 = vmatpush.msra.mxu0 %v300
    %1676 = vmatmul.f32.gmra.mxu0 %v1441
    %v1677 = vpop.f32.mrf.mxu0
    %v1678 = vadd.f32 0.0, %v1677
    %1679 = vdwg.mxu0
    %1680 = vmatpush.msra.mxu0 %v361
    %1681 = vmatpush.msra.mxu0 %v357
    %1682 = vmatpush.msra.mxu0 %v353
    %1683 = vmatpush.msra.mxu0 %v349
    %1684 = vmatpush.msra.mxu0 %v345
    %1685 = vmatpush.msra.mxu0 %v341
    %1686 = vmatpush.msra.mxu0 %v337
    %1687 = vmatpush.msra.mxu0 %v333
    %1688 = vmatpush.msra.mxu0 %v329
    %1689 = vmatpush.msra.mxu0 %v325
    %1690 = vmatpush.msra.mxu0 %v321
    %1691 = vmatpush.msra.mxu0 %v317
    %1692 = vmatpush.msra.mxu0 %v313
    %1693 = vmatpush.msra.mxu0 %v309
    %1694 = vmatpush.msra.mxu0 %v305
    %1695 = vmatpush.msra.mxu0 %v301
    %1696 = vmatmul.f32.gmra.mxu0 %v1441
    %v1697 = vpop.f32.mrf.mxu0
    %v1698 = vadd.f32 0.0, %v1697
    %1699 = vdwg.mxu0
    %v1700 = vadd.f32 %v164, %v1638
    %v1701 = vadd.f32 %v205, %v1658
    %v1702 = vadd.f32 %v246, %v1678
    %v1703 = vadd.f32 %v287, %v1698
    %v1704 = vmul.f32 %v1700, 0.5
    %v1705 = vtanh.pop %v1704
    %v1706 = vmul.f32 %v1705, 0.5
    %v1707 = vadd.f32 %v1706, 0.5
    %v1708 = vmul.f32 %v1701, 0.5
    %v1709 = vtanh.pop %v1708
    %v1710 = vmul.f32 %v1709, 0.5
    %v1711 = vadd.f32 %v1710, 0.5
    %v1712 = vtanh.pop %v1702
    %v1713 = vmul.f32 %v1703, 0.5
    %v1714 = vtanh.pop %v1713
    %v1715 = vmul.f32 %v1714, 0.5
    %v1716 = vadd.f32 %v1715, 0.5
    %v1717 = vmul.f32 %v1711, %v1439
    %v1718 = vmul.f32 %v1707, %v1712
    %v1719 = vadd.f32 %v1717, %v1718
    %v1720 = vtanh.pop %v1719
    %v1721 = vmul.f32 %v1716, %v1720
    %1722 = vmatpush.msra.mxu0 %v422
    %1723 = vmatpush.msra.mxu0 %v418
    %1724 = vmatpush.msra.mxu0 %v414
    %1725 = vmatpush.msra.mxu0 %v410
    %1726 = vmatpush.msra.mxu0 %v406
    %1727 = vmatpush.msra.mxu0 %v402
    %1728 = vmatpush.msra.mxu0 %v398
    %1729 = vmatpush.msra.mxu0 %v394
    %1730 = vmatpush.msra.mxu0 %v390
    %1731 = vmatpush.msra.mxu0 %v386
    %1732 = vmatpush.msra.mxu0 %v382
    %1733 = vmatpush.msra.mxu0 %v378
    %1734 = vmatpush.msra.mxu0 %v374
    %1735 = vmatpush.msra.mxu0 %v370
    %1736 = vmatpush.msra.mxu0 %v366
    %1737 = vmatpush.msra.mxu0 %v362
    %1738 = vmatmul.f32.gmra.mxu0 %v1721
    %v1739 = vpop.f32.mrf.mxu0
    %v1740 = vadd.f32 %v492, %v1739
    %1741 = vdwg.mxu0
    %1742 = vmatpush.msra.mxu0 %v486
    %1743 = vmatpush.msra.mxu0 %v482
    %1744 = vmatpush.msra.mxu0 %v478
    %1745 = vmatpush.msra.mxu0 %v474
    %1746 = vmatpush.msra.mxu0 %v470
    %1747 = vmatpush.msra.mxu0 %v466
    %1748 = vmatpush.msra.mxu0 %v462
    %1749 = vmatpush.msra.mxu0 %v458
    %1750 = vmatpush.msra.mxu0 %v454
    %1751 = vmatpush.msra.mxu0 %v450
    %1752 = vmatpush.msra.mxu0 %v446
    %1753 = vmatpush.msra.mxu0 %v442
    %1754 = vmatpush.msra.mxu0 %v438
    %1755 = vmatpush.msra.mxu0 %v434
    %1756 = vmatpush.msra.mxu0 %v430
    %1757 = vmatpush.msra.mxu0 %v426
    %1758 = vmatmul.f32.gmra.mxu0 %v1619
    %v1759 = vpop.f32.mrf.mxu0
    %v1760 = vadd.f32 %v1740, %v1759
    %1761 = vdwg.mxu0
    %1762 = vmatpush.msra.mxu0 %v423
    %1763 = vmatpush.msra.mxu0 %v419
    %1764 = vmatpush.msra.mxu0 %v415
    %1765 = vmatpush.msra.mxu0 %v411
    %1766 = vmatpush.msra.mxu0 %v407
    %1767 = vmatpush.msra.mxu0 %v403
    %1768 = vmatpush.msra.mxu0 %v399
    %1769 = vmatpush.msra.mxu0 %v395
    %1770 = vmatpush.msra.mxu0 %v391
    %1771 = vmatpush.msra.mxu0 %v387
    %1772 = vmatpush.msra.mxu0 %v383
    %1773 = vmatpush.msra.mxu0 %v379
    %1774 = vmatpush.msra.mxu0 %v375
    %1775 = vmatpush.msra.mxu0 %v371
    %1776 = vmatpush.msra.mxu0 %v367
    %1777 = vmatpush.msra.mxu0 %v363
    %1778 = vmatmul.f32.gmra.mxu0 %v1721
    %v1779 = vpop.f32.mrf.mxu0
    %v1780 = vadd.f32 %v493, %v1779
    %1781 = vdwg.mxu0
    %1782 = vmatpush.msra.mxu0 %v487
    %1783 = vmatpush.msra.mxu0 %v483
    %1784 = vmatpush.msra.mxu0 %v479
    %1785 = vmatpush.msra.mxu0 %v475
    %1786 = vmatpush.msra.mxu0 %v471
    %1787 = vmatpush.msra.mxu0 %v467
    %1788 = vmatpush.msra.mxu0 %v463
    %1789 = vmatpush.msra.mxu0 %v459
    %1790 = vmatpush.msra.mxu0 %v455
    %1791 = vmatpush.msra.mxu0 %v451
    %1792 = vmatpush.msra.mxu0 %v447
    %1793 = vmatpush.msra.mxu0 %v443
    %1794 = vmatpush.msra.mxu0 %v439
    %1795 = vmatpush.msra.mxu0 %v435
    %1796 = vmatpush.msra.mxu0 %v431
    %1797 = vmatpush.msra.mxu0 %v427
    %1798 = vmatmul.f32.gmra.mxu0 %v1619
    %v1799 = vpop.f32.mrf.mxu0
    %v1800 = vadd.f32 %v1780, %v1799
    %1801 = vdwg.mxu0
    %1802 = vmatpush.msra.mxu0 %v424
    %1803 = vmatpush.msra.mxu0 %v420
    %1804 = vmatpush.msra.mxu0 %v416
    %1805 = vmatpush.msra.mxu0 %v412
    %1806 = vmatpush.msra.mxu0 %v408
    %1807 = vmatpush.msra.mxu0 %v404
    %1808 = vmatpush.msra.mxu0 %v400
    %1809 = vmatpush.msra.mxu0 %v396
    %1810 = vmatpush.msra.mxu0 %v392
    %1811 = vmatpush.msra.mxu0 %v388
    %1812 = vmatpush.msra.mxu0 %v384
    %1813 = vmatpush.msra.mxu0 %v380
    %1814 = vmatpush.msra.mxu0 %v376
    %1815 = vmatpush.msra.mxu0 %v372
    %1816 = vmatpush.msra.mxu0 %v368
    %1817 = vmatpush.msra.mxu0 %v364
    %1818 = vmatmul.f32.gmra.mxu0 %v1721
    %v1819 = vpop.f32.mrf.mxu0
    %v1820 = vadd.f32 %v494, %v1819
    %1821 = vdwg.mxu0
    %1822 = vmatpush.msra.mxu0 %v488
    %1823 = vmatpush.msra.mxu0 %v484
    %1824 = vmatpush.msra.mxu0 %v480
    %1825 = vmatpush.msra.mxu0 %v476
    %1826 = vmatpush.msra.mxu0 %v472
    %1827 = vmatpush.msra.mxu0 %v468
    %1828 = vmatpush.msra.mxu0 %v464
    %1829 = vmatpush.msra.mxu0 %v460
    %1830 = vmatpush.msra.mxu0 %v456
    %1831 = vmatpush.msra.mxu0 %v452
    %1832 = vmatpush.msra.mxu0 %v448
    %1833 = vmatpush.msra.mxu0 %v444
    %1834 = vmatpush.msra.mxu0 %v440
    %1835 = vmatpush.msra.mxu0 %v436
    %1836 = vmatpush.msra.mxu0 %v432
    %1837 = vmatpush.msra.mxu0 %v428
    %1838 = vmatmul.f32.gmra.mxu0 %v1619
    %v1839 = vpop.f32.mrf.mxu0
    %v1840 = vadd.f32 %v1820, %v1839
    %1841 = vdwg.mxu0
    %1842 = vmatpush.msra.mxu0 %v425
    %1843 = vmatpush.msra.mxu0 %v421
    %1844 = vmatpush.msra.mxu0 %v417
    %1845 = vmatpush.msra.mxu0 %v413
    %1846 = vmatpush.msra.mxu0 %v409
    %1847 = vmatpush.msra.mxu0 %v405
    %1848 = vmatpush.msra.mxu0 %v401
    %1849 = vmatpush.msra.mxu0 %v397
    %1850 = vmatpush.msra.mxu0 %v393
    %1851 = vmatpush.msra.mxu0 %v389
    %1852 = vmatpush.msra.mxu0 %v385
    %1853 = vmatpush.msra.mxu0 %v381
    %1854 = vmatpush.msra.mxu0 %v377
    %1855 = vmatpush.msra.mxu0 %v373
    %1856 = vmatpush.msra.mxu0 %v369
    %1857 = vmatpush.msra.mxu0 %v365
    %1858 = vmatmul.f32.gmra.mxu0 %v1721
    %v1859 = vpop.f32.mrf.mxu0
    %v1860 = vadd.f32 %v495, %v1859
    %1861 = vdwg.mxu0
    %1862 = vmatpush.msra.mxu0 %v489
    %1863 = vmatpush.msra.mxu0 %v485
    %1864 = vmatpush.msra.mxu0 %v481
    %1865 = vmatpush.msra.mxu0 %v477
    %1866 = vmatpush.msra.mxu0 %v473
    %1867 = vmatpush.msra.mxu0 %v469
    %1868 = vmatpush.msra.mxu0 %v465
    %1869 = vmatpush.msra.mxu0 %v461
    %1870 = vmatpush.msra.mxu0 %v457
    %1871 = vmatpush.msra.mxu0 %v453
    %1872 = vmatpush.msra.mxu0 %v449
    %1873 = vmatpush.msra.mxu0 %v445
    %1874 = vmatpush.msra.mxu0 %v441
    %1875 = vmatpush.msra.mxu0 %v437
    %1876 = vmatpush.msra.mxu0 %v433
    %1877 = vmatpush.msra.mxu0 %v429
    %1878 = vmatmul.f32.gmra.mxu0 %v1619
    %v1879 = vpop.f32.mrf.mxu0
    %v1880 = vadd.f32 %v1860, %v1879
    %1881 = vdwg.mxu0
    %v1882 = vmul.f32 %v1760, 0.5
    %v1883 = vtanh.pop %v1882
    %v1884 = vmul.f32 %v1883, 0.5
    %v1885 = vadd.f32 %v1884, 0.5
    %v1886 = vmul.f32 %v1800, 0.5
    %v1887 = vtanh.pop %v1886
    %v1888 = vmul.f32 %v1887, 0.5
    %v1889 = vadd.f32 %v1888, 0.5
    %v1890 = vtanh.pop %v1840
    %v1891 = vmul.f32 %v1880, 0.5
    %v1892 = vtanh.pop %v1891
    %v1893 = vmul.f32 %v1892, 0.5
    %v1894 = vadd.f32 %v1893, 0.5
    %v1895 = vmul.f32 %v1889, %v1617
    %v1896 = vmul.f32 %v1885, %v1890
    %v1897 = vadd.f32 %v1895, %v1896
    %v1898 = vtanh.pop %v1897
    %v1899 = vmul.f32 %v1894, %v1898
    %1900 = vmatpush.msra.mxu0 %v358
    %1901 = vmatpush.msra.mxu0 %v354
    %1902 = vmatpush.msra.mxu0 %v350
    %1903 = vmatpush.msra.mxu0 %v346
    %1904 = vmatpush.msra.mxu0 %v342
    %1905 = vmatpush.msra.mxu0 %v338
    %1906 = vmatpush.msra.mxu0 %v334
    %1907 = vmatpush.msra.mxu0 %v330
    %1908 = vmatpush.msra.mxu0 %v326
    %1909 = vmatpush.msra.mxu0 %v322
    %1910 = vmatpush.msra.mxu0 %v318
    %1911 = vmatpush.msra.mxu0 %v314
    %1912 = vmatpush.msra.mxu0 %v310
    %1913 = vmatpush.msra.mxu0 %v306
    %1914 = vmatpush.msra.mxu0 %v302
    %1915 = vmatpush.msra.mxu0 %v298
    %1916 = vmatmul.f32.gmra.mxu0 %v1721
    %v1917 = vpop.f32.mrf.mxu0
    %v1918 = vadd.f32 0.0, %v1917
    %1919 = vdwg.mxu0
    %1920 = vmatpush.msra.mxu0 %v359
    %1921 = vmatpush.msra.mxu0 %v355
    %1922 = vmatpush.msra.mxu0 %v351
    %1923 = vmatpush.msra.mxu0 %v347
    %1924 = vmatpush.msra.mxu0 %v343
    %1925 = vmatpush.msra.mxu0 %v339
    %1926 = vmatpush.msra.mxu0 %v335
    %1927 = vmatpush.msra.mxu0 %v331
    %1928 = vmatpush.msra.mxu0 %v327
    %1929 = vmatpush.msra.mxu0 %v323
    %1930 = vmatpush.msra.mxu0 %v319
    %1931 = vmatpush.msra.mxu0 %v315
    %1932 = vmatpush.msra.mxu0 %v311
    %1933 = vmatpush.msra.mxu0 %v307
    %1934 = vmatpush.msra.mxu0 %v303
    %1935 = vmatpush.msra.mxu0 %v299
    %1936 = vmatmul.f32.gmra.mxu0 %v1721
    %v1937 = vpop.f32.mrf.mxu0
    %v1938 = vadd.f32 0.0, %v1937
    %1939 = vdwg.mxu0
    %1940 = vmatpush.msra.mxu0 %v360
    %1941 = vmatpush.msra.mxu0 %v356
    %1942 = vmatpush.msra.mxu0 %v352
    %1943 = vmatpush.msra.mxu0 %v348
    %1944 = vmatpush.msra.mxu0 %v344
    %1945 = vmatpush.msra.mxu0 %v340
    %1946 = vmatpush.msra.mxu0 %v336
    %1947 = vmatpush.msra.mxu0 %v332
    %1948 = vmatpush.msra.mxu0 %v328
    %1949 = vmatpush.msra.mxu0 %v324
    %1950 = vmatpush.msra.mxu0 %v320
    %1951 = vmatpush.msra.mxu0 %v316
    %1952 = vmatpush.msra.mxu0 %v312
    %1953 = vmatpush.msra.mxu0 %v308
    %1954 = vmatpush.msra.mxu0 %v304
    %1955 = vmatpush.msra.mxu0 %v300
    %1956 = vmatmul.f32.gmra.mxu0 %v1721
    %v1957 = vpop.f32.mrf.mxu0
    %v1958 = vadd.f32 0.0, %v1957
    %1959 = vdwg.mxu0
    %1960 = vmatpush.msra.mxu0 %v361
    %1961 = vmatpush.msra.mxu0 %v357
    %1962 = vmatpush.msra.mxu0 %v353
    %1963 = vmatpush.msra.mxu0 %v349
    %1964 = vmatpush.msra.mxu0 %v345
    %1965 = vmatpush.msra.mxu0 %v341
    %1966 = vmatpush.msra.mxu0 %v337
    %1967 = vmatpush.msra.mxu0 %v333
    %1968 = vmatpush.msra.mxu0 %v329
    %1969 = vmatpush.msra.mxu0 %v325
    %1970 = vmatpush.msra.mxu0 %v321
    %1971 = vmatpush.msra.mxu0 %v317
    %1972 = vmatpush.msra.mxu0 %v313
    %1973 = vmatpush.msra.mxu0 %v309
    %1974 = vmatpush.msra.mxu0 %v305
    %1975 = vmatpush.msra.mxu0 %v301
    %1976 = vmatmul.f32.gmra.mxu0 %v1721
    %v1977 = vpop.f32.mrf.mxu0
    %v1978 = vadd.f32 0.0, %v1977
    %1979 = vdwg.mxu0
    %v1980 = vadd.f32 %v167, %v1918
    %v1981 = vadd.f32 %v208, %v1938
    %v1982 = vadd.f32 %v249, %v1958
    %v1983 = vadd.f32 %v290, %v1978
    %v1984 = vmul.f32 %v1980, 0.5
    %v1985 = vtanh.pop %v1984
    %v1986 = vmul.f32 %v1985, 0.5
    %v1987 = vadd.f32 %v1986, 0.5
    %v1988 = vmul.f32 %v1981, 0.5
    %v1989 = vtanh.pop %v1988
    %v1990 = vmul.f32 %v1989, 0.5
    %v1991 = vadd.f32 %v1990, 0.5
    %v1992 = vtanh.pop %v1982
    %v1993 = vmul.f32 %v1983, 0.5
    %v1994 = vtanh.pop %v1993
    %v1995 = vmul.f32 %v1994, 0.5
    %v1996 = vadd.f32 %v1995, 0.5
    %v1997 = vmul.f32 %v1991, %v1719
    %v1998 = vmul.f32 %v1987, %v1992
    %v1999 = vadd.f32 %v1997, %v1998
    %v2000 = vtanh.pop %v1999
    %v2001 = vmul.f32 %v1996, %v2000
    %2002 = vmatpush.msra.mxu0 %v422
    %2003 = vmatpush.msra.mxu0 %v418
    %2004 = vmatpush.msra.mxu0 %v414
    %2005 = vmatpush.msra.mxu0 %v410
    %2006 = vmatpush.msra.mxu0 %v406
    %2007 = vmatpush.msra.mxu0 %v402
    %2008 = vmatpush.msra.mxu0 %v398
    %2009 = vmatpush.msra.mxu0 %v394
    %2010 = vmatpush.msra.mxu0 %v390
    %2011 = vmatpush.msra.mxu0 %v386
    %2012 = vmatpush.msra.mxu0 %v382
    %2013 = vmatpush.msra.mxu0 %v378
    %2014 = vmatpush.msra.mxu0 %v374
    %2015 = vmatpush.msra.mxu0 %v370
    %2016 = vmatpush.msra.mxu0 %v366
    %2017 = vmatpush.msra.mxu0 %v362
    %2018 = vmatmul.f32.gmra.mxu0 %v2001
    %v2019 = vpop.f32.mrf.mxu0
    %v2020 = vadd.f32 %v492, %v2019
    %2021 = vdwg.mxu0
    %2022 = vmatpush.msra.mxu0 %v486
    %2023 = vmatpush.msra.mxu0 %v482
    %2024 = vmatpush.msra.mxu0 %v478
    %2025 = vmatpush.msra.mxu0 %v474
    %2026 = vmatpush.msra.mxu0 %v470
    %2027 = vmatpush.msra.mxu0 %v466
    %2028 = vmatpush.msra.mxu0 %v462
    %2029 = vmatpush.msra.mxu0 %v458
    %2030 = vmatpush.msra.mxu0 %v454
    %2031 = vmatpush.msra.mxu0 %v450
    %2032 = vmatpush.msra.mxu0 %v446
    %2033 = vmatpush.msra.mxu0 %v442
    %2034 = vmatpush.msra.mxu0 %v438
    %2035 = vmatpush.msra.mxu0 %v434
    %2036 = vmatpush.msra.mxu0 %v430
    %2037 = vmatpush.msra.mxu0 %v426
    %2038 = vmatmul.f32.gmra.mxu0 %v1899
    %v2039 = vpop.f32.mrf.mxu0
    %v2040 = vadd.f32 %v2020, %v2039
    %2041 = vdwg.mxu0
    %2042 = vmatpush.msra.mxu0 %v423
    %2043 = vmatpush.msra.mxu0 %v419
    %2044 = vmatpush.msra.mxu0 %v415
    %2045 = vmatpush.msra.mxu0 %v411
    %2046 = vmatpush.msra.mxu0 %v407
    %2047 = vmatpush.msra.mxu0 %v403
    %2048 = vmatpush.msra.mxu0 %v399
    %2049 = vmatpush.msra.mxu0 %v395
    %2050 = vmatpush.msra.mxu0 %v391
    %2051 = vmatpush.msra.mxu0 %v387
    %2052 = vmatpush.msra.mxu0 %v383
    %2053 = vmatpush.msra.mxu0 %v379
    %2054 = vmatpush.msra.mxu0 %v375
    %2055 = vmatpush.msra.mxu0 %v371
    %2056 = vmatpush.msra.mxu0 %v367
    %2057 = vmatpush.msra.mxu0 %v363
    %2058 = vmatmul.f32.gmra.mxu0 %v2001
    %v2059 = vpop.f32.mrf.mxu0
    %v2060 = vadd.f32 %v493, %v2059
    %2061 = vdwg.mxu0
    %2062 = vmatpush.msra.mxu0 %v487
    %2063 = vmatpush.msra.mxu0 %v483
    %2064 = vmatpush.msra.mxu0 %v479
    %2065 = vmatpush.msra.mxu0 %v475
    %2066 = vmatpush.msra.mxu0 %v471
    %2067 = vmatpush.msra.mxu0 %v467
    %2068 = vmatpush.msra.mxu0 %v463
    %2069 = vmatpush.msra.mxu0 %v459
    %2070 = vmatpush.msra.mxu0 %v455
    %2071 = vmatpush.msra.mxu0 %v451
    %2072 = vmatpush.msra.mxu0 %v447
    %2073 = vmatpush.msra.mxu0 %v443
    %2074 = vmatpush.msra.mxu0 %v439
    %2075 = vmatpush.msra.mxu0 %v435
    %2076 = vmatpush.msra.mxu0 %v431
    %2077 = vmatpush.msra.mxu0 %v427
    %2078 = vmatmul.f32.gmra.mxu0 %v1899
    %v2079 = vpop.f32.mrf.mxu0
    %v2080 = vadd.f32 %v2060, %v2079
    %2081 = vdwg.mxu0
    %2082 = vmatpush.msra.mxu0 %v424
    %2083 = vmatpush.msra.mxu0 %v420
    %2084 = vmatpush.msra.mxu0 %v416
    %2085 = vmatpush.msra.mxu0 %v412
    %2086 = vmatpush.msra.mxu0 %v408
    %2087 = vmatpush.msra.mxu0 %v404
    %2088 = vmatpush.msra.mxu0 %v400
    %2089 = vmatpush.msra.mxu0 %v396
    %2090 = vmatpush.msra.mxu0 %v392
    %2091 = vmatpush.msra.mxu0 %v388
    %2092 = vmatpush.msra.mxu0 %v384
    %2093 = vmatpush.msra.mxu0 %v380
    %2094 = vmatpush.msra.mxu0 %v376
    %2095 = vmatpush.msra.mxu0 %v372
    %2096 = vmatpush.msra.mxu0 %v368
    %2097 = vmatpush.msra.mxu0 %v364
    %2098 = vmatmul.f32.gmra.mxu0 %v2001
    %v2099 = vpop.f32.mrf.mxu0
    %v2100 = vadd.f32 %v494, %v2099
    %2101 = vdwg.mxu0
    %2102 = vmatpush.msra.mxu0 %v488
    %2103 = vmatpush.msra.mxu0 %v484
    %2104 = vmatpush.msra.mxu0 %v480
    %2105 = vmatpush.msra.mxu0 %v476
    %2106 = vmatpush.msra.mxu0 %v472
    %2107 = vmatpush.msra.mxu0 %v468
    %2108 = vmatpush.msra.mxu0 %v464
    %2109 = vmatpush.msra.mxu0 %v460
    %2110 = vmatpush.msra.mxu0 %v456
    %2111 = vmatpush.msra.mxu0 %v452
    %2112 = vmatpush.msra.mxu0 %v448
    %2113 = vmatpush.msra.mxu0 %v444
    %2114 = vmatpush.msra.mxu0 %v440
    %2115 = vmatpush.msra.mxu0 %v436
    %2116 = vmatpush.msra.mxu0 %v432
    %2117 = vmatpush.msra.mxu0 %v428
    %2118 = vmatmul.f32.gmra.mxu0 %v1899
    %v2119 = vpop.f32.mrf.mxu0
    %v2120 = vadd.f32 %v2100, %v2119
    %2121 = vdwg.mxu0
    %2122 = vmatpush.msra.mxu0 %v425
    %2123 = vmatpush.msra.mxu0 %v421
    %2124 = vmatpush.msra.mxu0 %v417
    %2125 = vmatpush.msra.mxu0 %v413
    %2126 = vmatpush.msra.mxu0 %v409
    %2127 = vmatpush.msra.mxu0 %v405
    %2128 = vmatpush.msra.mxu0 %v401
    %2129 = vmatpush.msra.mxu0 %v397
    %2130 = vmatpush.msra.mxu0 %v393
    %2131 = vmatpush.msra.mxu0 %v389
    %2132 = vmatpush.msra.mxu0 %v385
    %2133 = vmatpush.msra.mxu0 %v381
    %2134 = vmatpush.msra.mxu0 %v377
    %2135 = vmatpush.msra.mxu0 %v373
    %2136 = vmatpush.msra.mxu0 %v369
    %2137 = vmatpush.msra.mxu0 %v365
    %2138 = vmatmul.f32.gmra.mxu0 %v2001
    %v2139 = vpop.f32.mrf.mxu0
    %v2140 = vadd.f32 %v495, %v2139
    %2141 = vdwg.mxu0
    %2142 = vmatpush.msra.mxu0 %v489
    %2143 = vmatpush.msra.mxu0 %v485
    %2144 = vmatpush.msra.mxu0 %v481
    %2145 = vmatpush.msra.mxu0 %v477
    %2146 = vmatpush.msra.mxu0 %v473
    %2147 = vmatpush.msra.mxu0 %v469
    %2148 = vmatpush.msra.mxu0 %v465
    %2149 = vmatpush.msra.mxu0 %v461
    %2150 = vmatpush.msra.mxu0 %v457
    %2151 = vmatpush.msra.mxu0 %v453
    %2152 = vmatpush.msra.mxu0 %v449
    %2153 = vmatpush.msra.mxu0 %v445
    %2154 = vmatpush.msra.mxu0 %v441
    %2155 = vmatpush.msra.mxu0 %v437
    %2156 = vmatpush.msra.mxu0 %v433
    %2157 = vmatpush.msra.mxu0 %v429
    %2158 = vmatmul.f32.gmra.mxu0 %v1899
    %v2159 = vpop.f32.mrf.mxu0
    %v2160 = vadd.f32 %v2140, %v2159
    %2161 = vdwg.mxu0
    %v2162 = vmul.f32 %v2040, 0.5
    %v2163 = vtanh.pop %v2162
    %v2164 = vmul.f32 %v2163, 0.5
    %v2165 = vadd.f32 %v2164, 0.5
    %v2166 = vmul.f32 %v2080, 0.5
    %v2167 = vtanh.pop %v2166
    %v2168 = vmul.f32 %v2167, 0.5
    %v2169 = vadd.f32 %v2168, 0.5
    %v2170 = vtanh.pop %v2120
    %v2171 = vmul.f32 %v2160, 0.5
    %v2172 = vtanh.pop %v2171
    %v2173 = vmul.f32 %v2172, 0.5
    %v2174 = vadd.f32 %v2173, 0.5
    %v2175 = vmul.f32 %v2169, %v1897
    %v2176 = vmul.f32 %v2165, %v2170
    %v2177 = vadd.f32 %v2175, %v2176
    %v2178 = vtanh.pop %v2177
    %v2179 = vmul.f32 %v2174, %v2178
    %2180 = vmatpush.msra.mxu0 %v358
    %2181 = vmatpush.msra.mxu0 %v354
    %2182 = vmatpush.msra.mxu0 %v350
    %2183 = vmatpush.msra.mxu0 %v346
    %2184 = vmatpush.msra.mxu0 %v342
    %2185 = vmatpush.msra.mxu0 %v338
    %2186 = vmatpush.msra.mxu0 %v334
    %2187 = vmatpush.msra.mxu0 %v330
    %2188 = vmatpush.msra.mxu0 %v326
    %2189 = vmatpush.msra.mxu0 %v322
    %2190 = vmatpush.msra.mxu0 %v318
    %2191 = vmatpush.msra.mxu0 %v314
    %2192 = vmatpush.msra.mxu0 %v310
    %2193 = vmatpush.msra.mxu0 %v306
    %2194 = vmatpush.msra.mxu0 %v302
    %2195 = vmatpush.msra.mxu0 %v298
    %2196 = vmatmul.f32.gmra.mxu0 %v2001
    %v2197 = vpop.f32.mrf.mxu0
    %v2198 = vadd.f32 0.0, %v2197
    %2199 = vdwg.mxu0
    %2200 = vmatpush.msra.mxu0 %v359
    %2201 = vmatpush.msra.mxu0 %v355
    %2202 = vmatpush.msra.mxu0 %v351
    %2203 = vmatpush.msra.mxu0 %v347
    %2204 = vmatpush.msra.mxu0 %v343
    %2205 = vmatpush.msra.mxu0 %v339
    %2206 = vmatpush.msra.mxu0 %v335
    %2207 = vmatpush.msra.mxu0 %v331
    %2208 = vmatpush.msra.mxu0 %v327
    %2209 = vmatpush.msra.mxu0 %v323
    %2210 = vmatpush.msra.mxu0 %v319
    %2211 = vmatpush.msra.mxu0 %v315
    %2212 = vmatpush.msra.mxu0 %v311
    %2213 = vmatpush.msra.mxu0 %v307
    %2214 = vmatpush.msra.mxu0 %v303
    %2215 = vmatpush.msra.mxu0 %v299
    %2216 = vmatmul.f32.gmra.mxu0 %v2001
    %v2217 = vpop.f32.mrf.mxu0
    %v2218 = vadd.f32 0.0, %v2217
    %2219 = vdwg.mxu0
    %2220 = vmatpush.msra.mxu0 %v360
    %2221 = vmatpush.msra.mxu0 %v356
    %2222 = vmatpush.msra.mxu0 %v352
    %2223 = vmatpush.msra.mxu0 %v348
    %2224 = vmatpush.msra.mxu0 %v344
    %2225 = vmatpush.msra.mxu0 %v340
    %2226 = vmatpush.msra.mxu0 %v336
    %2227 = vmatpush.msra.mxu0 %v332
    %2228 = vmatpush.msra.mxu0 %v328
    %2229 = vmatpush.msra.mxu0 %v324
    %2230 = vmatpush.msra.mxu0 %v320
    %2231 = vmatpush.msra.mxu0 %v316
    %2232 = vmatpush.msra.mxu0 %v312
    %2233 = vmatpush.msra.mxu0 %v308
    %2234 = vmatpush.msra.mxu0 %v304
    %2235 = vmatpush.msra.mxu0 %v300
    %2236 = vmatmul.f32.gmra.mxu0 %v2001
    %v2237 = vpop.f32.mrf.mxu0
    %v2238 = vadd.f32 0.0, %v2237
    %2239 = vdwg.mxu0
    %2240 = vmatpush.msra.mxu0 %v361
    %2241 = vmatpush.msra.mxu0 %v357
    %2242 = vmatpush.msra.mxu0 %v353
    %2243 = vmatpush.msra.mxu0 %v349
    %2244 = vmatpush.msra.mxu0 %v345
    %2245 = vmatpush.msra.mxu0 %v341
    %2246 = vmatpush.msra.mxu0 %v337
    %2247 = vmatpush.msra.mxu0 %v333
    %2248 = vmatpush.msra.mxu0 %v329
    %2249 = vmatpush.msra.mxu0 %v325
    %2250 = vmatpush.msra.mxu0 %v321
    %2251 = vmatpush.msra.mxu0 %v317
    %2252 = vmatpush.msra.mxu0 %v313
    %2253 = vmatpush.msra.mxu0 %v309
    %2254 = vmatpush.msra.mxu0 %v305
    %2255 = vmatpush.msra.mxu0 %v301
    %2256 = vmatmul.f32.gmra.mxu0 %v2001
    %v2257 = vpop.f32.mrf.mxu0
    %v2258 = vadd.f32 0.0, %v2257
    %2259 = vdwg.mxu0
    %v2260 = vadd.f32 %v170, %v2198
    %v2261 = vadd.f32 %v211, %v2218
    %v2262 = vadd.f32 %v252, %v2238
    %v2263 = vadd.f32 %v293, %v2258
    %v2264 = vmul.f32 %v2260, 0.5
    %v2265 = vtanh.pop %v2264
    %v2266 = vmul.f32 %v2265, 0.5
    %v2267 = vadd.f32 %v2266, 0.5
    %v2268 = vmul.f32 %v2261, 0.5
    %v2269 = vtanh.pop %v2268
    %v2270 = vmul.f32 %v2269, 0.5
    %v2271 = vadd.f32 %v2270, 0.5
    %v2272 = vtanh.pop %v2262
    %v2273 = vmul.f32 %v2263, 0.5
    %v2274 = vtanh.pop %v2273
    %v2275 = vmul.f32 %v2274, 0.5
    %v2276 = vadd.f32 %v2275, 0.5
    %v2277 = vmul.f32 %v2271, %v1999
    %v2278 = vmul.f32 %v2267, %v2272
    %v2279 = vadd.f32 %v2277, %v2278
    %v2280 = vtanh.pop %v2279
    %v2281 = vmul.f32 %v2276, %v2280
    %2282 = vmatpush.msra.mxu0 %v422
    %2283 = vmatpush.msra.mxu0 %v418
    %2284 = vmatpush.msra.mxu0 %v414
    %2285 = vmatpush.msra.mxu0 %v410
    %2286 = vmatpush.msra.mxu0 %v406
    %2287 = vmatpush.msra.mxu0 %v402
    %2288 = vmatpush.msra.mxu0 %v398
    %2289 = vmatpush.msra.mxu0 %v394
    %2290 = vmatpush.msra.mxu0 %v390
    %2291 = vmatpush.msra.mxu0 %v386
    %2292 = vmatpush.msra.mxu0 %v382
    %2293 = vmatpush.msra.mxu0 %v378
    %2294 = vmatpush.msra.mxu0 %v374
    %2295 = vmatpush.msra.mxu0 %v370
    %2296 = vmatpush.msra.mxu0 %v366
    %2297 = vmatpush.msra.mxu0 %v362
    %2298 = vmatmul.f32.gmra.mxu0 %v2281
    %v2299 = vpop.f32.mrf.mxu0
    %v2300 = vadd.f32 %v492, %v2299
    %2301 = vdwg.mxu0
    %2302 = vmatpush.msra.mxu0 %v486
    %2303 = vmatpush.msra.mxu0 %v482
    %2304 = vmatpush.msra.mxu0 %v478
    %2305 = vmatpush.msra.mxu0 %v474
    %2306 = vmatpush.msra.mxu0 %v470
    %2307 = vmatpush.msra.mxu0 %v466
    %2308 = vmatpush.msra.mxu0 %v462
    %2309 = vmatpush.msra.mxu0 %v458
    %2310 = vmatpush.msra.mxu0 %v454
    %2311 = vmatpush.msra.mxu0 %v450
    %2312 = vmatpush.msra.mxu0 %v446
    %2313 = vmatpush.msra.mxu0 %v442
    %2314 = vmatpush.msra.mxu0 %v438
    %2315 = vmatpush.msra.mxu0 %v434
    %2316 = vmatpush.msra.mxu0 %v430
    %2317 = vmatpush.msra.mxu0 %v426
    %2318 = vmatmul.f32.gmra.mxu0 %v2179
    %v2319 = vpop.f32.mrf.mxu0
    %v2320 = vadd.f32 %v2300, %v2319
    %2321 = vdwg.mxu0
    %2322 = vmatpush.msra.mxu0 %v423
    %2323 = vmatpush.msra.mxu0 %v419
    %2324 = vmatpush.msra.mxu0 %v415
    %2325 = vmatpush.msra.mxu0 %v411
    %2326 = vmatpush.msra.mxu0 %v407
    %2327 = vmatpush.msra.mxu0 %v403
    %2328 = vmatpush.msra.mxu0 %v399
    %2329 = vmatpush.msra.mxu0 %v395
    %2330 = vmatpush.msra.mxu0 %v391
    %2331 = vmatpush.msra.mxu0 %v387
    %2332 = vmatpush.msra.mxu0 %v383
    %2333 = vmatpush.msra.mxu0 %v379
    %2334 = vmatpush.msra.mxu0 %v375
    %2335 = vmatpush.msra.mxu0 %v371
    %2336 = vmatpush.msra.mxu0 %v367
    %2337 = vmatpush.msra.mxu0 %v363
    %2338 = vmatmul.f32.gmra.mxu0 %v2281
    %v2339 = vpop.f32.mrf.mxu0
    %v2340 = vadd.f32 %v493, %v2339
    %2341 = vdwg.mxu0
    %2342 = vmatpush.msra.mxu0 %v487
    %2343 = vmatpush.msra.mxu0 %v483
    %2344 = vmatpush.msra.mxu0 %v479
    %2345 = vmatpush.msra.mxu0 %v475
    %2346 = vmatpush.msra.mxu0 %v471
    %2347 = vmatpush.msra.mxu0 %v467
    %2348 = vmatpush.msra.mxu0 %v463
    %2349 = vmatpush.msra.mxu0 %v459
    %2350 = vmatpush.msra.mxu0 %v455
    %2351 = vmatpush.msra.mxu0 %v451
    %2352 = vmatpush.msra.mxu0 %v447
    %2353 = vmatpush.msra.mxu0 %v443
    %2354 = vmatpush.msra.mxu0 %v439
    %2355 = vmatpush.msra.mxu0 %v435
    %2356 = vmatpush.msra.mxu0 %v431
    %2357 = vmatpush.msra.mxu0 %v427
    %2358 = vmatmul.f32.gmra.mxu0 %v2179
    %v2359 = vpop.f32.mrf.mxu0
    %v2360 = vadd.f32 %v2340, %v2359
    %2361 = vdwg.mxu0
    %2362 = vmatpush.msra.mxu0 %v424
    %2363 = vmatpush.msra.mxu0 %v420
    %2364 = vmatpush.msra.mxu0 %v416
    %2365 = vmatpush.msra.mxu0 %v412
    %2366 = vmatpush.msra.mxu0 %v408
    %2367 = vmatpush.msra.mxu0 %v404
    %2368 = vmatpush.msra.mxu0 %v400
    %2369 = vmatpush.msra.mxu0 %v396
    %2370 = vmatpush.msra.mxu0 %v392
    %2371 = vmatpush.msra.mxu0 %v388
    %2372 = vmatpush.msra.mxu0 %v384
    %2373 = vmatpush.msra.mxu0 %v380
    %2374 = vmatpush.msra.mxu0 %v376
    %2375 = vmatpush.msra.mxu0 %v372
    %2376 = vmatpush.msra.mxu0 %v368
    %2377 = vmatpush.msra.mxu0 %v364
    %2378 = vmatmul.f32.gmra.mxu0 %v2281
    %v2379 = vpop.f32.mrf.mxu0
    %v2380 = vadd.f32 %v494, %v2379
    %2381 = vdwg.mxu0
    %2382 = vmatpush.msra.mxu0 %v488
    %2383 = vmatpush.msra.mxu0 %v484
    %2384 = vmatpush.msra.mxu0 %v480
    %2385 = vmatpush.msra.mxu0 %v476
    %2386 = vmatpush.msra.mxu0 %v472
    %2387 = vmatpush.msra.mxu0 %v468
    %2388 = vmatpush.msra.mxu0 %v464
    %2389 = vmatpush.msra.mxu0 %v460
    %2390 = vmatpush.msra.mxu0 %v456
    %2391 = vmatpush.msra.mxu0 %v452
    %2392 = vmatpush.msra.mxu0 %v448
    %2393 = vmatpush.msra.mxu0 %v444
    %2394 = vmatpush.msra.mxu0 %v440
    %2395 = vmatpush.msra.mxu0 %v436
    %2396 = vmatpush.msra.mxu0 %v432
    %2397 = vmatpush.msra.mxu0 %v428
    %2398 = vmatmul.f32.gmra.mxu0 %v2179
    %v2399 = vpop.f32.mrf.mxu0
    %v2400 = vadd.f32 %v2380, %v2399
    %2401 = vdwg.mxu0
    %2402 = vmatpush.msra.mxu0 %v425
    %2403 = vmatpush.msra.mxu0 %v421
    %2404 = vmatpush.msra.mxu0 %v417
    %2405 = vmatpush.msra.mxu0 %v413
    %2406 = vmatpush.msra.mxu0 %v409
    %2407 = vmatpush.msra.mxu0 %v405
    %2408 = vmatpush.msra.mxu0 %v401
    %2409 = vmatpush.msra.mxu0 %v397
    %2410 = vmatpush.msra.mxu0 %v393
    %2411 = vmatpush.msra.mxu0 %v389
    %2412 = vmatpush.msra.mxu0 %v385
    %2413 = vmatpush.msra.mxu0 %v381
    %2414 = vmatpush.msra.mxu0 %v377
    %2415 = vmatpush.msra.mxu0 %v373
    %2416 = vmatpush.msra.mxu0 %v369
    %2417 = vmatpush.msra.mxu0 %v365
    %2418 = vmatmul.f32.gmra.mxu0 %v2281
    %v2419 = vpop.f32.mrf.mxu0
    %v2420 = vadd.f32 %v495, %v2419
    %2421 = vdwg.mxu0
    %2422 = vmatpush.msra.mxu0 %v489
    %2423 = vmatpush.msra.mxu0 %v485
    %2424 = vmatpush.msra.mxu0 %v481
    %2425 = vmatpush.msra.mxu0 %v477
    %2426 = vmatpush.msra.mxu0 %v473
    %2427 = vmatpush.msra.mxu0 %v469
    %2428 = vmatpush.msra.mxu0 %v465
    %2429 = vmatpush.msra.mxu0 %v461
    %2430 = vmatpush.msra.mxu0 %v457
    %2431 = vmatpush.msra.mxu0 %v453
    %2432 = vmatpush.msra.mxu0 %v449
    %2433 = vmatpush.msra.mxu0 %v445
    %2434 = vmatpush.msra.mxu0 %v441
    %2435 = vmatpush.msra.mxu0 %v437
    %2436 = vmatpush.msra.mxu0 %v433
    %2437 = vmatpush.msra.mxu0 %v429
    %2438 = vmatmul.f32.gmra.mxu0 %v2179
    %v2439 = vpop.f32.mrf.mxu0
    %v2440 = vadd.f32 %v2420, %v2439
    %2441 = vdwg.mxu0
    %v2442 = vmul.f32 %v2320, 0.5
    %v2443 = vtanh.pop %v2442
    %v2444 = vmul.f32 %v2443, 0.5
    %v2445 = vadd.f32 %v2444, 0.5
    %v2446 = vmul.f32 %v2360, 0.5
    %v2447 = vtanh.pop %v2446
    %v2448 = vmul.f32 %v2447, 0.5
    %v2449 = vadd.f32 %v2448, 0.5
    %v2450 = vtanh.pop %v2400
    %v2451 = vmul.f32 %v2440, 0.5
    %v2452 = vtanh.pop %v2451
    %v2453 = vmul.f32 %v2452, 0.5
    %v2454 = vadd.f32 %v2453, 0.5
    %v2455 = vmul.f32 %v2449, %v2177
    %v2456 = vmul.f32 %v2445, %v2450
    %v2457 = vadd.f32 %v2455, %v2456
    %v2458 = vtanh.pop %v2457
    %v2459 = vmul.f32 %v2454, %v2458
    %2460 = vmatpush.msra.mxu0 %v358
    %2461 = vmatpush.msra.mxu0 %v354
    %2462 = vmatpush.msra.mxu0 %v350
    %2463 = vmatpush.msra.mxu0 %v346
    %2464 = vmatpush.msra.mxu0 %v342
    %2465 = vmatpush.msra.mxu0 %v338
    %2466 = vmatpush.msra.mxu0 %v334
    %2467 = vmatpush.msra.mxu0 %v330
    %2468 = vmatpush.msra.mxu0 %v326
    %2469 = vmatpush.msra.mxu0 %v322
    %2470 = vmatpush.msra.mxu0 %v318
    %2471 = vmatpush.msra.mxu0 %v314
    %2472 = vmatpush.msra.mxu0 %v310
    %2473 = vmatpush.msra.mxu0 %v306
    %2474 = vmatpush.msra.mxu0 %v302
    %2475 = vmatpush.msra.mxu0 %v298
    %2476 = vmatmul.f32.gmra.mxu0 %v2281
    %v2477 = vpop.f32.mrf.mxu0
    %v2478 = vadd.f32 0.0, %v2477
    %2479 = vdwg.mxu0
    %2480 = vmatpush.msra.mxu0 %v359
    %2481 = vmatpush.msra.mxu0 %v355
    %2482 = vmatpush.msra.mxu0 %v351
    %2483 = vmatpush.msra.mxu0 %v347
    %2484 = vmatpush.msra.mxu0 %v343
    %2485 = vmatpush.msra.mxu0 %v339
    %2486 = vmatpush.msra.mxu0 %v335
    %2487 = vmatpush.msra.mxu0 %v331
    %2488 = vmatpush.msra.mxu0 %v327
    %2489 = vmatpush.msra.mxu0 %v323
    %2490 = vmatpush.msra.mxu0 %v319
    %2491 = vmatpush.msra.mxu0 %v315
    %2492 = vmatpush.msra.mxu0 %v311
    %2493 = vmatpush.msra.mxu0 %v307
    %2494 = vmatpush.msra.mxu0 %v303
    %2495 = vmatpush.msra.mxu0 %v299
    %2496 = vmatmul.f32.gmra.mxu0 %v2281
    %v2497 = vpop.f32.mrf.mxu0
    %v2498 = vadd.f32 0.0, %v2497
    %2499 = vdwg.mxu0
    %2500 = vmatpush.msra.mxu0 %v360
    %2501 = vmatpush.msra.mxu0 %v356
    %2502 = vmatpush.msra.mxu0 %v352
    %2503 = vmatpush.msra.mxu0 %v348
    %2504 = vmatpush.msra.mxu0 %v344
    %2505 = vmatpush.msra.mxu0 %v340
    %2506 = vmatpush.msra.mxu0 %v336
    %2507 = vmatpush.msra.mxu0 %v332
    %2508 = vmatpush.msra.mxu0 %v328
    %2509 = vmatpush.msra.mxu0 %v324
    %2510 = vmatpush.msra.mxu0 %v320
    %2511 = vmatpush.msra.mxu0 %v316
    %2512 = vmatpush.msra.mxu0 %v312
    %2513 = vmatpush.msra.mxu0 %v308
    %2514 = vmatpush.msra.mxu0 %v304
    %2515 = vmatpush.msra.mxu0 %v300
    %2516 = vmatmul.f32.gmra.mxu0 %v2281
    %v2517 = vpop.f32.mrf.mxu0
    %v2518 = vadd.f32 0.0, %v2517
    %2519 = vdwg.mxu0
    %2520 = vmatpush.msra.mxu0 %v361
    %2521 = vmatpush.msra.mxu0 %v357
    %2522 = vmatpush.msra.mxu0 %v353
    %2523 = vmatpush.msra.mxu0 %v349
    %2524 = vmatpush.msra.mxu0 %v345
    %2525 = vmatpush.msra.mxu0 %v341
    %2526 = vmatpush.msra.mxu0 %v337
    %2527 = vmatpush.msra.mxu0 %v333
    %2528 = vmatpush.msra.mxu0 %v329
    %2529 = vmatpush.msra.mxu0 %v325
    %2530 = vmatpush.msra.mxu0 %v321
    %2531 = vmatpush.msra.mxu0 %v317
    %2532 = vmatpush.msra.mxu0 %v313
    %2533 = vmatpush.msra.mxu0 %v309
    %2534 = vmatpush.msra.mxu0 %v305
    %2535 = vmatpush.msra.mxu0 %v301
    %2536 = vmatmul.f32.gmra.mxu0 %v2281
    %v2537 = vpop.f32.mrf.mxu0
    %v2538 = vadd.f32 0.0, %v2537
    %2539 = vdwg.mxu0
    %v2540 = vadd.f32 %v173, %v2478
    %v2541 = vadd.f32 %v214, %v2498
    %v2542 = vadd.f32 %v255, %v2518
    %v2543 = vadd.f32 %v296, %v2538
    %v2544 = vmul.f32 %v2540, 0.5
    %v2545 = vtanh.pop %v2544
    %v2546 = vmul.f32 %v2545, 0.5
    %v2547 = vadd.f32 %v2546, 0.5
    %v2548 = vmul.f32 %v2541, 0.5
    %v2549 = vtanh.pop %v2548
    %v2550 = vmul.f32 %v2549, 0.5
    %v2551 = vadd.f32 %v2550, 0.5
    %v2552 = vtanh.pop %v2542
    %v2553 = vmul.f32 %v2543, 0.5
    %v2554 = vtanh.pop %v2553
    %v2555 = vmul.f32 %v2554, 0.5
    %v2556 = vadd.f32 %v2555, 0.5
    %v2557 = vmul.f32 %v2551, %v2279
    %v2558 = vmul.f32 %v2547, %v2552
    %v2559 = vadd.f32 %v2557, %v2558
    %v2560 = vtanh.pop %v2559
    %v2561 = vmul.f32 %v2556, %v2560
    %2562 = vmatpush.msra.mxu0 %v422
    %2563 = vmatpush.msra.mxu0 %v418
    %2564 = vmatpush.msra.mxu0 %v414
    %2565 = vmatpush.msra.mxu0 %v410
    %2566 = vmatpush.msra.mxu0 %v406
    %2567 = vmatpush.msra.mxu0 %v402
    %2568 = vmatpush.msra.mxu0 %v398
    %2569 = vmatpush.msra.mxu0 %v394
    %2570 = vmatpush.msra.mxu0 %v390
    %2571 = vmatpush.msra.mxu0 %v386
    %2572 = vmatpush.msra.mxu0 %v382
    %2573 = vmatpush.msra.mxu0 %v378
    %2574 = vmatpush.msra.mxu0 %v374
    %2575 = vmatpush.msra.mxu0 %v370
    %2576 = vmatpush.msra.mxu0 %v366
    %2577 = vmatpush.msra.mxu0 %v362
    %2578 = vmatmul.f32.gmra.mxu0 %v2561
    %v2579 = vpop.f32.mrf.mxu0
    %v2580 = vadd.f32 %v492, %v2579
    %2581 = vdwg.mxu0
    %2582 = vmatpush.msra.mxu0 %v486
    %2583 = vmatpush.msra.mxu0 %v482
    %2584 = vmatpush.msra.mxu0 %v478
    %2585 = vmatpush.msra.mxu0 %v474
    %2586 = vmatpush.msra.mxu0 %v470
    %2587 = vmatpush.msra.mxu0 %v466
    %2588 = vmatpush.msra.mxu0 %v462
    %2589 = vmatpush.msra.mxu0 %v458
    %2590 = vmatpush.msra.mxu0 %v454
    %2591 = vmatpush.msra.mxu0 %v450
    %2592 = vmatpush.msra.mxu0 %v446
    %2593 = vmatpush.msra.mxu0 %v442
    %2594 = vmatpush.msra.mxu0 %v438
    %2595 = vmatpush.msra.mxu0 %v434
    %2596 = vmatpush.msra.mxu0 %v430
    %2597 = vmatpush.msra.mxu0 %v426
    %2598 = vmatmul.f32.gmra.mxu0 %v2459
    %v2599 = vpop.f32.mrf.mxu0
    %v2600 = vadd.f32 %v2580, %v2599
    %2601 = vdwg.mxu0
    %2602 = vmatpush.msra.mxu0 %v423
    %2603 = vmatpush.msra.mxu0 %v419
    %2604 = vmatpush.msra.mxu0 %v415
    %2605 = vmatpush.msra.mxu0 %v411
    %2606 = vmatpush.msra.mxu0 %v407
    %2607 = vmatpush.msra.mxu0 %v403
    %2608 = vmatpush.msra.mxu0 %v399
    %2609 = vmatpush.msra.mxu0 %v395
    %2610 = vmatpush.msra.mxu0 %v391
    %2611 = vmatpush.msra.mxu0 %v387
    %2612 = vmatpush.msra.mxu0 %v383
    %2613 = vmatpush.msra.mxu0 %v379
    %2614 = vmatpush.msra.mxu0 %v375
    %2615 = vmatpush.msra.mxu0 %v371
    %2616 = vmatpush.msra.mxu0 %v367
    %2617 = vmatpush.msra.mxu0 %v363
    %2618 = vmatmul.f32.gmra.mxu0 %v2561
    %v2619 = vpop.f32.mrf.mxu0
    %v2620 = vadd.f32 %v493, %v2619
    %2621 = vdwg.mxu0
    %2622 = vmatpush.msra.mxu0 %v487
    %2623 = vmatpush.msra.mxu0 %v483
    %2624 = vmatpush.msra.mxu0 %v479
    %2625 = vmatpush.msra.mxu0 %v475
    %2626 = vmatpush.msra.mxu0 %v471
    %2627 = vmatpush.msra.mxu0 %v467
    %2628 = vmatpush.msra.mxu0 %v463
    %2629 = vmatpush.msra.mxu0 %v459
    %2630 = vmatpush.msra.mxu0 %v455
    %2631 = vmatpush.msra.mxu0 %v451
    %2632 = vmatpush.msra.mxu0 %v447
    %2633 = vmatpush.msra.mxu0 %v443
    %2634 = vmatpush.msra.mxu0 %v439
    %2635 = vmatpush.msra.mxu0 %v435
    %2636 = vmatpush.msra.mxu0 %v431
    %2637 = vmatpush.msra.mxu0 %v427
    %2638 = vmatmul.f32.gmra.mxu0 %v2459
    %v2639 = vpop.f32.mrf.mxu0
    %v2640 = vadd.f32 %v2620, %v2639
    %2641 = vdwg.mxu0
    %2642 = vmatpush.msra.mxu0 %v424
    %2643 = vmatpush.msra.mxu0 %v420
    %2644 = vmatpush.msra.mxu0 %v416
    %2645 = vmatpush.msra.mxu0 %v412
    %2646 = vmatpush.msra.mxu0 %v408
    %2647 = vmatpush.msra.mxu0 %v404
    %2648 = vmatpush.msra.mxu0 %v400
    %2649 = vmatpush.msra.mxu0 %v396
    %2650 = vmatpush.msra.mxu0 %v392
    %2651 = vmatpush.msra.mxu0 %v388
    %2652 = vmatpush.msra.mxu0 %v384
    %2653 = vmatpush.msra.mxu0 %v380
    %2654 = vmatpush.msra.mxu0 %v376
    %2655 = vmatpush.msra.mxu0 %v372
    %2656 = vmatpush.msra.mxu0 %v368
    %2657 = vmatpush.msra.mxu0 %v364
    %2658 = vmatmul.f32.gmra.mxu0 %v2561
    %v2659 = vpop.f32.mrf.mxu0
    %v2660 = vadd.f32 %v494, %v2659
    %2661 = vdwg.mxu0
    %2662 = vmatpush.msra.mxu0 %v488
    %2663 = vmatpush.msra.mxu0 %v484
    %2664 = vmatpush.msra.mxu0 %v480
    %2665 = vmatpush.msra.mxu0 %v476
    %2666 = vmatpush.msra.mxu0 %v472
    %2667 = vmatpush.msra.mxu0 %v468
    %2668 = vmatpush.msra.mxu0 %v464
    %2669 = vmatpush.msra.mxu0 %v460
    %2670 = vmatpush.msra.mxu0 %v456
    %2671 = vmatpush.msra.mxu0 %v452
    %2672 = vmatpush.msra.mxu0 %v448
    %2673 = vmatpush.msra.mxu0 %v444
    %2674 = vmatpush.msra.mxu0 %v440
    %2675 = vmatpush.msra.mxu0 %v436
    %2676 = vmatpush.msra.mxu0 %v432
    %2677 = vmatpush.msra.mxu0 %v428
    %2678 = vmatmul.f32.gmra.mxu0 %v2459
    %v2679 = vpop.f32.mrf.mxu0
    %v2680 = vadd.f32 %v2660, %v2679
    %2681 = vdwg.mxu0
    %2682 = vmatpush.msra.mxu0 %v425
    %2683 = vmatpush.msra.mxu0 %v421
    %2684 = vmatpush.msra.mxu0 %v417
    %2685 = vmatpush.msra.mxu0 %v413
    %2686 = vmatpush.msra.mxu0 %v409
    %2687 = vmatpush.msra.mxu0 %v405
    %2688 = vmatpush.msra.mxu0 %v401
    %2689 = vmatpush.msra.mxu0 %v397
    %2690 = vmatpush.msra.mxu0 %v393
    %2691 = vmatpush.msra.mxu0 %v389
    %2692 = vmatpush.msra.mxu0 %v385
    %2693 = vmatpush.msra.mxu0 %v381
    %2694 = vmatpush.msra.mxu0 %v377
    %2695 = vmatpush.msra.mxu0 %v373
    %2696 = vmatpush.msra.mxu0 %v369
    %2697 = vmatpush.msra.mxu0 %v365
    %2698 = vmatmul.f32.gmra.mxu0 %v2561
    %v2699 = vpop.f32.mrf.mxu0
    %v2700 = vadd.f32 %v495, %v2699
    %2701 = vdwg.mxu0
    %2702 = vmatpush.msra.mxu0 %v489
    %2703 = vmatpush.msra.mxu0 %v485
    %2704 = vmatpush.msra.mxu0 %v481
    %2705 = vmatpush.msra.mxu0 %v477
    %2706 = vmatpush.msra.mxu0 %v473
    %2707 = vmatpush.msra.mxu0 %v469
    %2708 = vmatpush.msra.mxu0 %v465
    %2709 = vmatpush.msra.mxu0 %v461
    %2710 = vmatpush.msra.mxu0 %v457
    %2711 = vmatpush.msra.mxu0 %v453
    %2712 = vmatpush.msra.mxu0 %v449
    %2713 = vmatpush.msra.mxu0 %v445
    %2714 = vmatpush.msra.mxu0 %v441
    %2715 = vmatpush.msra.mxu0 %v437
    %2716 = vmatpush.msra.mxu0 %v433
    %2717 = vmatpush.msra.mxu0 %v429
    %2718 = vmatmul.f32.gmra.mxu0 %v2459
    %v2719 = vpop.f32.mrf.mxu0
    %v2720 = vadd.f32 %v2700, %v2719
    %2721 = vdwg.mxu0
    %v2722 = vmul.f32 %v2600, 0.5
    %v2723 = vtanh.pop %v2722
    %v2724 = vmul.f32 %v2723, 0.5
    %v2725 = vadd.f32 %v2724, 0.5
    %v2726 = vmul.f32 %v2640, 0.5
    %v2727 = vtanh.pop %v2726
    %v2728 = vmul.f32 %v2727, 0.5
    %v2729 = vadd.f32 %v2728, 0.5
    %v2730 = vtanh.pop %v2680
    %v2731 = vmul.f32 %v2720, 0.5
    %v2732 = vtanh.pop %v2731
    %v2733 = vmul.f32 %v2732, 0.5
    %v2734 = vadd.f32 %v2733, 0.5
    %v2735 = vmul.f32 %v2729, %v2457
    %v2736 = vmul.f32 %v2725, %v2730
    %v2737 = vadd.f32 %v2735, %v2736
    %v2738 = vtanh.pop %v2737
    %v2739 = vmul.f32 %v2734, %v2738
    %v2740 = vld [vmem:[#allocation6] sm:$0xff]
    %v2741 = vld [vmem:[#allocation6 + $0x8] sm:$0xff]
    %v2742 = vld [vmem:[#allocation6 + $0x10] sm:$0xff]
    %v2743 = vld [vmem:[#allocation6 + $0x18] sm:$0xff]
    %v2744 = vld [vmem:[#allocation6 + $0x20] sm:$0xff]
    %v2745 = vld [vmem:[#allocation6 + $0x28] sm:$0xff]
    %v2746 = vld [vmem:[#allocation6 + $0x30] sm:$0xff]
    %v2747 = vld [vmem:[#allocation6 + $0x38] sm:$0xff]
    %v2748 = vld [vmem:[#allocation6 + $0x40] sm:$0xff]
    %v2749 = vld [vmem:[#allocation6 + $0x48] sm:$0xff]
    %v2750 = vld [vmem:[#allocation6 + $0x50] sm:$0xff]
    %v2751 = vld [vmem:[#allocation6 + $0x58] sm:$0xff]
    %v2752 = vld [vmem:[#allocation6 + $0x60] sm:$0xff]
    %v2753 = vld [vmem:[#allocation6 + $0x68] sm:$0xff]
    %v2754 = vld [vmem:[#allocation6 + $0x70] sm:$0xff]
    %v2755 = vld [vmem:[#allocation6 + $0x78] sm:$0xff]
    %v2756 = vld [vmem:[%s7] sm:$0x1]
    %v2758 = vperm.slane %v2756, 0
    %2760 = vmatpush.msra.mxu0 %v2755
    %2761 = vmatpush.msra.mxu0 %v2754
    %2762 = vmatpush.msra.mxu0 %v2753
    %2763 = vmatpush.msra.mxu0 %v2752
    %2764 = vmatpush.msra.mxu0 %v2751
    %2765 = vmatpush.msra.mxu0 %v2750
    %2766 = vmatpush.msra.mxu0 %v2749
    %2767 = vmatpush.msra.mxu0 %v2748
    %2768 = vmatpush.msra.mxu0 %v2747
    %2769 = vmatpush.msra.mxu0 %v2746
    %2770 = vmatpush.msra.mxu0 %v2745
    %2771 = vmatpush.msra.mxu0 %v2744
    %2772 = vmatpush.msra.mxu0 %v2743
    %2773 = vmatpush.msra.mxu0 %v2742
    %2774 = vmatpush.msra.mxu0 %v2741
    %2775 = vmatpush.msra.mxu0 %v2740
    %2776 = vmatmul.f32.gmra.mxu0 %v2739
    %v2777 = vpop.f32.mrf.mxu0
    %v2778 = vadd.f32 %v2758, %v2777
    %2779 = vdwg.mxu0
    %2780 = vst [vmem:[%s8] sm:$0xff] %v2778
    // Predicated region
    $region46: #{stock_lstm_forward.1} parent=1 // pred_check
      _
    $region47: #{stock_lstm_forward.1} parent=1 // pred_check_branch
      %2782 = sbr.rel (0) target = $region49
    $region48: #{stock_lstm_forward.1} parent=1 // pred_region
      _
    $region49: #{stock_lstm_forward.1} parent=1 // pred_fallthru
      _
    // Predicated region
    $region50: #{stock_lstm_forward.1} parent=1 // pred_check
      _
    $region51: #{stock_lstm_forward.1} parent=1 // pred_check_branch
      %2784 = sbr.rel (0) target = $region53
    $region52: #{stock_lstm_forward.1} parent=1 // pred_region
      _
    $region53: #{stock_lstm_forward.1} parent=1 // pred_fallthru
      _
    %2785 = vsyncpa [#allocation3], 1
    %2786 = vsyncpa [#allocation5], 1

</llo_original>
